<compile_context>
chip_gen: v7x
topology: tpu7x:2x2x1
jax: 0.10.0
libtpu: 0.0.40
codegen_flags: <defaults>
</compile_context>

<pallas_src>
import functools

import jax
import jax.numpy as jnp
from jax.experimental import pallas as pl
from jax.experimental.pallas import tpu as pltpu

EPS = 1e-5
COMPUTE_DTYPE = jnp.bfloat16   # MXU operand dtype (accumulation stays f32)
PAD_MID = 4                    # zero columns stored on each side of the
                               # intermediate activation (keeps widths %8==0)
TILE_H_CAP = 8                 # rows per grid step; raise (within the VMEM
                               # budget, roughly halved on v7x's 64 MiB) for
                               # large images
VMEM_LIMIT = 32 * 1024 * 1024  # explicit scoped-VMEM limit (safe on v5e/v6e/v7x)


def _pick_tile_h(h):
    for th in (TILE_H_CAP, 4, 2, 1):
        if h % th == 0:
            return th
    return 1


# ----------------------------------------------------------------------------
# Fused kernel: [optional BN+ReLU of previous block on load] -> 3x3 conv
#               -> per-channel sum / sum-of-squares accumulation.
#
# Input activation is stored W-padded with `in_pad` zero columns per side.
# Output is stored W-padded with `out_pad` zero columns per side (written as
# zeros by this kernel, so the consumer never needs a jnp.pad pass).
# H halo: one row above / below the tile, delivered by clamped 1-row specs and
# zeroed in-kernel at the image border.
# ----------------------------------------------------------------------------
def _conv3x3_bn_kernel(x_top_ref, x_mid_ref, x_bot_ref, w_ref, scale_ref,
                       shift_ref, y_ref, sum_ref, sq_ref, xp_ref,
                       *, in_pad, out_pad, real_w, apply_input_act,
                       compute_dtype):
    i = pl.program_id(1)
    n_tiles = pl.num_programs(1)

    th = x_mid_ref.shape[1]
    wp_in = x_mid_ref.shape[2]
    cin = x_mid_ref.shape[3]
    wp_out = y_ref.shape[2]
    cout = y_ref.shape[3]
    w = real_w
    tap0 = in_pad - out_pad - 1          # column offset of the dw=0 tap's slab

    if apply_input_act:
        col_in = jax.lax.broadcasted_iota(jnp.int32, (1, wp_in, 1), 1)
        in_valid = (col_in >= in_pad) & (col_in < in_pad + w)
        bn_scale = scale_ref[...].reshape(1, 1, cin)
        bn_shift = shift_ref[...].reshape(1, 1, cin)

    def prep(rows):                       # rows: (r, wp_in, cin)
        rows = rows.astype(jnp.float32)
        if apply_input_act:
            # previous block's BatchNorm + ReLU, applied as the data is loaded;
            # the stored zero-padding ring is re-zeroed afterwards.
            rows = jnp.where(in_valid,
                             jnp.maximum(rows * bn_scale + bn_shift, 0.0), 0.0)
        return rows

    # Assemble the H-halo'd tile in a VMEM scratch (outer-dim writes only).
    # Halo rows that fall outside the image are zeroed ("same" padding).
    top = prep(x_top_ref[0]) * (i > 0).astype(jnp.float32)
    bot = prep(x_bot_ref[0]) * (i < n_tiles - 1).astype(jnp.float32)
    xp_ref[pl.ds(0, 1), :, :] = top
    xp_ref[pl.ds(1, th), :, :] = prep(x_mid_ref[0])
    xp_ref[pl.ds(th + 1, 1), :, :] = bot
    xp = xp_ref[...]                                   # (th+2, wp_in, cin) f32

    # 3x3 conv as 9 shifted-window matmuls (bf16 operands, f32 accumulation).
    # Accumulator is held in vregs (tile sized so it stays well under 64 vregs
    # for the small-channel case; use a VMEM scratch accumulator for very large
    # Cout tiles).
    acc = jnp.zeros((th * wp_out, cout), jnp.float32)
    for dh in range(3):
        for dw in range(3):
            start = tap0 + dw
            patch = xp[dh:dh + th, start:start + wp_out, :]
            lhs = patch.reshape(th * wp_out, cin).astype(compute_dtype)
            acc = acc + jnp.dot(lhs, w_ref[dh * 3 + dw],
                                preferred_element_type=jnp.float32)

    y = acc.reshape(th, wp_out, cout)
    if out_pad > 0:
        # zero the stored border columns (they hold junk conv values otherwise)
        col_out = jax.lax.broadcasted_iota(jnp.int32, (1, wp_out, 1), 1)
        y = jnp.where((col_out >= out_pad) & (col_out < out_pad + w), y, 0.0)

    # Fused BatchNorm batch statistics: per-channel sum / sum-of-squares,
    # accumulated across the H-tile grid axis into per-image (1,1,C) outputs.
    y2d = y.reshape(th * wp_out, cout)
    part_sum = jnp.sum(y2d, axis=0, keepdims=True)      # (1, cout)
    part_sq = jnp.sum(y2d * y2d, axis=0, keepdims=True)

    @pl.when(i == 0)
    def _():
        sum_ref[...] = jnp.zeros_like(sum_ref)
        sq_ref[...] = jnp.zeros_like(sq_ref)

    sum_ref[...] += part_sum[None]
    sq_ref[...] += part_sq[None]

    y_ref[...] = y.reshape(1, th, wp_out, cout).astype(y_ref.dtype)


def _conv_block(x_p, w_hwio, scale, shift, *, in_pad, out_pad, apply_input_act,
                tile_h, compute_dtype=COMPUTE_DTYPE):
    n, h, wp_in, cin = x_p.shape
    w_real = wp_in - 2 * in_pad
    wp_out = w_real + 2 * out_pad
    cout = w_hwio.shape[3]
    th = tile_h
    assert h % th == 0
    n_tiles = h // th

    w9 = w_hwio.reshape(9, cin, cout).astype(compute_dtype)
    if scale is None:
        scale_in = jnp.ones((1, cin), jnp.float32)
        shift_in = jnp.zeros((1, cin), jnp.float32)
    else:
        scale_in = scale.reshape(1, cin).astype(jnp.float32)
        shift_in = shift.reshape(1, cin).astype(jnp.float32)

    kernel = functools.partial(
        _conv3x3_bn_kernel, in_pad=in_pad, out_pad=out_pad, real_w=w_real,
        apply_input_act=apply_input_act, compute_dtype=compute_dtype)

    cost = pl.CostEstimate(
        flops=2 * n * h * wp_out * 9 * cin * cout,
        transcendentals=0,
        bytes_accessed=(x_p.size * x_p.dtype.itemsize
                        + n * h * wp_out * cout * 4
                        + w9.size * w9.dtype.itemsize
                        + 2 * (n + 1) * cout * 4),
    )

    y, psum, psq = pl.pallas_call(
        kernel,
        out_shape=(jax.ShapeDtypeStruct((n, h, wp_out, cout), jnp.float32),
                   jax.ShapeDtypeStruct((n, 1, cout), jnp.float32),
                   jax.ShapeDtypeStruct((n, 1, cout), jnp.float32)),
        grid=(n, n_tiles),
        in_specs=[
            # 1-row halo above / the tile itself / 1-row halo below (same array)
            pl.BlockSpec((1, 1, wp_in, cin),
                         lambda b, i: (b, jnp.maximum(i * th - 1, 0), 0, 0)),
            pl.BlockSpec((1, th, wp_in, cin), lambda b, i: (b, i, 0, 0)),
            pl.BlockSpec((1, 1, wp_in, cin),
                         lambda b, i: (b, jnp.minimum(i * th + th, h - 1), 0, 0)),
            pl.BlockSpec((9, cin, cout), lambda b, i: (0, 0, 0)),
            pl.BlockSpec((1, cin), lambda b, i: (0, 0)),
            pl.BlockSpec((1, cin), lambda b, i: (0, 0)),
        ],
        out_specs=(
            pl.BlockSpec((1, th, wp_out, cout), lambda b, i: (b, i, 0, 0)),
            pl.BlockSpec((1, 1, cout), lambda b, i: (b, 0, 0)),
            pl.BlockSpec((1, 1, cout), lambda b, i: (b, 0, 0)),
        ),
        scratch_shapes=[pltpu.VMEM((th + 2, wp_in, cin), jnp.float32)],
        compiler_params=pltpu.CompilerParams(
            dimension_semantics=("parallel", "arbitrary"),
            vmem_limit_bytes=VMEM_LIMIT),
        cost_estimate=cost,
    )(x_p, x_p, x_p, w9, scale_in, shift_in)

    # Finish the (tiny) cross-batch reduction and form BN scale/shift inputs.
    count = n * h * w_real
    total = jnp.sum(psum[:, 0, :], axis=0)
    total_sq = jnp.sum(psq[:, 0, :], axis=0)
    mean = total / count
    # biased (training-mode) variance; single-pass E[x^2]-mean^2 form comes from
    # the fused statistics (fine in f32 for activation-scale data).
    var = total_sq / count - mean * mean
    return y, mean, var


# ----------------------------------------------------------------------------
# Final BN + ReLU (elementwise) -- cannot be fused upstream because BN2's
# statistics need all of conv2's output.
# ----------------------------------------------------------------------------
def _bn_relu_kernel(y_ref, scale_ref, shift_ref, o_ref):
    y = y_ref[...].astype(jnp.float32)
    scale = scale_ref[...].reshape(1, 1, 1, -1)
    shift = shift_ref[...].reshape(1, 1, 1, -1)
    o_ref[...] = jnp.maximum(y * scale + shift, 0.0).astype(o_ref.dtype)


def _bn_relu(y, scale, shift, *, tile_h):
    n, h, w, c = y.shape
    th = tile_h
    return pl.pallas_call(
        _bn_relu_kernel,
        out_shape=jax.ShapeDtypeStruct((n, h, w, c), y.dtype),
        grid=(n, h // th),
        in_specs=[
            pl.BlockSpec((1, th, w, c), lambda b, i: (b, i, 0, 0)),
            pl.BlockSpec((1, c), lambda b, i: (0, 0)),
            pl.BlockSpec((1, c), lambda b, i: (0, 0)),
        ],
        out_specs=pl.BlockSpec((1, th, w, c), lambda b, i: (b, i, 0, 0)),
        compiler_params=pltpu.CompilerParams(
            dimension_semantics=("parallel", "parallel"),
            vmem_limit_bytes=VMEM_LIMIT),
    )(y, scale.reshape(1, c).astype(jnp.float32),
      shift.reshape(1, c).astype(jnp.float32))


# ----------------------------------------------------------------------------
# DoubleConv forward (NCHW in / NCHW out, like the PyTorch module).
# ----------------------------------------------------------------------------
@jax.jit
def double_conv(x_nchw, params):
    x = jnp.transpose(x_nchw, (0, 2, 3, 1))            # NCHW -> NHWC
    n, h, w, cin = x.shape
    assert w % 8 == 0, "W must be a multiple of 8"
    th = _pick_tile_h(h)

    # Only the (small, Cin-channel) network input is padded here; the conv
    # kernels emit the big intermediate activation with its zero border columns
    # already in place, so there is no jnp.pad pass over intermediates.
    pad_x = PAD_MID + 1
    x_p = jnp.pad(x, ((0, 0), (0, 0), (pad_x, pad_x), (0, 0)))

    # conv1 (+ fused BN1 batch statistics)
    y1, mean1, var1 = _conv_block(x_p, params["w1"], None, None,
                                  in_pad=pad_x, out_pad=PAD_MID,
                                  apply_input_act=False, tile_h=th)
    scale1 = params["gamma1"] * jax.lax.rsqrt(var1 + EPS)
    shift1 = params["beta1"] - mean1 * scale1

    # BN1+ReLU applied on load inside conv2 (+ fused BN2 batch statistics)
    y2, mean2, var2 = _conv_block(y1, params["w2"], scale1, shift1,
                                  in_pad=PAD_MID, out_pad=0,
                                  apply_input_act=True, tile_h=th)
    scale2 = params["gamma2"] * jax.lax.rsqrt(var2 + EPS)
    shift2 = params["beta2"] - mean2 * scale2

    out = _bn_relu(y2, scale2, shift2, tile_h=th)

    # TODO(synk): running_mean/running_var buffer updates (training-mode side
    # effect of nn.BatchNorm2d) are not reproduced; they do not affect the
    # returned tensor.
    return jnp.transpose(out, (0, 3, 1, 2))            # NHWC -> NCHW


# Pure-JAX reference (same math, same bf16 conv operands) for correctness check.
def double_conv_ref(x_nchw, params, compute_dtype=COMPUTE_DTYPE):
    dn = ("NHWC", "HWIO", "NHWC")
    x = jnp.transpose(x_nchw, (0, 2, 3, 1))

    def block(a, w, gamma, beta):
        y = jax.lax.conv_general_dilated(
            a.astype(compute_dtype), w.astype(compute_dtype), (1, 1), "SAME",
            dimension_numbers=dn, preferred_element_type=jnp.float32)
        mean = jnp.mean(y, axis=(0, 1, 2))
        var = jnp.var(y, axis=(0, 1, 2))
        yn = (y - mean) * jax.lax.rsqrt(var + EPS) * gamma + beta
        return jnp.maximum(yn, 0.0)

    a1 = block(x, params["w1"], params["gamma1"], params["beta1"])
    a2 = block(a1, params["w2"], params["gamma2"], params["beta2"])
    return jnp.transpose(a2, (0, 3, 1, 2))


def init_params(key, in_channels, out_channels):
    k1, k2 = jax.random.split(key)
    # Conv2d(in, out, 3, bias=False) weights stored HWIO; deterministic init.
    w1 = jax.random.normal(k1, (3, 3, in_channels, out_channels), jnp.float32)
    w1 = w1 * (1.0 / jnp.sqrt(9.0 * in_channels))
    w2 = jax.random.normal(k2, (3, 3, out_channels, out_channels), jnp.float32)
    w2 = w2 * (1.0 / jnp.sqrt(9.0 * out_channels))
    return {
        "w1": w1,
        "w2": w2,
        "gamma1": jnp.ones((out_channels,), jnp.float32),   # BatchNorm2d default
        "beta1": jnp.zeros((out_channels,), jnp.float32),
        "gamma2": jnp.ones((out_channels,), jnp.float32),
        "beta2": jnp.zeros((out_channels,), jnp.float32),
    }


if __name__ == "__main__":
    key = jax.random.PRNGKey(0)
    kx, kp = jax.random.split(key)

    N, Cin, Cout, H, W = 2, 4, 8, 16, 16
    x = jax.random.normal(kx, (N, Cin, H, W), jnp.float32)   # NCHW, like PyTorch
    params = init_params(kp, Cin, Cout)

    out = jax.block_until_ready(double_conv(x, params))
    ref = double_conv_ref(x, params)

    assert out.shape == (N, Cout, H, W), out.shape
    # bf16 MXU operands (in both paths) -> modest tolerance; real bugs (wrong
    # halo/mask/stats) would produce O(0.1..1) errors.
    assert jnp.allclose(out, ref, atol=3e-2, rtol=3e-2), (
        float(jnp.max(jnp.abs(out - ref))))

    print("KERNEL_OK")
</pallas_src>

<mosaic_0001>
module attributes {stable_mosaic.version = 11 : i64} {
  func.func @_conv3x3_bn_kernel(%arg0: i32, %arg1: i32, %arg2: memref<1x1x26x4xf32, #tpu.memory_space<vmem>>, %arg3: memref<1x8x26x4xf32, #tpu.memory_space<vmem>>, %arg4: memref<1x1x26x4xf32, #tpu.memory_space<vmem>>, %arg5: memref<9x4x8xbf16, #tpu.memory_space<vmem>>, %arg6: memref<1x4xf32, #tpu.memory_space<vmem>>, %arg7: memref<1x4xf32, #tpu.memory_space<vmem>>, %arg8: memref<1x8x24x8xf32, #tpu.memory_space<vmem>>, %arg9: memref<1x1x8xf32, #tpu.memory_space<vmem>>, %arg10: memref<1x1x8xf32, #tpu.memory_space<vmem>>, %arg11: memref<10x26x4xf32, #tpu.memory_space<vmem>>) attributes {dimension_semantics = [#tpu.dimension_semantics<parallel>, #tpu.dimension_semantics<arbitrary>], iteration_bounds = array<i64: 2, 2>, scalar_prefetch = 0 : i64, scratch_operands = 1 : i64, tpu.core_type = #tpu.core_type<tc>, window_params = [{transform_indices = @transform_0, window_bounds = array<i64: 1, 1, 26, 4>}, {transform_indices = @transform_1, window_bounds = array<i64: 1, 8, 26, 4>}, {transform_indices = @transform_2, window_bounds = array<i64: 1, 1, 26, 4>}, {pipeline_mode = #tpu.pipeline_mode<synchronous>, transform_indices = @transform_3, window_bounds = array<i64: 9, 4, 8>}, {pipeline_mode = #tpu.pipeline_mode<synchronous>, transform_indices = @transform_4, window_bounds = array<i64: 1, 4>}, {pipeline_mode = #tpu.pipeline_mode<synchronous>, transform_indices = @transform_5, window_bounds = array<i64: 1, 4>}, {transform_indices = @transform_6, window_bounds = array<i64: 1, 8, 24, 8>}, {transform_indices = @transform_7, window_bounds = array<i64: 1, 1, 8>}, {transform_indices = @transform_8, window_bounds = array<i64: 1, 1, 8>}]} {
    %c0 = arith.constant 0 : index
    %c0_0 = arith.constant 0 : index
    %c0_1 = arith.constant 0 : index
    %c0_2 = arith.constant 0 : index
    %0 = vector.load %arg2[%c0, %c0_0, %c0_1, %c0_2] : memref<1x1x26x4xf32, #tpu.memory_space<vmem>>, vector<1x1x26x4xf32>
    %1 = vector.shape_cast %0 : vector<1x1x26x4xf32> to vector<1x26x4xf32>
    %c0_i32 = arith.constant 0 : i32
    %2 = arith.cmpi sgt, %arg1, %c0_i32 : i32
    %3 = arith.extui %2 : i1 to i32
    %4 = arith.sitofp %3 : i32 to f32
    %5 = vector.broadcast %4 : f32 to vector<1x26x4xf32>
    %6 = arith.mulf %1, %5 : vector<1x26x4xf32>
    %c0_3 = arith.constant 0 : index
    %c0_4 = arith.constant 0 : index
    %c0_5 = arith.constant 0 : index
    %c0_6 = arith.constant 0 : index
    %7 = vector.load %arg4[%c0_3, %c0_4, %c0_5, %c0_6] : memref<1x1x26x4xf32, #tpu.memory_space<vmem>>, vector<1x1x26x4xf32>
    %8 = vector.shape_cast %7 : vector<1x1x26x4xf32> to vector<1x26x4xf32>
    %c1_i32 = arith.constant 1 : i32
    %9 = arith.cmpi slt, %arg1, %c1_i32 : i32
    %10 = arith.extui %9 : i1 to i32
    %11 = arith.sitofp %10 : i32 to f32
    %12 = vector.broadcast %11 : f32 to vector<1x26x4xf32>
    %13 = arith.mulf %8, %12 : vector<1x26x4xf32>
    %c0_7 = arith.constant 0 : index
    %c0_8 = arith.constant 0 : index
    %c0_9 = arith.constant 0 : index
    %14 = vector.load %arg11[%c0_7, %c0_8, %c0_9] : memref<10x26x4xf32, #tpu.memory_space<vmem>>, vector<1x26x4xf32>
    tpu.vector_store %arg11[%c0_7, %c0_8, %c0_9], %6 {strides = array<i32>} : memref<10x26x4xf32, #tpu.memory_space<vmem>>, vector<1x26x4xf32>,
    %c0_10 = arith.constant 0 : index
    %c0_11 = arith.constant 0 : index
    %c0_12 = arith.constant 0 : index
    %c0_13 = arith.constant 0 : index
    %15 = vector.load %arg3[%c0_10, %c0_11, %c0_12, %c0_13] : memref<1x8x26x4xf32, #tpu.memory_space<vmem>>, vector<1x8x26x4xf32>
    %16 = vector.shape_cast %15 : vector<1x8x26x4xf32> to vector<8x26x4xf32>
    %c1 = arith.constant 1 : index
    %c0_14 = arith.constant 0 : index
    %c0_15 = arith.constant 0 : index
    %17 = vector.load %arg11[%c1, %c0_14, %c0_15] : memref<10x26x4xf32, #tpu.memory_space<vmem>>, vector<8x26x4xf32>
    tpu.vector_store %arg11[%c1, %c0_14, %c0_15], %16 {strides = array<i32>} : memref<10x26x4xf32, #tpu.memory_space<vmem>>, vector<8x26x4xf32>,
    %c9 = arith.constant 9 : index
    %c0_16 = arith.constant 0 : index
    %c0_17 = arith.constant 0 : index
    %18 = vector.load %arg11[%c9, %c0_16, %c0_17] : memref<10x26x4xf32, #tpu.memory_space<vmem>>, vector<1x26x4xf32>
    tpu.vector_store %arg11[%c9, %c0_16, %c0_17], %13 {strides = array<i32>} : memref<10x26x4xf32, #tpu.memory_space<vmem>>, vector<1x26x4xf32>,
    %c0_18 = arith.constant 0 : index
    %c0_19 = arith.constant 0 : index
    %c0_20 = arith.constant 0 : index
    %19 = vector.load %arg11[%c0_18, %c0_19, %c0_20] : memref<10x26x4xf32, #tpu.memory_space<vmem>>, vector<10x26x4xf32>
    %cst = arith.constant 0.000000e+00 : f32
    %20 = vector.broadcast %cst : f32 to vector<192x8xf32>
    %21 = vector.extract_strided_slice %19 {offsets = [0, 0, 0], sizes = [8, 24, 4], strides = [1, 1, 1]} : vector<10x26x4xf32> to vector<8x24x4xf32>
    %22 = vector.shape_cast %21 : vector<8x24x4xf32> to vector<192x4xf32>
    %23 = arith.truncf %22 : vector<192x4xf32> to vector<192x4xbf16>
    %c0_21 = arith.constant 0 : index
    %c0_22 = arith.constant 0 : index
    %c0_23 = arith.constant 0 : index
    %24 = vector.load %arg5[%c0_21, %c0_22, %c0_23] : memref<9x4x8xbf16, #tpu.memory_space<vmem>>, vector<1x4x8xbf16>
    %25 = vector.shape_cast %24 : vector<1x4x8xbf16> to vector<4x8xbf16>
    %cst_24 = arith.constant dense<0.000000e+00> : vector<192x8xf32>
    %26 = tpu.matmul %23, %25, %cst_24 {dimension_numbers = #tpu.dot_dimension_numbers<[1], [0], [0], [1], [0, 0, 1, 1], [], []>} : vector<192x4xbf16>, vector<4x8xbf16>, vector<192x8xf32> -> vector<192x8xf32>
    %27 = arith.addf %20, %26 : vector<192x8xf32>
    %28 = vector.extract_strided_slice %19 {offsets = [0, 1, 0], sizes = [8, 24, 4], strides = [1, 1, 1]} : vector<10x26x4xf32> to vector<8x24x4xf32>
    %29 = vector.shape_cast %28 : vector<8x24x4xf32> to vector<192x4xf32>
    %30 = arith.truncf %29 : vector<192x4xf32> to vector<192x4xbf16>
    %c1_25 = arith.constant 1 : index
    %c0_26 = arith.constant 0 : index
    %c0_27 = arith.constant 0 : index
    %31 = vector.load %arg5[%c1_25, %c0_26, %c0_27] : memref<9x4x8xbf16, #tpu.memory_space<vmem>>, vector<1x4x8xbf16>
    %32 = vector.shape_cast %31 : vector<1x4x8xbf16> to vector<4x8xbf16>
    %cst_28 = arith.constant dense<0.000000e+00> : vector<192x8xf32>
    %33 = tpu.matmul %30, %32, %cst_28 {dimension_numbers = #tpu.dot_dimension_numbers<[1], [0], [0], [1], [0, 0, 1, 1], [], []>} : vector<192x4xbf16>, vector<4x8xbf16>, vector<192x8xf32> -> vector<192x8xf32>
    %34 = arith.addf %27, %33 : vector<192x8xf32>
    %35 = vector.extract_strided_slice %19 {offsets = [0, 2, 0], sizes = [8, 24, 4], strides = [1, 1, 1]} : vector<10x26x4xf32> to vector<8x24x4xf32>
    %36 = vector.shape_cast %35 : vector<8x24x4xf32> to vector<192x4xf32>
    %37 = arith.truncf %36 : vector<192x4xf32> to vector<192x4xbf16>
    %c2 = arith.constant 2 : index
    %c0_29 = arith.constant 0 : index
    %c0_30 = arith.constant 0 : index
    %38 = vector.load %arg5[%c2, %c0_29, %c0_30] : memref<9x4x8xbf16, #tpu.memory_space<vmem>>, vector<1x4x8xbf16>
    %39 = vector.shape_cast %38 : vector<1x4x8xbf16> to vector<4x8xbf16>
    %cst_31 = arith.constant dense<0.000000e+00> : vector<192x8xf32>
    %40 = tpu.matmul %37, %39, %cst_31 {dimension_numbers = #tpu.dot_dimension_numbers<[1], [0], [0], [1], [0, 0, 1, 1], [], []>} : vector<192x4xbf16>, vector<4x8xbf16>, vector<192x8xf32> -> vector<192x8xf32>
    %41 = arith.addf %34, %40 : vector<192x8xf32>
    %42 = vector.extract_strided_slice %19 {offsets = [1, 0, 0], sizes = [8, 24, 4], strides = [1, 1, 1]} : vector<10x26x4xf32> to vector<8x24x4xf32>
    %43 = vector.shape_cast %42 : vector<8x24x4xf32> to vector<192x4xf32>
    %44 = arith.truncf %43 : vector<192x4xf32> to vector<192x4xbf16>
    %c3 = arith.constant 3 : index
    %c0_32 = arith.constant 0 : index
    %c0_33 = arith.constant 0 : index
    %45 = vector.load %arg5[%c3, %c0_32, %c0_33] : memref<9x4x8xbf16, #tpu.memory_space<vmem>>, vector<1x4x8xbf16>
    %46 = vector.shape_cast %45 : vector<1x4x8xbf16> to vector<4x8xbf16>
    %cst_34 = arith.constant dense<0.000000e+00> : vector<192x8xf32>
    %47 = tpu.matmul %44, %46, %cst_34 {dimension_numbers = #tpu.dot_dimension_numbers<[1], [0], [0], [1], [0, 0, 1, 1], [], []>} : vector<192x4xbf16>, vector<4x8xbf16>, vector<192x8xf32> -> vector<192x8xf32>
    %48 = arith.addf %41, %47 : vector<192x8xf32>
    %49 = vector.extract_strided_slice %19 {offsets = [1, 1, 0], sizes = [8, 24, 4], strides = [1, 1, 1]} : vector<10x26x4xf32> to vector<8x24x4xf32>
    %50 = vector.shape_cast %49 : vector<8x24x4xf32> to vector<192x4xf32>
    %51 = arith.truncf %50 : vector<192x4xf32> to vector<192x4xbf16>
    %c4 = arith.constant 4 : index
    %c0_35 = arith.constant 0 : index
    %c0_36 = arith.constant 0 : index
    %52 = vector.load %arg5[%c4, %c0_35, %c0_36] : memref<9x4x8xbf16, #tpu.memory_space<vmem>>, vector<1x4x8xbf16>
    %53 = vector.shape_cast %52 : vector<1x4x8xbf16> to vector<4x8xbf16>
    %cst_37 = arith.constant dense<0.000000e+00> : vector<192x8xf32>
    %54 = tpu.matmul %51, %53, %cst_37 {dimension_numbers = #tpu.dot_dimension_numbers<[1], [0], [0], [1], [0, 0, 1, 1], [], []>} : vector<192x4xbf16>, vector<4x8xbf16>, vector<192x8xf32> -> vector<192x8xf32>
    %55 = arith.addf %48, %54 : vector<192x8xf32>
    %56 = vector.extract_strided_slice %19 {offsets = [1, 2, 0], sizes = [8, 24, 4], strides = [1, 1, 1]} : vector<10x26x4xf32> to vector<8x24x4xf32>
    %57 = vector.shape_cast %56 : vector<8x24x4xf32> to vector<192x4xf32>
    %58 = arith.truncf %57 : vector<192x4xf32> to vector<192x4xbf16>
    %c5 = arith.constant 5 : index
    %c0_38 = arith.constant 0 : index
    %c0_39 = arith.constant 0 : index
    %59 = vector.load %arg5[%c5, %c0_38, %c0_39] : memref<9x4x8xbf16, #tpu.memory_space<vmem>>, vector<1x4x8xbf16>
    %60 = vector.shape_cast %59 : vector<1x4x8xbf16> to vector<4x8xbf16>
    %cst_40 = arith.constant dense<0.000000e+00> : vector<192x8xf32>
    %61 = tpu.matmul %58, %60, %cst_40 {dimension_numbers = #tpu.dot_dimension_numbers<[1], [0], [0], [1], [0, 0, 1, 1], [], []>} : vector<192x4xbf16>, vector<4x8xbf16>, vector<192x8xf32> -> vector<192x8xf32>
    %62 = arith.addf %55, %61 : vector<192x8xf32>
    %63 = vector.extract_strided_slice %19 {offsets = [2, 0, 0], sizes = [8, 24, 4], strides = [1, 1, 1]} : vector<10x26x4xf32> to vector<8x24x4xf32>
    %64 = vector.shape_cast %63 : vector<8x24x4xf32> to vector<192x4xf32>
    %65 = arith.truncf %64 : vector<192x4xf32> to vector<192x4xbf16>
    %c6 = arith.constant 6 : index
    %c0_41 = arith.constant 0 : index
    %c0_42 = arith.constant 0 : index
    %66 = vector.load %arg5[%c6, %c0_41, %c0_42] : memref<9x4x8xbf16, #tpu.memory_space<vmem>>, vector<1x4x8xbf16>
    %67 = vector.shape_cast %66 : vector<1x4x8xbf16> to vector<4x8xbf16>
    %cst_43 = arith.constant dense<0.000000e+00> : vector<192x8xf32>
    %68 = tpu.matmul %65, %67, %cst_43 {dimension_numbers = #tpu.dot_dimension_numbers<[1], [0], [0], [1], [0, 0, 1, 1], [], []>} : vector<192x4xbf16>, vector<4x8xbf16>, vector<192x8xf32> -> vector<192x8xf32>
    %69 = arith.addf %62, %68 : vector<192x8xf32>
    %70 = vector.extract_strided_slice %19 {offsets = [2, 1, 0], sizes = [8, 24, 4], strides = [1, 1, 1]} : vector<10x26x4xf32> to vector<8x24x4xf32>
    %71 = vector.shape_cast %70 : vector<8x24x4xf32> to vector<192x4xf32>
    %72 = arith.truncf %71 : vector<192x4xf32> to vector<192x4xbf16>
    %c7 = arith.constant 7 : index
    %c0_44 = arith.constant 0 : index
    %c0_45 = arith.constant 0 : index
    %73 = vector.load %arg5[%c7, %c0_44, %c0_45] : memref<9x4x8xbf16, #tpu.memory_space<vmem>>, vector<1x4x8xbf16>
    %74 = vector.shape_cast %73 : vector<1x4x8xbf16> to vector<4x8xbf16>
    %cst_46 = arith.constant dense<0.000000e+00> : vector<192x8xf32>
    %75 = tpu.matmul %72, %74, %cst_46 {dimension_numbers = #tpu.dot_dimension_numbers<[1], [0], [0], [1], [0, 0, 1, 1], [], []>} : vector<192x4xbf16>, vector<4x8xbf16>, vector<192x8xf32> -> vector<192x8xf32>
    %76 = arith.addf %69, %75 : vector<192x8xf32>
    %77 = vector.extract_strided_slice %19 {offsets = [2, 2, 0], sizes = [8, 24, 4], strides = [1, 1, 1]} : vector<10x26x4xf32> to vector<8x24x4xf32>
    %78 = vector.shape_cast %77 : vector<8x24x4xf32> to vector<192x4xf32>
    %79 = arith.truncf %78 : vector<192x4xf32> to vector<192x4xbf16>
    %c8 = arith.constant 8 : index
    %c0_47 = arith.constant 0 : index
    %c0_48 = arith.constant 0 : index
    %80 = vector.load %arg5[%c8, %c0_47, %c0_48] : memref<9x4x8xbf16, #tpu.memory_space<vmem>>, vector<1x4x8xbf16>
    %81 = vector.shape_cast %80 : vector<1x4x8xbf16> to vector<4x8xbf16>
    %cst_49 = arith.constant dense<0.000000e+00> : vector<192x8xf32>
    %82 = tpu.matmul %79, %81, %cst_49 {dimension_numbers = #tpu.dot_dimension_numbers<[1], [0], [0], [1], [0, 0, 1, 1], [], []>} : vector<192x4xbf16>, vector<4x8xbf16>, vector<192x8xf32> -> vector<192x8xf32>
    %83 = arith.addf %76, %82 : vector<192x8xf32>
    %84 = vector.shape_cast %83 : vector<192x8xf32> to vector<8x24x8xf32>
    %85 = tpu.iota {dimensions = array<i32: 1>} : vector<1x24x1xi32>
    %c4_i32 = arith.constant 4 : i32
    %86 = vector.broadcast %c4_i32 : i32 to vector<1x24x1xi32>
    %87 = arith.cmpi sge, %85, %86 : vector<1x24x1xi32>
    %c20_i32 = arith.constant 20 : i32
    %88 = vector.broadcast %c20_i32 : i32 to vector<1x24x1xi32>
    %89 = arith.cmpi slt, %85, %88 : vector<1x24x1xi32>
    %90 = arith.andi %87, %89 : vector<1x24x1xi1>
    %cst_50 = arith.constant 0.000000e+00 : f32
    %91 = vector.shape_cast %90 : vector<1x24x1xi1> to vector<1x24x1xi1>
    %92 = vector.broadcast %91 : vector<1x24x1xi1> to vector<8x24x8xi1>
    %93 = vector.broadcast %cst_50 : f32 to vector<8x24x8xf32>
    %94 = arith.select %92, %84, %93 : vector<8x24x8xi1>, vector<8x24x8xf32>
    %95 = vector.shape_cast %94 : vector<8x24x8xf32> to vector<192x8xf32>
    %cst_51 = arith.constant dense<0.000000e+00> : vector<8xf32>
    %96 = vector.multi_reduction <add>, %95, %cst_51 [0] : vector<192x8xf32> to vector<8xf32>
    %97 = vector.shape_cast %96 : vector<8xf32> to vector<1x8xf32>
    %98 = arith.mulf %95, %95 : vector<192x8xf32>
    %cst_52 = arith.constant dense<0.000000e+00> : vector<8xf32>
    %99 = vector.multi_reduction <add>, %98, %cst_52 [0] : vector<192x8xf32> to vector<8xf32>
    %100 = vector.shape_cast %99 : vector<8xf32> to vector<1x8xf32>
    %c0_i32_53 = arith.constant 0 : i32
    %101 = arith.cmpi eq, %arg1, %c0_i32_53 : i32
    %102 = arith.extui %101 : i1 to i32
    %c0_i32_54 = arith.constant 0 : i32
    %103 = arith.cmpi ne, %102, %c0_i32_54 : i32
    scf.if %103 {
      %cst_71 = arith.constant 0.000000e+00 : f32
      %114 = vector.broadcast %cst_71 : f32 to vector<1x1x8xf32>
      %c0_72 = arith.constant 0 : index
      %c0_73 = arith.constant 0 : index
      %c0_74 = arith.constant 0 : index
      %115 = vector.load %arg9[%c0_72, %c0_73, %c0_74] : memref<1x1x8xf32, #tpu.memory_space<vmem>>, vector<1x1x8xf32>
      tpu.vector_store %arg9[%c0_72, %c0_73, %c0_74], %114 {strides = array<i32>} : memref<1x1x8xf32, #tpu.memory_space<vmem>>, vector<1x1x8xf32>,
      %cst_75 = arith.constant 0.000000e+00 : f32
      %116 = vector.broadcast %cst_75 : f32 to vector<1x1x8xf32>
      %c0_76 = arith.constant 0 : index
      %c0_77 = arith.constant 0 : index
      %c0_78 = arith.constant 0 : index
      %117 = vector.load %arg10[%c0_76, %c0_77, %c0_78] : memref<1x1x8xf32, #tpu.memory_space<vmem>>, vector<1x1x8xf32>
      tpu.vector_store %arg10[%c0_76, %c0_77, %c0_78], %116 {strides = array<i32>} : memref<1x1x8xf32, #tpu.memory_space<vmem>>, vector<1x1x8xf32>,
    } else {
    }
    %c0_55 = arith.constant 0 : index
    %c0_56 = arith.constant 0 : index
    %c0_57 = arith.constant 0 : index
    %104 = vector.load %arg9[%c0_55, %c0_56, %c0_57] : memref<1x1x8xf32, #tpu.memory_space<vmem>>, vector<1x1x8xf32>
    %105 = vector.shape_cast %97 : vector<1x8xf32> to vector<1x1x8xf32>
    %106 = arith.addf %104, %105 : vector<1x1x8xf32>
    %c0_58 = arith.constant 0 : index
    %c0_59 = arith.constant 0 : index
    %c0_60 = arith.constant 0 : index
    %107 = vector.load %arg9[%c0_58, %c0_59, %c0_60] : memref<1x1x8xf32, #tpu.memory_space<vmem>>, vector<1x1x8xf32>
    tpu.vector_store %arg9[%c0_58, %c0_59, %c0_60], %106 {strides = array<i32>} : memref<1x1x8xf32, #tpu.memory_space<vmem>>, vector<1x1x8xf32>,
    %c0_61 = arith.constant 0 : index
    %c0_62 = arith.constant 0 : index
    %c0_63 = arith.constant 0 : index
    %108 = vector.load %arg10[%c0_61, %c0_62, %c0_63] : memref<1x1x8xf32, #tpu.memory_space<vmem>>, vector<1x1x8xf32>
    %109 = vector.shape_cast %100 : vector<1x8xf32> to vector<1x1x8xf32>
    %110 = arith.addf %108, %109 : vector<1x1x8xf32>
    %c0_64 = arith.constant 0 : index
    %c0_65 = arith.constant 0 : index
    %c0_66 = arith.constant 0 : index
    %111 = vector.load %arg10[%c0_64, %c0_65, %c0_66] : memref<1x1x8xf32, #tpu.memory_space<vmem>>, vector<1x1x8xf32>
    tpu.vector_store %arg10[%c0_64, %c0_65, %c0_66], %110 {strides = array<i32>} : memref<1x1x8xf32, #tpu.memory_space<vmem>>, vector<1x1x8xf32>,
    %112 = vector.shape_cast %94 : vector<8x24x8xf32> to vector<1x8x24x8xf32>
    %c0_67 = arith.constant 0 : index
    %c0_68 = arith.constant 0 : index
    %c0_69 = arith.constant 0 : index
    %c0_70 = arith.constant 0 : index
    %113 = vector.load %arg8[%c0_67, %c0_68, %c0_69, %c0_70] : memref<1x8x24x8xf32, #tpu.memory_space<vmem>>, vector<1x8x24x8xf32>
    tpu.vector_store %arg8[%c0_67, %c0_68, %c0_69, %c0_70], %112 {strides = array<i32>} : memref<1x8x24x8xf32, #tpu.memory_space<vmem>>, vector<1x8x24x8xf32>,
    return
  }
  func.func @transform_0(%arg0: i32, %arg1: i32) -> (i32, i32, i32, i32) {
    %c8_i32 = arith.constant 8 : i32
    %0 = arith.muli %arg1, %c8_i32 : i32
    %c1_i32 = arith.constant 1 : i32
    %1 = arith.subi %0, %c1_i32 : i32
    %c0_i32 = arith.constant 0 : i32
    %2 = arith.maxsi %1, %c0_i32 : i32
    %c0_i32_0 = arith.constant 0 : i32
    %c0_i32_1 = arith.constant 0 : i32
    %c0_i32_2 = arith.constant 0 : i32
    return %arg0, %2, %c0_i32_0, %c0_i32_1 : i32, i32, i32, i32
  }
  func.func @transform_1(%arg0: i32, %arg1: i32) -> (i32, i32, i32, i32) {
    %c0_i32 = arith.constant 0 : i32
    %c0_i32_0 = arith.constant 0 : i32
    %c0_i32_1 = arith.constant 0 : i32
    return %arg0, %arg1, %c0_i32, %c0_i32_0 : i32, i32, i32, i32
  }
  func.func @transform_2(%arg0: i32, %arg1: i32) -> (i32, i32, i32, i32) {
    %c8_i32 = arith.constant 8 : i32
    %0 = arith.muli %arg1, %c8_i32 : i32
    %c8_i32_0 = arith.constant 8 : i32
    %1 = arith.addi %0, %c8_i32_0 : i32
    %c15_i32 = arith.constant 15 : i32
    %2 = arith.minsi %1, %c15_i32 : i32
    %c0_i32 = arith.constant 0 : i32
    %c0_i32_1 = arith.constant 0 : i32
    %c0_i32_2 = arith.constant 0 : i32
    return %arg0, %2, %c0_i32, %c0_i32_1 : i32, i32, i32, i32
  }
  func.func @transform_3(%arg0: i32, %arg1: i32) -> (i32, i32, i32) {
    %c0_i32 = arith.constant 0 : i32
    %c0_i32_0 = arith.constant 0 : i32
    %c0_i32_1 = arith.constant 0 : i32
    %c0_i32_2 = arith.constant 0 : i32
    return %c0_i32, %c0_i32_0, %c0_i32_1 : i32, i32, i32
  }
  func.func @transform_4(%arg0: i32, %arg1: i32) -> (i32, i32) {
    %c0_i32 = arith.constant 0 : i32
    %c0_i32_0 = arith.constant 0 : i32
    %c0_i32_1 = arith.constant 0 : i32
    return %c0_i32, %c0_i32_0 : i32, i32
  }
  func.func @transform_5(%arg0: i32, %arg1: i32) -> (i32, i32) {
    %c0_i32 = arith.constant 0 : i32
    %c0_i32_0 = arith.constant 0 : i32
    %c0_i32_1 = arith.constant 0 : i32
    return %c0_i32, %c0_i32_0 : i32, i32
  }
  func.func @transform_6(%arg0: i32, %arg1: i32) -> (i32, i32, i32, i32) {
    %c0_i32 = arith.constant 0 : i32
    %c0_i32_0 = arith.constant 0 : i32
    %c0_i32_1 = arith.constant 0 : i32
    return %arg0, %arg1, %c0_i32, %c0_i32_0 : i32, i32, i32, i32
  }
  func.func @transform_7(%arg0: i32, %arg1: i32) -> (i32, i32, i32) {
    %c0_i32 = arith.constant 0 : i32
    %c0_i32_0 = arith.constant 0 : i32
    %c0_i32_1 = arith.constant 0 : i32
    return %arg0, %c0_i32, %c0_i32_0 : i32, i32, i32
  }
  func.func @transform_8(%arg0: i32, %arg1: i32) -> (i32, i32, i32) {
    %c0_i32 = arith.constant 0 : i32
    %c0_i32_0 = arith.constant 0 : i32
    %c0_i32_1 = arith.constant 0 : i32
    return %arg0, %c0_i32, %c0_i32_0 : i32, i32, i32
  }
}

module attributes {stable_mosaic.version = 11 : i64} {
  func.func @_conv3x3_bn_kernel(%arg0: i32, %arg1: i32, %arg2: memref<1x1x24x8xf32, #tpu.memory_space<vmem>>, %arg3: memref<1x8x24x8xf32, #tpu.memory_space<vmem>>, %arg4: memref<1x1x24x8xf32, #tpu.memory_space<vmem>>, %arg5: memref<9x8x8xbf16, #tpu.memory_space<vmem>>, %arg6: memref<1x8xf32, #tpu.memory_space<vmem>>, %arg7: memref<1x8xf32, #tpu.memory_space<vmem>>, %arg8: memref<1x8x16x8xf32, #tpu.memory_space<vmem>>, %arg9: memref<1x1x8xf32, #tpu.memory_space<vmem>>, %arg10: memref<1x1x8xf32, #tpu.memory_space<vmem>>, %arg11: memref<10x24x8xf32, #tpu.memory_space<vmem>>) attributes {dimension_semantics = [#tpu.dimension_semantics<parallel>, #tpu.dimension_semantics<arbitrary>], iteration_bounds = array<i64: 2, 2>, scalar_prefetch = 0 : i64, scratch_operands = 1 : i64, tpu.core_type = #tpu.core_type<tc>, window_params = [{transform_indices = @transform_0, window_bounds = array<i64: 1, 1, 24, 8>}, {transform_indices = @transform_1, window_bounds = array<i64: 1, 8, 24, 8>}, {transform_indices = @transform_2, window_bounds = array<i64: 1, 1, 24, 8>}, {pipeline_mode = #tpu.pipeline_mode<synchronous>, transform_indices = @transform_3, window_bounds = array<i64: 9, 8, 8>}, {pipeline_mode = #tpu.pipeline_mode<synchronous>, transform_indices = @transform_4, window_bounds = array<i64: 1, 8>}, {pipeline_mode = #tpu.pipeline_mode<synchronous>, transform_indices = @transform_5, window_bounds = array<i64: 1, 8>}, {transform_indices = @transform_6, window_bounds = array<i64: 1, 8, 16, 8>}, {transform_indices = @transform_7, window_bounds = array<i64: 1, 1, 8>}, {transform_indices = @transform_8, window_bounds = array<i64: 1, 1, 8>}]} {
    %0 = tpu.iota {dimensions = array<i32: 1>} : vector<1x24x1xi32>
    %c4_i32 = arith.constant 4 : i32
    %1 = vector.broadcast %c4_i32 : i32 to vector<1x24x1xi32>
    %2 = arith.cmpi sge, %0, %1 : vector<1x24x1xi32>
    %c20_i32 = arith.constant 20 : i32
    %3 = vector.broadcast %c20_i32 : i32 to vector<1x24x1xi32>
    %4 = arith.cmpi slt, %0, %3 : vector<1x24x1xi32>
    %5 = arith.andi %2, %4 : vector<1x24x1xi1>
    %c0 = arith.constant 0 : index
    %c0_0 = arith.constant 0 : index
    %6 = vector.load %arg6[%c0, %c0_0] : memref<1x8xf32, #tpu.memory_space<vmem>>, vector<1x8xf32>
    %7 = vector.shape_cast %6 : vector<1x8xf32> to vector<1x1x8xf32>
    %c0_1 = arith.constant 0 : index
    %c0_2 = arith.constant 0 : index
    %8 = vector.load %arg7[%c0_1, %c0_2] : memref<1x8xf32, #tpu.memory_space<vmem>>, vector<1x8xf32>
    %9 = vector.shape_cast %8 : vector<1x8xf32> to vector<1x1x8xf32>
    %c0_3 = arith.constant 0 : index
    %c0_4 = arith.constant 0 : index
    %c0_5 = arith.constant 0 : index
    %c0_6 = arith.constant 0 : index
    %10 = vector.load %arg2[%c0_3, %c0_4, %c0_5, %c0_6] : memref<1x1x24x8xf32, #tpu.memory_space<vmem>>, vector<1x1x24x8xf32>
    %11 = vector.shape_cast %10 : vector<1x1x24x8xf32> to vector<1x24x8xf32>
    %12 = vector.broadcast %7 : vector<1x1x8xf32> to vector<1x24x8xf32>
    %13 = arith.mulf %11, %12 : vector<1x24x8xf32>
    %14 = vector.broadcast %9 : vector<1x1x8xf32> to vector<1x24x8xf32>
    %15 = arith.addf %13, %14 : vector<1x24x8xf32>
    %cst = arith.constant 0.000000e+00 : f32
    %16 = vector.broadcast %cst : f32 to vector<1x24x8xf32>
    %17 = arith.maximumf %15, %16 : vector<1x24x8xf32>
    %cst_7 = arith.constant 0.000000e+00 : f32
    %18 = vector.shape_cast %5 : vector<1x24x1xi1> to vector<1x24x1xi1>
    %19 = vector.broadcast %18 : vector<1x24x1xi1> to vector<1x24x8xi1>
    %20 = vector.broadcast %cst_7 : f32 to vector<1x24x8xf32>
    %21 = arith.select %19, %17, %20 : vector<1x24x8xi1>, vector<1x24x8xf32>
    %c0_i32 = arith.constant 0 : i32
    %22 = arith.cmpi sgt, %arg1, %c0_i32 : i32
    %23 = arith.extui %22 : i1 to i32
    %24 = arith.sitofp %23 : i32 to f32
    %25 = vector.broadcast %24 : f32 to vector<1x24x8xf32>
    %26 = arith.mulf %21, %25 : vector<1x24x8xf32>
    %c0_8 = arith.constant 0 : index
    %c0_9 = arith.constant 0 : index
    %c0_10 = arith.constant 0 : index
    %c0_11 = arith.constant 0 : index
    %27 = vector.load %arg4[%c0_8, %c0_9, %c0_10, %c0_11] : memref<1x1x24x8xf32, #tpu.memory_space<vmem>>, vector<1x1x24x8xf32>
    %28 = vector.shape_cast %27 : vector<1x1x24x8xf32> to vector<1x24x8xf32>
    %29 = vector.broadcast %7 : vector<1x1x8xf32> to vector<1x24x8xf32>
    %30 = arith.mulf %28, %29 : vector<1x24x8xf32>
    %31 = vector.broadcast %9 : vector<1x1x8xf32> to vector<1x24x8xf32>
    %32 = arith.addf %30, %31 : vector<1x24x8xf32>
    %cst_12 = arith.constant 0.000000e+00 : f32
    %33 = vector.broadcast %cst_12 : f32 to vector<1x24x8xf32>
    %34 = arith.maximumf %32, %33 : vector<1x24x8xf32>
    %cst_13 = arith.constant 0.000000e+00 : f32
    %35 = vector.shape_cast %5 : vector<1x24x1xi1> to vector<1x24x1xi1>
    %36 = vector.broadcast %35 : vector<1x24x1xi1> to vector<1x24x8xi1>
    %37 = vector.broadcast %cst_13 : f32 to vector<1x24x8xf32>
    %38 = arith.select %36, %34, %37 : vector<1x24x8xi1>, vector<1x24x8xf32>
    %c1_i32 = arith.constant 1 : i32
    %39 = arith.cmpi slt, %arg1, %c1_i32 : i32
    %40 = arith.extui %39 : i1 to i32
    %41 = arith.sitofp %40 : i32 to f32
    %42 = vector.broadcast %41 : f32 to vector<1x24x8xf32>
    %43 = arith.mulf %38, %42 : vector<1x24x8xf32>
    %c0_14 = arith.constant 0 : index
    %c0_15 = arith.constant 0 : index
    %c0_16 = arith.constant 0 : index
    %44 = vector.load %arg11[%c0_14, %c0_15, %c0_16] : memref<10x24x8xf32, #tpu.memory_space<vmem>>, vector<1x24x8xf32>
    tpu.vector_store %arg11[%c0_14, %c0_15, %c0_16], %26 {strides = array<i32>} : memref<10x24x8xf32, #tpu.memory_space<vmem>>, vector<1x24x8xf32>,
    %c0_17 = arith.constant 0 : index
    %c0_18 = arith.constant 0 : index
    %c0_19 = arith.constant 0 : index
    %c0_20 = arith.constant 0 : index
    %45 = vector.load %arg3[%c0_17, %c0_18, %c0_19, %c0_20] : memref<1x8x24x8xf32, #tpu.memory_space<vmem>>, vector<1x8x24x8xf32>
    %46 = vector.shape_cast %45 : vector<1x8x24x8xf32> to vector<8x24x8xf32>
    %47 = vector.broadcast %7 : vector<1x1x8xf32> to vector<8x24x8xf32>
    %48 = arith.mulf %46, %47 : vector<8x24x8xf32>
    %49 = vector.broadcast %9 : vector<1x1x8xf32> to vector<8x24x8xf32>
    %50 = arith.addf %48, %49 : vector<8x24x8xf32>
    %cst_21 = arith.constant 0.000000e+00 : f32
    %51 = vector.broadcast %cst_21 : f32 to vector<8x24x8xf32>
    %52 = arith.maximumf %50, %51 : vector<8x24x8xf32>
    %cst_22 = arith.constant 0.000000e+00 : f32
    %53 = vector.shape_cast %5 : vector<1x24x1xi1> to vector<1x24x1xi1>
    %54 = vector.broadcast %53 : vector<1x24x1xi1> to vector<8x24x8xi1>
    %55 = vector.broadcast %cst_22 : f32 to vector<8x24x8xf32>
    %56 = arith.select %54, %52, %55 : vector<8x24x8xi1>, vector<8x24x8xf32>
    %c1 = arith.constant 1 : index
    %c0_23 = arith.constant 0 : index
    %c0_24 = arith.constant 0 : index
    %57 = vector.load %arg11[%c1, %c0_23, %c0_24] : memref<10x24x8xf32, #tpu.memory_space<vmem>>, vector<8x24x8xf32>
    tpu.vector_store %arg11[%c1, %c0_23, %c0_24], %56 {strides = array<i32>} : memref<10x24x8xf32, #tpu.memory_space<vmem>>, vector<8x24x8xf32>,
    %c9 = arith.constant 9 : index
    %c0_25 = arith.constant 0 : index
    %c0_26 = arith.constant 0 : index
    %58 = vector.load %arg11[%c9, %c0_25, %c0_26] : memref<10x24x8xf32, #tpu.memory_space<vmem>>, vector<1x24x8xf32>
    tpu.vector_store %arg11[%c9, %c0_25, %c0_26], %43 {strides = array<i32>} : memref<10x24x8xf32, #tpu.memory_space<vmem>>, vector<1x24x8xf32>,
    %c0_27 = arith.constant 0 : index
    %c0_28 = arith.constant 0 : index
    %c0_29 = arith.constant 0 : index
    %59 = vector.load %arg11[%c0_27, %c0_28, %c0_29] : memref<10x24x8xf32, #tpu.memory_space<vmem>>, vector<10x24x8xf32>
    %cst_30 = arith.constant 0.000000e+00 : f32
    %60 = vector.broadcast %cst_30 : f32 to vector<128x8xf32>
    %61 = vector.extract_strided_slice %59 {offsets = [0, 3, 0], sizes = [8, 16, 8], strides = [1, 1, 1]} : vector<10x24x8xf32> to vector<8x16x8xf32>
    %62 = vector.shape_cast %61 : vector<8x16x8xf32> to vector<128x8xf32>
    %63 = arith.truncf %62 : vector<128x8xf32> to vector<128x8xbf16>
    %c0_31 = arith.constant 0 : index
    %c0_32 = arith.constant 0 : index
    %c0_33 = arith.constant 0 : index
    %64 = vector.load %arg5[%c0_31, %c0_32, %c0_33] : memref<9x8x8xbf16, #tpu.memory_space<vmem>>, vector<1x8x8xbf16>
    %65 = vector.shape_cast %64 : vector<1x8x8xbf16> to vector<8x8xbf16>
    %cst_34 = arith.constant dense<0.000000e+00> : vector<128x8xf32>
    %66 = tpu.matmul %63, %65, %cst_34 {dimension_numbers = #tpu.dot_dimension_numbers<[1], [0], [0], [1], [0, 0, 1, 1], [], []>} : vector<128x8xbf16>, vector<8x8xbf16>, vector<128x8xf32> -> vector<128x8xf32>
    %67 = arith.addf %60, %66 : vector<128x8xf32>
    %68 = vector.extract_strided_slice %59 {offsets = [0, 4, 0], sizes = [8, 16, 8], strides = [1, 1, 1]} : vector<10x24x8xf32> to vector<8x16x8xf32>
    %69 = vector.shape_cast %68 : vector<8x16x8xf32> to vector<128x8xf32>
    %70 = arith.truncf %69 : vector<128x8xf32> to vector<128x8xbf16>
    %c1_35 = arith.constant 1 : index
    %c0_36 = arith.constant 0 : index
    %c0_37 = arith.constant 0 : index
    %71 = vector.load %arg5[%c1_35, %c0_36, %c0_37] : memref<9x8x8xbf16, #tpu.memory_space<vmem>>, vector<1x8x8xbf16>
    %72 = vector.shape_cast %71 : vector<1x8x8xbf16> to vector<8x8xbf16>
    %cst_38 = arith.constant dense<0.000000e+00> : vector<128x8xf32>
    %73 = tpu.matmul %70, %72, %cst_38 {dimension_numbers = #tpu.dot_dimension_numbers<[1], [0], [0], [1], [0, 0, 1, 1], [], []>} : vector<128x8xbf16>, vector<8x8xbf16>, vector<128x8xf32> -> vector<128x8xf32>
    %74 = arith.addf %67, %73 : vector<128x8xf32>
    %75 = vector.extract_strided_slice %59 {offsets = [0, 5, 0], sizes = [8, 16, 8], strides = [1, 1, 1]} : vector<10x24x8xf32> to vector<8x16x8xf32>
    %76 = vector.shape_cast %75 : vector<8x16x8xf32> to vector<128x8xf32>
    %77 = arith.truncf %76 : vector<128x8xf32> to vector<128x8xbf16>
    %c2 = arith.constant 2 : index
    %c0_39 = arith.constant 0 : index
    %c0_40 = arith.constant 0 : index
    %78 = vector.load %arg5[%c2, %c0_39, %c0_40] : memref<9x8x8xbf16, #tpu.memory_space<vmem>>, vector<1x8x8xbf16>
    %79 = vector.shape_cast %78 : vector<1x8x8xbf16> to vector<8x8xbf16>
    %cst_41 = arith.constant dense<0.000000e+00> : vector<128x8xf32>
    %80 = tpu.matmul %77, %79, %cst_41 {dimension_numbers = #tpu.dot_dimension_numbers<[1], [0], [0], [1], [0, 0, 1, 1], [], []>} : vector<128x8xbf16>, vector<8x8xbf16>, vector<128x8xf32> -> vector<128x8xf32>
    %81 = arith.addf %74, %80 : vector<128x8xf32>
    %82 = vector.extract_strided_slice %59 {offsets = [1, 3, 0], sizes = [8, 16, 8], strides = [1, 1, 1]} : vector<10x24x8xf32> to vector<8x16x8xf32>
    %83 = vector.shape_cast %82 : vector<8x16x8xf32> to vector<128x8xf32>
    %84 = arith.truncf %83 : vector<128x8xf32> to vector<128x8xbf16>
    %c3 = arith.constant 3 : index
    %c0_42 = arith.constant 0 : index
    %c0_43 = arith.constant 0 : index
    %85 = vector.load %arg5[%c3, %c0_42, %c0_43] : memref<9x8x8xbf16, #tpu.memory_space<vmem>>, vector<1x8x8xbf16>
    %86 = vector.shape_cast %85 : vector<1x8x8xbf16> to vector<8x8xbf16>
    %cst_44 = arith.constant dense<0.000000e+00> : vector<128x8xf32>
    %87 = tpu.matmul %84, %86, %cst_44 {dimension_numbers = #tpu.dot_dimension_numbers<[1], [0], [0], [1], [0, 0, 1, 1], [], []>} : vector<128x8xbf16>, vector<8x8xbf16>, vector<128x8xf32> -> vector<128x8xf32>
    %88 = arith.addf %81, %87 : vector<128x8xf32>
    %89 = vector.extract_strided_slice %59 {offsets = [1, 4, 0], sizes = [8, 16, 8], strides = [1, 1, 1]} : vector<10x24x8xf32> to vector<8x16x8xf32>
    %90 = vector.shape_cast %89 : vector<8x16x8xf32> to vector<128x8xf32>
    %91 = arith.truncf %90 : vector<128x8xf32> to vector<128x8xbf16>
    %c4 = arith.constant 4 : index
    %c0_45 = arith.constant 0 : index
    %c0_46 = arith.constant 0 : index
    %92 = vector.load %arg5[%c4, %c0_45, %c0_46] : memref<9x8x8xbf16, #tpu.memory_space<vmem>>, vector<1x8x8xbf16>
    %93 = vector.shape_cast %92 : vector<1x8x8xbf16> to vector<8x8xbf16>
    %cst_47 = arith.constant dense<0.000000e+00> : vector<128x8xf32>
    %94 = tpu.matmul %91, %93, %cst_47 {dimension_numbers = #tpu.dot_dimension_numbers<[1], [0], [0], [1], [0, 0, 1, 1], [], []>} : vector<128x8xbf16>, vector<8x8xbf16>, vector<128x8xf32> -> vector<128x8xf32>
    %95 = arith.addf %88, %94 : vector<128x8xf32>
    %96 = vector.extract_strided_slice %59 {offsets = [1, 5, 0], sizes = [8, 16, 8], strides = [1, 1, 1]} : vector<10x24x8xf32> to vector<8x16x8xf32>
    %97 = vector.shape_cast %96 : vector<8x16x8xf32> to vector<128x8xf32>
    %98 = arith.truncf %97 : vector<128x8xf32> to vector<128x8xbf16>
    %c5 = arith.constant 5 : index
    %c0_48 = arith.constant 0 : index
    %c0_49 = arith.constant 0 : index
    %99 = vector.load %arg5[%c5, %c0_48, %c0_49] : memref<9x8x8xbf16, #tpu.memory_space<vmem>>, vector<1x8x8xbf16>
    %100 = vector.shape_cast %99 : vector<1x8x8xbf16> to vector<8x8xbf16>
    %cst_50 = arith.constant dense<0.000000e+00> : vector<128x8xf32>
    %101 = tpu.matmul %98, %100, %cst_50 {dimension_numbers = #tpu.dot_dimension_numbers<[1], [0], [0], [1], [0, 0, 1, 1], [], []>} : vector<128x8xbf16>, vector<8x8xbf16>, vector<128x8xf32> -> vector<128x8xf32>
    %102 = arith.addf %95, %101 : vector<128x8xf32>
    %103 = vector.extract_strided_slice %59 {offsets = [2, 3, 0], sizes = [8, 16, 8], strides = [1, 1, 1]} : vector<10x24x8xf32> to vector<8x16x8xf32>
    %104 = vector.shape_cast %103 : vector<8x16x8xf32> to vector<128x8xf32>
    %105 = arith.truncf %104 : vector<128x8xf32> to vector<128x8xbf16>
    %c6 = arith.constant 6 : index
    %c0_51 = arith.constant 0 : index
    %c0_52 = arith.constant 0 : index
    %106 = vector.load %arg5[%c6, %c0_51, %c0_52] : memref<9x8x8xbf16, #tpu.memory_space<vmem>>, vector<1x8x8xbf16>
    %107 = vector.shape_cast %106 : vector<1x8x8xbf16> to vector<8x8xbf16>
    %cst_53 = arith.constant dense<0.000000e+00> : vector<128x8xf32>
    %108 = tpu.matmul %105, %107, %cst_53 {dimension_numbers = #tpu.dot_dimension_numbers<[1], [0], [0], [1], [0, 0, 1, 1], [], []>} : vector<128x8xbf16>, vector<8x8xbf16>, vector<128x8xf32> -> vector<128x8xf32>
    %109 = arith.addf %102, %108 : vector<128x8xf32>
    %110 = vector.extract_strided_slice %59 {offsets = [2, 4, 0], sizes = [8, 16, 8], strides = [1, 1, 1]} : vector<10x24x8xf32> to vector<8x16x8xf32>
    %111 = vector.shape_cast %110 : vector<8x16x8xf32> to vector<128x8xf32>
    %112 = arith.truncf %111 : vector<128x8xf32> to vector<128x8xbf16>
    %c7 = arith.constant 7 : index
    %c0_54 = arith.constant 0 : index
    %c0_55 = arith.constant 0 : index
    %113 = vector.load %arg5[%c7, %c0_54, %c0_55] : memref<9x8x8xbf16, #tpu.memory_space<vmem>>, vector<1x8x8xbf16>
    %114 = vector.shape_cast %113 : vector<1x8x8xbf16> to vector<8x8xbf16>
    %cst_56 = arith.constant dense<0.000000e+00> : vector<128x8xf32>
    %115 = tpu.matmul %112, %114, %cst_56 {dimension_numbers = #tpu.dot_dimension_numbers<[1], [0], [0], [1], [0, 0, 1, 1], [], []>} : vector<128x8xbf16>, vector<8x8xbf16>, vector<128x8xf32> -> vector<128x8xf32>
    %116 = arith.addf %109, %115 : vector<128x8xf32>
    %117 = vector.extract_strided_slice %59 {offsets = [2, 5, 0], sizes = [8, 16, 8], strides = [1, 1, 1]} : vector<10x24x8xf32> to vector<8x16x8xf32>
    %118 = vector.shape_cast %117 : vector<8x16x8xf32> to vector<128x8xf32>
    %119 = arith.truncf %118 : vector<128x8xf32> to vector<128x8xbf16>
    %c8 = arith.constant 8 : index
    %c0_57 = arith.constant 0 : index
    %c0_58 = arith.constant 0 : index
    %120 = vector.load %arg5[%c8, %c0_57, %c0_58] : memref<9x8x8xbf16, #tpu.memory_space<vmem>>, vector<1x8x8xbf16>
    %121 = vector.shape_cast %120 : vector<1x8x8xbf16> to vector<8x8xbf16>
    %cst_59 = arith.constant dense<0.000000e+00> : vector<128x8xf32>
    %122 = tpu.matmul %119, %121, %cst_59 {dimension_numbers = #tpu.dot_dimension_numbers<[1], [0], [0], [1], [0, 0, 1, 1], [], []>} : vector<128x8xbf16>, vector<8x8xbf16>, vector<128x8xf32> -> vector<128x8xf32>
    %123 = arith.addf %116, %122 : vector<128x8xf32>
    %124 = vector.shape_cast %123 : vector<128x8xf32> to vector<8x16x8xf32>
    %125 = vector.shape_cast %124 : vector<8x16x8xf32> to vector<128x8xf32>
    %cst_60 = arith.constant dense<0.000000e+00> : vector<8xf32>
    %126 = vector.multi_reduction <add>, %125, %cst_60 [0] : vector<128x8xf32> to vector<8xf32>
    %127 = vector.shape_cast %126 : vector<8xf32> to vector<1x8xf32>
    %128 = arith.mulf %125, %125 : vector<128x8xf32>
    %cst_61 = arith.constant dense<0.000000e+00> : vector<8xf32>
    %129 = vector.multi_reduction <add>, %128, %cst_61 [0] : vector<128x8xf32> to vector<8xf32>
    %130 = vector.shape_cast %129 : vector<8xf32> to vector<1x8xf32>
    %c0_i32_62 = arith.constant 0 : i32
    %131 = arith.cmpi eq, %arg1, %c0_i32_62 : i32
    %132 = arith.extui %131 : i1 to i32
    %c0_i32_63 = arith.constant 0 : i32
    %133 = arith.cmpi ne, %132, %c0_i32_63 : i32
    scf.if %133 {
      %cst_80 = arith.constant 0.000000e+00 : f32
      %144 = vector.broadcast %cst_80 : f32 to vector<1x1x8xf32>
      %c0_81 = arith.constant 0 : index
      %c0_82 = arith.constant 0 : index
      %c0_83 = arith.constant 0 : index
      %145 = vector.load %arg9[%c0_81, %c0_82, %c0_83] : memref<1x1x8xf32, #tpu.memory_space<vmem>>, vector<1x1x8xf32>
      tpu.vector_store %arg9[%c0_81, %c0_82, %c0_83], %144 {strides = array<i32>} : memref<1x1x8xf32, #tpu.memory_space<vmem>>, vector<1x1x8xf32>,
      %cst_84 = arith.constant 0.000000e+00 : f32
      %146 = vector.broadcast %cst_84 : f32 to vector<1x1x8xf32>
      %c0_85 = arith.constant 0 : index
      %c0_86 = arith.constant 0 : index
      %c0_87 = arith.constant 0 : index
      %147 = vector.load %arg10[%c0_85, %c0_86, %c0_87] : memref<1x1x8xf32, #tpu.memory_space<vmem>>, vector<1x1x8xf32>
      tpu.vector_store %arg10[%c0_85, %c0_86, %c0_87], %146 {strides = array<i32>} : memref<1x1x8xf32, #tpu.memory_space<vmem>>, vector<1x1x8xf32>,
    } else {
    }
    %c0_64 = arith.constant 0 : index
    %c0_65 = arith.constant 0 : index
    %c0_66 = arith.constant 0 : index
    %134 = vector.load %arg9[%c0_64, %c0_65, %c0_66] : memref<1x1x8xf32, #tpu.memory_space<vmem>>, vector<1x1x8xf32>
    %135 = vector.shape_cast %127 : vector<1x8xf32> to vector<1x1x8xf32>
    %136 = arith.addf %134, %135 : vector<1x1x8xf32>
    %c0_67 = arith.constant 0 : index
    %c0_68 = arith.constant 0 : index
    %c0_69 = arith.constant 0 : index
    %137 = vector.load %arg9[%c0_67, %c0_68, %c0_69] : memref<1x1x8xf32, #tpu.memory_space<vmem>>, vector<1x1x8xf32>
    tpu.vector_store %arg9[%c0_67, %c0_68, %c0_69], %136 {strides = array<i32>} : memref<1x1x8xf32, #tpu.memory_space<vmem>>, vector<1x1x8xf32>,
    %c0_70 = arith.constant 0 : index
    %c0_71 = arith.constant 0 : index
    %c0_72 = arith.constant 0 : index
    %138 = vector.load %arg10[%c0_70, %c0_71, %c0_72] : memref<1x1x8xf32, #tpu.memory_space<vmem>>, vector<1x1x8xf32>
    %139 = vector.shape_cast %130 : vector<1x8xf32> to vector<1x1x8xf32>
    %140 = arith.addf %138, %139 : vector<1x1x8xf32>
    %c0_73 = arith.constant 0 : index
    %c0_74 = arith.constant 0 : index
    %c0_75 = arith.constant 0 : index
    %141 = vector.load %arg10[%c0_73, %c0_74, %c0_75] : memref<1x1x8xf32, #tpu.memory_space<vmem>>, vector<1x1x8xf32>
    tpu.vector_store %arg10[%c0_73, %c0_74, %c0_75], %140 {strides = array<i32>} : memref<1x1x8xf32, #tpu.memory_space<vmem>>, vector<1x1x8xf32>,
    %142 = vector.shape_cast %124 : vector<8x16x8xf32> to vector<1x8x16x8xf32>
    %c0_76 = arith.constant 0 : index
    %c0_77 = arith.constant 0 : index
    %c0_78 = arith.constant 0 : index
    %c0_79 = arith.constant 0 : index
    %143 = vector.load %arg8[%c0_76, %c0_77, %c0_78, %c0_79] : memref<1x8x16x8xf32, #tpu.memory_space<vmem>>, vector<1x8x16x8xf32>
    tpu.vector_store %arg8[%c0_76, %c0_77, %c0_78, %c0_79], %142 {strides = array<i32>} : memref<1x8x16x8xf32, #tpu.memory_space<vmem>>, vector<1x8x16x8xf32>,
    return
  }
  func.func @transform_0(%arg0: i32, %arg1: i32) -> (i32, i32, i32, i32) {
    %c8_i32 = arith.constant 8 : i32
    %0 = arith.muli %arg1, %c8_i32 : i32
    %c1_i32 = arith.constant 1 : i32
    %1 = arith.subi %0, %c1_i32 : i32
    %c0_i32 = arith.constant 0 : i32
    %2 = arith.maxsi %1, %c0_i32 : i32
    %c0_i32_0 = arith.constant 0 : i32
    %c0_i32_1 = arith.constant 0 : i32
    %c0_i32_2 = arith.constant 0 : i32
    return %arg0, %2, %c0_i32_0, %c0_i32_1 : i32, i32, i32, i32
  }
  func.func @transform_1(%arg0: i32, %arg1: i32) -> (i32, i32, i32, i32) {
    %c0_i32 = arith.constant 0 : i32
    %c0_i32_0 = arith.constant 0 : i32
    %c0_i32_1 = arith.constant 0 : i32
    return %arg0, %arg1, %c0_i32, %c0_i32_0 : i32, i32, i32, i32
  }
  func.func @transform_2(%arg0: i32, %arg1: i32) -> (i32, i32, i32, i32) {
    %c8_i32 = arith.constant 8 : i32
    %0 = arith.muli %arg1, %c8_i32 : i32
    %c8_i32_0 = arith.constant 8 : i32
    %1 = arith.addi %0, %c8_i32_0 : i32
    %c15_i32 = arith.constant 15 : i32
    %2 = arith.minsi %1, %c15_i32 : i32
    %c0_i32 = arith.constant 0 : i32
    %c0_i32_1 = arith.constant 0 : i32
    %c0_i32_2 = arith.constant 0 : i32
    return %arg0, %2, %c0_i32, %c0_i32_1 : i32, i32, i32, i32
  }
  func.func @transform_3(%arg0: i32, %arg1: i32) -> (i32, i32, i32) {
    %c0_i32 = arith.constant 0 : i32
    %c0_i32_0 = arith.constant 0 : i32
    %c0_i32_1 = arith.constant 0 : i32
    %c0_i32_2 = arith.constant 0 : i32
    return %c0_i32, %c0_i32_0, %c0_i32_1 : i32, i32, i32
  }
  func.func @transform_4(%arg0: i32, %arg1: i32) -> (i32, i32) {
    %c0_i32 = arith.constant 0 : i32
    %c0_i32_0 = arith.constant 0 : i32
    %c0_i32_1 = arith.constant 0 : i32
    return %c0_i32, %c0_i32_0 : i32, i32
  }
  func.func @transform_5(%arg0: i32, %arg1: i32) -> (i32, i32) {
    %c0_i32 = arith.constant 0 : i32
    %c0_i32_0 = arith.constant 0 : i32
    %c0_i32_1 = arith.constant 0 : i32
    return %c0_i32, %c0_i32_0 : i32, i32
  }
  func.func @transform_6(%arg0: i32, %arg1: i32) -> (i32, i32, i32, i32) {
    %c0_i32 = arith.constant 0 : i32
    %c0_i32_0 = arith.constant 0 : i32
    %c0_i32_1 = arith.constant 0 : i32
    return %arg0, %arg1, %c0_i32, %c0_i32_0 : i32, i32, i32, i32
  }
  func.func @transform_7(%arg0: i32, %arg1: i32) -> (i32, i32, i32) {
    %c0_i32 = arith.constant 0 : i32
    %c0_i32_0 = arith.constant 0 : i32
    %c0_i32_1 = arith.constant 0 : i32
    return %arg0, %c0_i32, %c0_i32_0 : i32, i32, i32
  }
  func.func @transform_8(%arg0: i32, %arg1: i32) -> (i32, i32, i32) {
    %c0_i32 = arith.constant 0 : i32
    %c0_i32_0 = arith.constant 0 : i32
    %c0_i32_1 = arith.constant 0 : i32
    return %arg0, %c0_i32, %c0_i32_0 : i32, i32, i32
  }
}

module attributes {stable_mosaic.version = 11 : i64} {
  func.func @_bn_relu_kernel(%arg0: i32, %arg1: i32, %arg2: memref<1x8x16x8xf32, #tpu.memory_space<vmem>>, %arg3: memref<1x8xf32, #tpu.memory_space<vmem>>, %arg4: memref<1x8xf32, #tpu.memory_space<vmem>>, %arg5: memref<1x8x16x8xf32, #tpu.memory_space<vmem>>) attributes {dimension_semantics = [#tpu.dimension_semantics<parallel>, #tpu.dimension_semantics<parallel>], iteration_bounds = array<i64: 2, 2>, scalar_prefetch = 0 : i64, scratch_operands = 0 : i64, tpu.core_type = #tpu.core_type<tc>, window_params = [{transform_indices = @transform_0, window_bounds = array<i64: 1, 8, 16, 8>}, {pipeline_mode = #tpu.pipeline_mode<synchronous>, transform_indices = @transform_1, window_bounds = array<i64: 1, 8>}, {pipeline_mode = #tpu.pipeline_mode<synchronous>, transform_indices = @transform_2, window_bounds = array<i64: 1, 8>}, {transform_indices = @transform_3, window_bounds = array<i64: 1, 8, 16, 8>}]} {
    %c0 = arith.constant 0 : index
    %c0_0 = arith.constant 0 : index
    %c0_1 = arith.constant 0 : index
    %c0_2 = arith.constant 0 : index
    %0 = vector.load %arg2[%c0, %c0_0, %c0_1, %c0_2] : memref<1x8x16x8xf32, #tpu.memory_space<vmem>>, vector<1x8x16x8xf32>
    %c0_3 = arith.constant 0 : index
    %c0_4 = arith.constant 0 : index
    %1 = vector.load %arg3[%c0_3, %c0_4] : memref<1x8xf32, #tpu.memory_space<vmem>>, vector<1x8xf32>
    %2 = vector.shape_cast %1 : vector<1x8xf32> to vector<1x1x1x8xf32>
    %c0_5 = arith.constant 0 : index
    %c0_6 = arith.constant 0 : index
    %3 = vector.load %arg4[%c0_5, %c0_6] : memref<1x8xf32, #tpu.memory_space<vmem>>, vector<1x8xf32>
    %4 = vector.shape_cast %3 : vector<1x8xf32> to vector<1x1x1x8xf32>
    %5 = vector.broadcast %2 : vector<1x1x1x8xf32> to vector<1x8x16x8xf32>
    %6 = arith.mulf %0, %5 : vector<1x8x16x8xf32>
    %7 = vector.broadcast %4 : vector<1x1x1x8xf32> to vector<1x8x16x8xf32>
    %8 = arith.addf %6, %7 : vector<1x8x16x8xf32>
    %cst = arith.constant 0.000000e+00 : f32
    %9 = vector.broadcast %cst : f32 to vector<1x8x16x8xf32>
    %10 = arith.maximumf %8, %9 : vector<1x8x16x8xf32>
    %c0_7 = arith.constant 0 : index
    %c0_8 = arith.constant 0 : index
    %c0_9 = arith.constant 0 : index
    %c0_10 = arith.constant 0 : index
    %11 = vector.load %arg5[%c0_7, %c0_8, %c0_9, %c0_10] : memref<1x8x16x8xf32, #tpu.memory_space<vmem>>, vector<1x8x16x8xf32>
    tpu.vector_store %arg5[%c0_7, %c0_8, %c0_9, %c0_10], %10 {strides = array<i32>} : memref<1x8x16x8xf32, #tpu.memory_space<vmem>>, vector<1x8x16x8xf32>,
    return
  }
  func.func @transform_0(%arg0: i32, %arg1: i32) -> (i32, i32, i32, i32) {
    %c0_i32 = arith.constant 0 : i32
    %c0_i32_0 = arith.constant 0 : i32
    %c0_i32_1 = arith.constant 0 : i32
    return %arg0, %arg1, %c0_i32, %c0_i32_0 : i32, i32, i32, i32
  }
  func.func @transform_1(%arg0: i32, %arg1: i32) -> (i32, i32) {
    %c0_i32 = arith.constant 0 : i32
    %c0_i32_0 = arith.constant 0 : i32
    %c0_i32_1 = arith.constant 0 : i32
    return %c0_i32, %c0_i32_0 : i32, i32
  }
  func.func @transform_2(%arg0: i32, %arg1: i32) -> (i32, i32) {
    %c0_i32 = arith.constant 0 : i32
    %c0_i32_0 = arith.constant 0 : i32
    %c0_i32_1 = arith.constant 0 : i32
    return %c0_i32, %c0_i32_0 : i32, i32
  }
  func.func @transform_3(%arg0: i32, %arg1: i32) -> (i32, i32, i32, i32) {
    %c0_i32 = arith.constant 0 : i32
    %c0_i32_0 = arith.constant 0 : i32
    %c0_i32_1 = arith.constant 0 : i32
    return %arg0, %arg1, %c0_i32, %c0_i32_0 : i32, i32, i32, i32
  }
}

</mosaic_0001>

<llo_original>
// kernel: double_conv.5
$region0: #{double_conv.5}
  #allocation0 [shape = 'u32[]', space=smem, size = 0x4, offset = 0x4, fixed_abs, tag = 'smem constant byte address 0x4 - core index']
  #allocation1 [shape = 'u32[144,128]{1,0:T(1,128)}', space=vmem, size = 0x12000, scoped, tag = 'internal scratch']
  %s0 = inlined_call_operand.vmem [shape: f32[2,16,16,8], index: 0, kind: input, shape index: {}]
  %s1 = inlined_call_operand.vmem [shape: f32[1,8], index: 1, kind: input, shape index: {}]
  %s2 = inlined_call_operand.vmem [shape: f32[1,8], index: 2, kind: input, shape index: {}]
  %s3 = inlined_call_operand.vmem [shape: f32[2,16,16,8], index: 3, kind: output, shape index: {}]
  %s4 = sld [smem:[#allocation0]]
  $region45: #{double_conv.5} parent=0
    _
  %s6 = ssub.s32 1, %s4
  %s7 = scalar_select 0, %s6, %s4
  loop: start=0, step=1, limit=6
  $region2: #{double_conv.5} parent=0 // loop_pre_header
    _
  $region3: #{double_conv.5} parent=0 // loop_header
    %s9 = sphi 0, %s13
    %p10 = scmp.ge.s32.totalorder %s9, 6
    %s16 = sphi 0, %s28
    %s17 = sphi 0, %s24
    %s18 = sphi 0, %s16
    %s19 = sphi 0, %s17
    %s20 = sphi 0, %s18
    %s21 = sphi 0, %s19
    %s33 = sphi 0, %s35
    %s36 = sphi 0, %s33
    %s37 = sphi 0, %s36
    %s53 = sphi 0, %s37
    %s57 = sphi 0, %s57
    %s59 = sphi 0, %s57
    %s60 = sphi 0, %s59
    %s74 = sphi 0, %s60
    %s78 = sphi 0, %s78
    %s80 = sphi 0, %s78
    %s81 = sphi 0, %s80
    %s95 = sphi 0, %s81
    %s103 = sphi 0, %s105
    %s106 = sphi 0, %s103
    %s107 = sphi 0, %s106
    %s123 = sphi 0, %s107
  $region4: #{double_conv.5} parent=0 // loop_header_branch
    %12 = sbr.rel (%p10) target = $region8
  $region5: #{double_conv.5} parent=0 // loop_body
    %s14 = ssub.s32 %s9, 1
    %s15 = ssub.s32 %s9, 2
    %s22 = sadd.s32 1, %s17
    %p23 = scmp.ge.s32.totalorder %s22, 2
    %s24 = scalar_select %p23, 0, %s22
    %s25 = sadd.s32 1, %s16
    %s26 = scalar_select %p23, %s25, %s16
    %p27 = scmp.ge.s32.totalorder %s26, 2
    %s28 = scalar_select %p27, 0, %s26
    %s29 = ssub.s32 %s16, %s28
    %s30 = ssub.s32 %s17, %s24
    %s31 = sor.u32 %s29, %s30
    %p32 = scmp.eq.s32.totalorder %s31, 0
    %s34 = sadd.s32 %s33, 1
    %s35 = scalar_select %p32, %s33, %s34
    %p38 = pneg %p32
    %p39 = scmp.eq.s32.totalorder %s9, 3
    %p40 = por %p38, %p39
    %p41 = scmp.ne.s32.totalorder %s33, %s36
    %p42 = scmp.eq.s32.totalorder %s9, 0
    %p43 = por %p41, %p42
    %p44 = scmp.ne.s32.totalorder %s33, %s36
    %p45 = scmp.eq.s32.totalorder %s14, 3
    %p46 = por %p44, %p45
    %p47 = scmp.ne.s32.totalorder %s36, %s37
    %p48 = scmp.eq.s32.totalorder %s14, 0
    %p49 = por %p47, %p48
    %p50 = scmp.ne.s32.totalorder %s36, %s37
    %p51 = scmp.eq.s32.totalorder %s15, 3
    %p52 = por %p50, %p51
    %p54 = scmp.ne.s32.totalorder %s37, %s53
    %p55 = scmp.eq.s32.totalorder %s15, 0
    %p56 = por %p54, %p55
    %s58 = sadd.s32 %s57, 1
    %p61 = scmp.eq.s32.totalorder %s9, 3
    %p62 = scmp.ne.s32.totalorder %s57, %s59
    %p63 = scmp.eq.s32.totalorder %s9, 0
    %p64 = por %p62, %p63
    %p65 = scmp.ne.s32.totalorder %s57, %s59
    %p66 = scmp.eq.s32.totalorder %s14, 3
    %p67 = por %p65, %p66
    %p68 = scmp.ne.s32.totalorder %s59, %s60
    %p69 = scmp.eq.s32.totalorder %s14, 0
    %p70 = por %p68, %p69
    %p71 = scmp.ne.s32.totalorder %s59, %s60
    %p72 = scmp.eq.s32.totalorder %s15, 3
    %p73 = por %p71, %p72
    %p75 = scmp.ne.s32.totalorder %s60, %s74
    %p76 = scmp.eq.s32.totalorder %s15, 0
    %p77 = por %p75, %p76
    %s79 = sadd.s32 %s78, 1
    %p82 = scmp.eq.s32.totalorder %s9, 3
    %p83 = scmp.ne.s32.totalorder %s78, %s80
    %p84 = scmp.eq.s32.totalorder %s9, 0
    %p85 = por %p83, %p84
    %p86 = scmp.ne.s32.totalorder %s78, %s80
    %p87 = scmp.eq.s32.totalorder %s14, 3
    %p88 = por %p86, %p87
    %p89 = scmp.ne.s32.totalorder %s80, %s81
    %p90 = scmp.eq.s32.totalorder %s14, 0
    %p91 = por %p89, %p90
    %p92 = scmp.ne.s32.totalorder %s80, %s81
    %p93 = scmp.eq.s32.totalorder %s15, 3
    %p94 = por %p92, %p93
    %p96 = scmp.ne.s32.totalorder %s81, %s95
    %p97 = scmp.eq.s32.totalorder %s15, 0
    %p98 = por %p96, %p97
    %s99 = ssub.s32 %s16, %s28
    %s100 = ssub.s32 %s17, %s24
    %s101 = sor.u32 %s99, %s100
    %p102 = scmp.eq.s32.totalorder %s101, 0
    %s104 = sadd.s32 %s103, 1
    %s105 = scalar_select %p102, %s103, %s104
    %p108 = pneg %p102
    %p109 = scmp.eq.s32.totalorder %s9, 3
    %p110 = por %p108, %p109
    %p111 = scmp.ne.s32.totalorder %s103, %s106
    %p112 = scmp.eq.s32.totalorder %s9, 0
    %p113 = por %p111, %p112
    %p114 = scmp.ne.s32.totalorder %s103, %s106
    %p115 = scmp.eq.s32.totalorder %s14, 3
    %p116 = por %p114, %p115
    %p117 = scmp.ne.s32.totalorder %s106, %s107
    %p118 = scmp.eq.s32.totalorder %s14, 0
    %p119 = por %p117, %p118
    %p120 = scmp.ne.s32.totalorder %s106, %s107
    %p121 = scmp.eq.s32.totalorder %s15, 3
    %p122 = por %p120, %p121
    %p124 = scmp.ne.s32.totalorder %s107, %s123
    %p125 = scmp.eq.s32.totalorder %s15, 0
    %p126 = por %p124, %p125
    %p127 = scmp.le.s32.totalorder 1, %s9
    %p128 = scmp.lt.s32.totalorder %s9, 5
    %p129 = pnand %p127, %p128
    %p130 = pneg %p129
    // Predicated region
    $region9: #{double_conv.5} parent=5 // pred_check
      _
    $region10: #{double_conv.5} parent=5 // pred_check_branch
      %132 = sbr.rel (%p129) target = $region12
    $region11: #{double_conv.5} parent=5 // pred_region
      %s133 = ssub.s32 %s9, 1
      // Predicated region
      $region13: #{double_conv.5} parent=11 // pred_check
        %p134 = pneg %p70
      $region14: #{double_conv.5} parent=11 // pred_check_branch
        %136 = sbr.rel (%p134) target = $region16
      $region15: #{double_conv.5} parent=11 // pred_region
        _
      $region16: #{double_conv.5} parent=11 // pred_fallthru
        _
      // Predicated region
      $region17: #{double_conv.5} parent=11 // pred_check
        %p137 = pneg %p91
      $region18: #{double_conv.5} parent=11 // pred_check_branch
        %139 = sbr.rel (%p137) target = $region20
      $region19: #{double_conv.5} parent=11 // pred_region
        _
      $region20: #{double_conv.5} parent=11 // pred_fallthru
        _
    $region12: #{double_conv.5} parent=5 // pred_fallthru
      _
    %p140 = scmp.lt.s32.totalorder %s9, 4
    // Predicated region
    $region21: #{double_conv.5} parent=5 // pred_check
      %p141 = pneg %p140
    $region22: #{double_conv.5} parent=5 // pred_check_branch
      %143 = sbr.rel (%p141) target = $region24
    $region23: #{double_conv.5} parent=5 // pred_region
      // Predicated region
      $region25: #{double_conv.5} parent=23 // pred_check
        %p144 = pneg %p43
      $region26: #{double_conv.5} parent=23 // pred_check_branch
        %146 = sbr.rel (%p144) target = $region28
      $region27: #{double_conv.5} parent=23 // pred_region
        %s147 = smul.u32 8, %s17
        %p148 = scmp.lt.s32.totalorder %s16, 1
        %s149 = scalar_select %p148, %s16, 1
        %p150 = scmp.lt.s32.totalorder %s147, 15
        %s151 = scalar_select %p150, %s147, 15
        %s152 = smul.addr %s151, 2
        %s153 = smul.addr %s149, 32
        %s154 = sadd.s32 %s152, %s153
        %s155 = smul.addr %s154, 8
        %s156 = scalar_lea.vmem %s0, %s155
        %s157 = smul.u32 8, %s17
      $region28: #{double_conv.5} parent=23 // pred_fallthru
        _
    $region24: #{double_conv.5} parent=5 // pred_fallthru
      _
    %p158 = scmp.le.s32.totalorder 1, %s9
    %p159 = scmp.lt.s32.totalorder %s9, 5
    %p160 = pnand %p158, %p159
    %p161 = pneg %p160
    // Predicated region
    $region29: #{double_conv.5} parent=5 // pred_check
      _
    $region30: #{double_conv.5} parent=5 // pred_check_branch
      %163 = sbr.rel (%p160) target = $region32
    $region31: #{double_conv.5} parent=5 // pred_region
      %s164 = ssub.s32 %s9, 1
      %s165 = smul.u32 8, %s19
      %p166 = scmp.lt.s32.totalorder %s18, 1
      %s167 = scalar_select %p166, %s18, 1
      %p168 = scmp.lt.s32.totalorder %s165, 15
      %s169 = scalar_select %p168, %s165, 15
      %s170 = smul.addr %s169, 2
      %s171 = smul.addr %s167, 32
      %s172 = sadd.s32 %s170, %s171
      %s173 = smul.addr %s172, 8
      %s174 = scalar_lea.vmem %s0, %s173
      %p175 = pneg %p49
      %p176 = pneg %p46
      %p177 = pneg %p70
      %p178 = pneg %p67
      %p179 = pneg %p91
      %p180 = pneg %p88
      %p181 = pneg %p119
      %p182 = pneg %p116
      %s183 = smul.u32 8, %s19
      %p184 = scmp.lt.s32.totalorder %s18, 1
      %s185 = scalar_select %p184, %s18, 1
      %p186 = scmp.lt.s32.totalorder %s183, 15
      %s187 = scalar_select %p186, %s183, 15
      %s188 = smul.addr %s187, 2
      %s189 = smul.addr %s185, 32
      %s190 = sadd.s32 %s188, %s189
      %s191 = smul.addr %s190, 8
      %s192 = scalar_lea.vmem %s3, %s191
      %s193 = smul.u32 8, %s19
      %p194 = scmp.lt.s32.totalorder %s18, 1
      %s195 = scalar_select %p194, %s18, 1
      %p196 = scmp.lt.s32.totalorder %s193, 15
      %s197 = scalar_select %p196, %s193, 15
      %s198 = smul.addr %s197, 2
      %s199 = smul.addr %s195, 32
      %s200 = sadd.s32 %s198, %s199
      %s201 = smul.addr %s200, 8
      %s202 = scalar_lea.vmem %s0, %s201
      %s203 = smul.u32 8, %s19
      %s204 = smul.u32 8, %s19
      %p205 = scmp.lt.s32.totalorder %s18, 1
      %s206 = scalar_select %p205, %s18, 1
      %p207 = scmp.lt.s32.totalorder %s204, 15
      %s208 = scalar_select %p207, %s204, 15
      %s209 = smul.addr %s208, 2
      %s210 = smul.addr %s206, 32
      %s211 = sadd.s32 %s209, %s210
      %s212 = smul.addr %s211, 8
      %s213 = scalar_lea.vmem %s3, %s212
      %s214 = smul.u32 8, %s19
      %v215 = vld [vmem:[%s202] sm:$0xff]
      %v216 = vld [vmem:[%s202 + $0x8] sm:$0xff]
      %v217 = vld [vmem:[%s202 + $0x10] sm:$0xff]
      %v218 = vld [vmem:[%s202 + $0x18] sm:$0xff]
      %v219 = vld [vmem:[%s202 + $0x20] sm:$0xff]
      %v220 = vld [vmem:[%s202 + $0x28] sm:$0xff]
      %v221 = vld [vmem:[%s202 + $0x30] sm:$0xff]
      %v222 = vld [vmem:[%s202 + $0x38] sm:$0xff]
      %v223 = vld [vmem:[%s202 + $0x40] sm:$0xff]
      %v224 = vld [vmem:[%s202 + $0x48] sm:$0xff]
      %v225 = vld [vmem:[%s202 + $0x50] sm:$0xff]
      %v226 = vld [vmem:[%s202 + $0x58] sm:$0xff]
      %v227 = vld [vmem:[%s202 + $0x60] sm:$0xff]
      %v228 = vld [vmem:[%s202 + $0x68] sm:$0xff]
      %v229 = vld [vmem:[%s202 + $0x70] sm:$0xff]
      %v230 = vld [vmem:[%s202 + $0x78] sm:$0xff]
      %v231 = vld [vmem:[%s1] sm:$0x1]
      %v232 = vld [vmem:[%s2] sm:$0x1]
      %v234 = vlaneseq
      %v235 = vshrl.u32 %v234, 7
      %v236 = vsub.s32 0, %v235
      %v237 = vrot.slane %v231, %v236
      %v239 = vmul.f32 %v215, %v237
      %v240 = vmul.f32 %v216, %v237
      %v241 = vmul.f32 %v217, %v237
      %v242 = vmul.f32 %v218, %v237
      %v243 = vmul.f32 %v219, %v237
      %v244 = vmul.f32 %v220, %v237
      %v245 = vmul.f32 %v221, %v237
      %v246 = vmul.f32 %v222, %v237
      %v247 = vmul.f32 %v223, %v237
      %v248 = vmul.f32 %v224, %v237
      %v249 = vmul.f32 %v225, %v237
      %v250 = vmul.f32 %v226, %v237
      %v251 = vmul.f32 %v227, %v237
      %v252 = vmul.f32 %v228, %v237
      %v253 = vmul.f32 %v229, %v237
      %v254 = vmul.f32 %v230, %v237
      %v256 = vlaneseq
      %v257 = vshrl.u32 %v256, 7
      %v258 = vsub.s32 0, %v257
      %v259 = vrot.slane %v232, %v258
      %v261 = vadd.f32 %v239, %v259
      %v262 = vadd.f32 %v240, %v259
      %v263 = vadd.f32 %v241, %v259
      %v264 = vadd.f32 %v242, %v259
      %v265 = vadd.f32 %v243, %v259
      %v266 = vadd.f32 %v244, %v259
      %v267 = vadd.f32 %v245, %v259
      %v268 = vadd.f32 %v246, %v259
      %v269 = vadd.f32 %v247, %v259
      %v270 = vadd.f32 %v248, %v259
      %v271 = vadd.f32 %v249, %v259
      %v272 = vadd.f32 %v250, %v259
      %v273 = vadd.f32 %v251, %v259
      %v274 = vadd.f32 %v252, %v259
      %v275 = vadd.f32 %v253, %v259
      %v276 = vadd.f32 %v254, %v259
      %v277 = vmax.f32 %v261, 0.0
      %v278 = vmax.f32 %v262, 0.0
      %v279 = vmax.f32 %v263, 0.0
      %v280 = vmax.f32 %v264, 0.0
      %v281 = vmax.f32 %v265, 0.0
      %v282 = vmax.f32 %v266, 0.0
      %v283 = vmax.f32 %v267, 0.0
      %v284 = vmax.f32 %v268, 0.0
      %v285 = vmax.f32 %v269, 0.0
      %v286 = vmax.f32 %v270, 0.0
      %v287 = vmax.f32 %v271, 0.0
      %v288 = vmax.f32 %v272, 0.0
      %v289 = vmax.f32 %v273, 0.0
      %v290 = vmax.f32 %v274, 0.0
      %v291 = vmax.f32 %v275, 0.0
      %v292 = vmax.f32 %v276, 0.0
      %vm293 = vcmask 64512
      %294 = vst.msk [vmem:[%s213] sm:$0xff] %vm293, %v277
      %295 = vst.msk [vmem:[%s213 + $0x8] sm:$0xff] %vm293, %v278
      %296 = vst.msk [vmem:[%s213 + $0x10] sm:$0xff] %vm293, %v279
      %297 = vst.msk [vmem:[%s213 + $0x18] sm:$0xff] %vm293, %v280
      %298 = vst.msk [vmem:[%s213 + $0x20] sm:$0xff] %vm293, %v281
      %299 = vst.msk [vmem:[%s213 + $0x28] sm:$0xff] %vm293, %v282
      %300 = vst.msk [vmem:[%s213 + $0x30] sm:$0xff] %vm293, %v283
      %301 = vst.msk [vmem:[%s213 + $0x38] sm:$0xff] %vm293, %v284
      %302 = vst.msk [vmem:[%s213 + $0x40] sm:$0xff] %vm293, %v285
      %303 = vst.msk [vmem:[%s213 + $0x48] sm:$0xff] %vm293, %v286
      %304 = vst.msk [vmem:[%s213 + $0x50] sm:$0xff] %vm293, %v287
      %305 = vst.msk [vmem:[%s213 + $0x58] sm:$0xff] %vm293, %v288
      %306 = vst.msk [vmem:[%s213 + $0x60] sm:$0xff] %vm293, %v289
      %307 = vst.msk [vmem:[%s213 + $0x68] sm:$0xff] %vm293, %v290
      %308 = vst.msk [vmem:[%s213 + $0x70] sm:$0xff] %vm293, %v291
      %309 = vst.msk [vmem:[%s213 + $0x78] sm:$0xff] %vm293, %v292
      %s310 = smul.u32 8, %s19
      %p311 = scmp.lt.s32.totalorder %s18, 1
      %s312 = scalar_select %p311, %s18, 1
      %p313 = scmp.lt.s32.totalorder %s310, 15
      %s314 = scalar_select %p313, %s310, 15
      %s315 = smul.addr %s314, 2
      %s316 = smul.addr %s312, 32
      %s317 = sadd.s32 %s315, %s316
      %s318 = smul.addr %s317, 8
      %s319 = scalar_lea.vmem %s3, %s318
      // Predicated region
      $region33: #{double_conv.5} parent=31 // pred_check
        %p320 = pneg %p116
      $region34: #{double_conv.5} parent=31 // pred_check_branch
        %322 = sbr.rel (%p320) target = $region36
      $region35: #{double_conv.5} parent=31 // pred_region
        %s323 = smul.u32 8, %s19
      $region36: #{double_conv.5} parent=31 // pred_fallthru
        _
    $region32: #{double_conv.5} parent=5 // pred_fallthru
      _
    %p324 = scmp.le.s32.totalorder 2, %s9
    // Predicated region
    $region37: #{double_conv.5} parent=5 // pred_check
      %p325 = pneg %p324
    $region38: #{double_conv.5} parent=5 // pred_check_branch
      %327 = sbr.rel (%p325) target = $region40
    $region39: #{double_conv.5} parent=5 // pred_region
      %s328 = ssub.s32 %s9, 2
      // Predicated region
      $region41: #{double_conv.5} parent=39 // pred_check
        %p329 = pneg %p122
      $region42: #{double_conv.5} parent=39 // pred_check_branch
        %331 = sbr.rel (%p329) target = $region44
      $region43: #{double_conv.5} parent=39 // pred_region
        %s332 = smul.u32 8, %s21
        %p333 = scmp.lt.s32.totalorder %s20, 1
        %s334 = scalar_select %p333, %s20, 1
        %p335 = scmp.lt.s32.totalorder %s332, 15
        %s336 = scalar_select %p335, %s332, 15
        %s337 = smul.addr %s336, 2
        %s338 = smul.addr %s334, 32
        %s339 = sadd.s32 %s337, %s338
        %s340 = smul.addr %s339, 8
        %s341 = scalar_lea.vmem %s3, %s340
      $region44: #{double_conv.5} parent=39 // pred_fallthru
        _
    $region40: #{double_conv.5} parent=5 // pred_fallthru
      _
  $region6: #{double_conv.5} parent=0 // loop_footer
    %s13 = sadd.s32 1, %s9
  $region7: #{double_conv.5} parent=0 // loop_footer_branch
    %8 = sbr.rel target = $region3
  $region8: #{double_conv.5} parent=0 // loop_exit
    _

// kernel: double_conv.3
$region0: #{double_conv.3}
  #allocation0 [shape = 'u32[]', space=smem, size = 0x4, offset = 0x4, fixed_abs, tag = 'smem constant byte address 0x4 - core index']
  #allocation1 [shape = 'u32[144,128]{1,0:T(1,128)}', space=vmem, size = 0x12000, scoped, tag = 'internal scratch']
  #allocation2 [shape = 'f32[10,26,4]{2,1,0:T(8,128)}', space=vmem, size = 0x28000, scoped, tag = 'scratch operand']
  %s0 = inlined_call_operand.vmem [shape: f32[2,16,26,4], index: 0, kind: input, shape index: {}, may-alias: {0,1,2}]
  %s1 = inlined_call_operand.vmem [shape: f32[2,16,26,4], index: 1, kind: input, shape index: {}, may-alias: {0,1,2}]
  %s2 = inlined_call_operand.vmem [shape: f32[2,16,26,4], index: 2, kind: input, shape index: {}, may-alias: {0,1,2}]
  %s3 = inlined_call_operand.vmem [shape: bf16[9,4,8], index: 3, kind: input, shape index: {}]
  %s4 = inlined_call_operand.vmem [shape: f32[1,4], index: 4, kind: input, shape index: {}]
  %s5 = inlined_call_operand.vmem [shape: f32[1,4], index: 5, kind: input, shape index: {}]
  %s6 = inlined_call_operand.vmem [shape: f32[2,16,24,8], index: 6, kind: output, shape index: {0}]
  %s7 = inlined_call_operand.vmem [shape: f32[2,1,8], index: 7, kind: output, shape index: {1}]
  %s8 = inlined_call_operand.vmem [shape: f32[2,1,8], index: 8, kind: output, shape index: {2}]
  %9 = xla_tuple %s6, %s7, %s8
  %s10 = sld [smem:[#allocation0]]
  $region77: #{double_conv.3} parent=0
    _
  %s12 = ssub.s32 1, %s10
  %s13 = scalar_select 0, %s12, %s10
  loop: start=0, step=1, limit=6
  $region2: #{double_conv.3} parent=0 // loop_pre_header
    _
  $region3: #{double_conv.3} parent=0 // loop_header
    %s15 = sphi 0, %s19
    %p16 = scmp.ge.s32.totalorder %s15, 6
    %s22 = sphi 0, %s34
    %s23 = sphi 0, %s30
    %s24 = sphi 0, %s22
    %s25 = sphi 0, %s23
    %s26 = sphi 0, %s24
    %s27 = sphi 0, %s25
    %s47 = sphi 0, %s49
    %s50 = sphi 0, %s47
    %s51 = sphi 0, %s50
    %s67 = sphi 0, %s51
    %s75 = sphi 0, %s77
    %s78 = sphi 0, %s75
    %s79 = sphi 0, %s78
    %s95 = sphi 0, %s79
    %s111 = sphi 0, %s113
    %s114 = sphi 0, %s111
    %s115 = sphi 0, %s114
    %s131 = sphi 0, %s115
    %s135 = sphi 0, %s135
    %s137 = sphi 0, %s135
    %s138 = sphi 0, %s137
    %s152 = sphi 0, %s138
    %s156 = sphi 0, %s156
    %s158 = sphi 0, %s156
    %s159 = sphi 0, %s158
    %s173 = sphi 0, %s159
    %s177 = sphi 0, %s177
    %s179 = sphi 0, %s177
    %s180 = sphi 0, %s179
    %s194 = sphi 0, %s180
    %s202 = sphi 0, %s204
    %s205 = sphi 0, %s202
    %s206 = sphi 0, %s205
    %s222 = sphi 0, %s206
    %s228 = sphi 0, %s230
    %s231 = sphi 0, %s228
    %s232 = sphi 0, %s231
    %s248 = sphi 0, %s232
    %s254 = sphi 0, %s256
    %s257 = sphi 0, %s254
    %s258 = sphi 0, %s257
    %s274 = sphi 0, %s258
  $region4: #{double_conv.3} parent=0 // loop_header_branch
    %18 = sbr.rel (%p16) target = $region8
  $region5: #{double_conv.3} parent=0 // loop_body
    %s20 = ssub.s32 %s15, 1
    %s21 = ssub.s32 %s15, 2
    %s28 = sadd.s32 1, %s23
    %p29 = scmp.ge.s32.totalorder %s28, 2
    %s30 = scalar_select %p29, 0, %s28
    %s31 = sadd.s32 1, %s22
    %s32 = scalar_select %p29, %s31, %s22
    %p33 = scmp.ge.s32.totalorder %s32, 2
    %s34 = scalar_select %p33, 0, %s32
    %s35 = smul.u32 %s23, 8
    %s36 = ssub.s32 %s35, 1
    %p37 = scmp.gt.s32.totalorder %s36, 0
    %s38 = scalar_select %p37, %s36, 0
    %s39 = smul.u32 %s30, 8
    %s40 = ssub.s32 %s39, 1
    %p41 = scmp.gt.s32.totalorder %s40, 0
    %s42 = scalar_select %p41, %s40, 0
    %s43 = ssub.s32 %s22, %s34
    %s44 = ssub.s32 %s38, %s42
    %s45 = sor.u32 %s43, %s44
    %p46 = scmp.eq.s32.totalorder %s45, 0
    %s48 = sadd.s32 %s47, 1
    %s49 = scalar_select %p46, %s47, %s48
    %p52 = pneg %p46
    %p53 = scmp.eq.s32.totalorder %s15, 3
    %p54 = por %p52, %p53
    %p55 = scmp.ne.s32.totalorder %s47, %s50
    %p56 = scmp.eq.s32.totalorder %s15, 0
    %p57 = por %p55, %p56
    %p58 = scmp.ne.s32.totalorder %s47, %s50
    %p59 = scmp.eq.s32.totalorder %s20, 3
    %p60 = por %p58, %p59
    %p61 = scmp.ne.s32.totalorder %s50, %s51
    %p62 = scmp.eq.s32.totalorder %s20, 0
    %p63 = por %p61, %p62
    %p64 = scmp.ne.s32.totalorder %s50, %s51
    %p65 = scmp.eq.s32.totalorder %s21, 3
    %p66 = por %p64, %p65
    %p68 = scmp.ne.s32.totalorder %s51, %s67
    %p69 = scmp.eq.s32.totalorder %s21, 0
    %p70 = por %p68, %p69
    %s71 = ssub.s32 %s22, %s34
    %s72 = ssub.s32 %s23, %s30
    %s73 = sor.u32 %s71, %s72
    %p74 = scmp.eq.s32.totalorder %s73, 0
    %s76 = sadd.s32 %s75, 1
    %s77 = scalar_select %p74, %s75, %s76
    %p80 = pneg %p74
    %p81 = scmp.eq.s32.totalorder %s15, 3
    %p82 = por %p80, %p81
    %p83 = scmp.ne.s32.totalorder %s75, %s78
    %p84 = scmp.eq.s32.totalorder %s15, 0
    %p85 = por %p83, %p84
    %p86 = scmp.ne.s32.totalorder %s75, %s78
    %p87 = scmp.eq.s32.totalorder %s20, 3
    %p88 = por %p86, %p87
    %p89 = scmp.ne.s32.totalorder %s78, %s79
    %p90 = scmp.eq.s32.totalorder %s20, 0
    %p91 = por %p89, %p90
    %p92 = scmp.ne.s32.totalorder %s78, %s79
    %p93 = scmp.eq.s32.totalorder %s21, 3
    %p94 = por %p92, %p93
    %p96 = scmp.ne.s32.totalorder %s79, %s95
    %p97 = scmp.eq.s32.totalorder %s21, 0
    %p98 = por %p96, %p97
    %s99 = smul.u32 %s23, 8
    %s100 = sadd.s32 %s99, 8
    %p101 = scmp.lt.s32.totalorder %s100, 15
    %s102 = scalar_select %p101, %s100, 15
    %s103 = smul.u32 %s30, 8
    %s104 = sadd.s32 %s103, 8
    %p105 = scmp.lt.s32.totalorder %s104, 15
    %s106 = scalar_select %p105, %s104, 15
    %s107 = ssub.s32 %s22, %s34
    %s108 = ssub.s32 %s102, %s106
    %s109 = sor.u32 %s107, %s108
    %p110 = scmp.eq.s32.totalorder %s109, 0
    %s112 = sadd.s32 %s111, 1
    %s113 = scalar_select %p110, %s111, %s112
    %p116 = pneg %p110
    %p117 = scmp.eq.s32.totalorder %s15, 3
    %p118 = por %p116, %p117
    %p119 = scmp.ne.s32.totalorder %s111, %s114
    %p120 = scmp.eq.s32.totalorder %s15, 0
    %p121 = por %p119, %p120
    %p122 = scmp.ne.s32.totalorder %s111, %s114
    %p123 = scmp.eq.s32.totalorder %s20, 3
    %p124 = por %p122, %p123
    %p125 = scmp.ne.s32.totalorder %s114, %s115
    %p126 = scmp.eq.s32.totalorder %s20, 0
    %p127 = por %p125, %p126
    %p128 = scmp.ne.s32.totalorder %s114, %s115
    %p129 = scmp.eq.s32.totalorder %s21, 3
    %p130 = por %p128, %p129
    %p132 = scmp.ne.s32.totalorder %s115, %s131
    %p133 = scmp.eq.s32.totalorder %s21, 0
    %p134 = por %p132, %p133
    %s136 = sadd.s32 %s135, 1
    %p139 = scmp.eq.s32.totalorder %s15, 3
    %p140 = scmp.ne.s32.totalorder %s135, %s137
    %p141 = scmp.eq.s32.totalorder %s15, 0
    %p142 = por %p140, %p141
    %p143 = scmp.ne.s32.totalorder %s135, %s137
    %p144 = scmp.eq.s32.totalorder %s20, 3
    %p145 = por %p143, %p144
    %p146 = scmp.ne.s32.totalorder %s137, %s138
    %p147 = scmp.eq.s32.totalorder %s20, 0
    %p148 = por %p146, %p147
    %p149 = scmp.ne.s32.totalorder %s137, %s138
    %p150 = scmp.eq.s32.totalorder %s21, 3
    %p151 = por %p149, %p150
    %p153 = scmp.ne.s32.totalorder %s138, %s152
    %p154 = scmp.eq.s32.totalorder %s21, 0
    %p155 = por %p153, %p154
    %s157 = sadd.s32 %s156, 1
    %p160 = scmp.eq.s32.totalorder %s15, 3
    %p161 = scmp.ne.s32.totalorder %s156, %s158
    %p162 = scmp.eq.s32.totalorder %s15, 0
    %p163 = por %p161, %p162
    %p164 = scmp.ne.s32.totalorder %s156, %s158
    %p165 = scmp.eq.s32.totalorder %s20, 3
    %p166 = por %p164, %p165
    %p167 = scmp.ne.s32.totalorder %s158, %s159
    %p168 = scmp.eq.s32.totalorder %s20, 0
    %p169 = por %p167, %p168
    %p170 = scmp.ne.s32.totalorder %s158, %s159
    %p171 = scmp.eq.s32.totalorder %s21, 3
    %p172 = por %p170, %p171
    %p174 = scmp.ne.s32.totalorder %s159, %s173
    %p175 = scmp.eq.s32.totalorder %s21, 0
    %p176 = por %p174, %p175
    %s178 = sadd.s32 %s177, 1
    %p181 = scmp.eq.s32.totalorder %s15, 3
    %p182 = scmp.ne.s32.totalorder %s177, %s179
    %p183 = scmp.eq.s32.totalorder %s15, 0
    %p184 = por %p182, %p183
    %p185 = scmp.ne.s32.totalorder %s177, %s179
    %p186 = scmp.eq.s32.totalorder %s20, 3
    %p187 = por %p185, %p186
    %p188 = scmp.ne.s32.totalorder %s179, %s180
    %p189 = scmp.eq.s32.totalorder %s20, 0
    %p190 = por %p188, %p189
    %p191 = scmp.ne.s32.totalorder %s179, %s180
    %p192 = scmp.eq.s32.totalorder %s21, 3
    %p193 = por %p191, %p192
    %p195 = scmp.ne.s32.totalorder %s180, %s194
    %p196 = scmp.eq.s32.totalorder %s21, 0
    %p197 = por %p195, %p196
    %s198 = ssub.s32 %s22, %s34
    %s199 = ssub.s32 %s23, %s30
    %s200 = sor.u32 %s198, %s199
    %p201 = scmp.eq.s32.totalorder %s200, 0
    %s203 = sadd.s32 %s202, 1
    %s204 = scalar_select %p201, %s202, %s203
    %p207 = pneg %p201
    %p208 = scmp.eq.s32.totalorder %s15, 3
    %p209 = por %p207, %p208
    %p210 = scmp.ne.s32.totalorder %s202, %s205
    %p211 = scmp.eq.s32.totalorder %s15, 0
    %p212 = por %p210, %p211
    %p213 = scmp.ne.s32.totalorder %s202, %s205
    %p214 = scmp.eq.s32.totalorder %s20, 3
    %p215 = por %p213, %p214
    %p216 = scmp.ne.s32.totalorder %s205, %s206
    %p217 = scmp.eq.s32.totalorder %s20, 0
    %p218 = por %p216, %p217
    %p219 = scmp.ne.s32.totalorder %s205, %s206
    %p220 = scmp.eq.s32.totalorder %s21, 3
    %p221 = por %p219, %p220
    %p223 = scmp.ne.s32.totalorder %s206, %s222
    %p224 = scmp.eq.s32.totalorder %s21, 0
    %p225 = por %p223, %p224
    %s226 = ssub.s32 %s22, %s34
    %p227 = scmp.eq.s32.totalorder %s226, 0
    %s229 = sadd.s32 %s228, 1
    %s230 = scalar_select %p227, %s228, %s229
    %p233 = pneg %p227
    %p234 = scmp.eq.s32.totalorder %s15, 3
    %p235 = por %p233, %p234
    %p236 = scmp.ne.s32.totalorder %s228, %s231
    %p237 = scmp.eq.s32.totalorder %s15, 0
    %p238 = por %p236, %p237
    %p239 = scmp.ne.s32.totalorder %s228, %s231
    %p240 = scmp.eq.s32.totalorder %s20, 3
    %p241 = por %p239, %p240
    %p242 = scmp.ne.s32.totalorder %s231, %s232
    %p243 = scmp.eq.s32.totalorder %s20, 0
    %p244 = por %p242, %p243
    %p245 = scmp.ne.s32.totalorder %s231, %s232
    %p246 = scmp.eq.s32.totalorder %s21, 3
    %p247 = por %p245, %p246
    %p249 = scmp.ne.s32.totalorder %s232, %s248
    %p250 = scmp.eq.s32.totalorder %s21, 0
    %p251 = por %p249, %p250
    %s252 = ssub.s32 %s22, %s34
    %p253 = scmp.eq.s32.totalorder %s252, 0
    %s255 = sadd.s32 %s254, 1
    %s256 = scalar_select %p253, %s254, %s255
    %p259 = pneg %p253
    %p260 = scmp.eq.s32.totalorder %s15, 3
    %p261 = por %p259, %p260
    %p262 = scmp.ne.s32.totalorder %s254, %s257
    %p263 = scmp.eq.s32.totalorder %s15, 0
    %p264 = por %p262, %p263
    %p265 = scmp.ne.s32.totalorder %s254, %s257
    %p266 = scmp.eq.s32.totalorder %s20, 3
    %p267 = por %p265, %p266
    %p268 = scmp.ne.s32.totalorder %s257, %s258
    %p269 = scmp.eq.s32.totalorder %s20, 0
    %p270 = por %p268, %p269
    %p271 = scmp.ne.s32.totalorder %s257, %s258
    %p272 = scmp.eq.s32.totalorder %s21, 3
    %p273 = por %p271, %p272
    %p275 = scmp.ne.s32.totalorder %s258, %s274
    %p276 = scmp.eq.s32.totalorder %s21, 0
    %p277 = por %p275, %p276
    %p278 = scmp.le.s32.totalorder 1, %s15
    %p279 = scmp.lt.s32.totalorder %s15, 5
    %p280 = pnand %p278, %p279
    %p281 = pneg %p280
    // Predicated region
    $region9: #{double_conv.3} parent=5 // pred_check
      _
    $region10: #{double_conv.3} parent=5 // pred_check_branch
      %283 = sbr.rel (%p280) target = $region12
    $region11: #{double_conv.3} parent=5 // pred_region
      %s284 = ssub.s32 %s15, 1
      // Predicated region
      $region13: #{double_conv.3} parent=11 // pred_check
        %p285 = pneg %p148
      $region14: #{double_conv.3} parent=11 // pred_check_branch
        %287 = sbr.rel (%p285) target = $region16
      $region15: #{double_conv.3} parent=11 // pred_region
        _
      $region16: #{double_conv.3} parent=11 // pred_fallthru
        _
      // Predicated region
      $region17: #{double_conv.3} parent=11 // pred_check
        %p288 = pneg %p169
      $region18: #{double_conv.3} parent=11 // pred_check_branch
        %290 = sbr.rel (%p288) target = $region20
      $region19: #{double_conv.3} parent=11 // pred_region
        _
      $region20: #{double_conv.3} parent=11 // pred_fallthru
        _
      // Predicated region
      $region21: #{double_conv.3} parent=11 // pred_check
        %p291 = pneg %p190
      $region22: #{double_conv.3} parent=11 // pred_check_branch
        %293 = sbr.rel (%p291) target = $region24
      $region23: #{double_conv.3} parent=11 // pred_region
        _
      $region24: #{double_conv.3} parent=11 // pred_fallthru
        _
    $region12: #{double_conv.3} parent=5 // pred_fallthru
      _
    %p294 = scmp.lt.s32.totalorder %s15, 4
    // Predicated region
    $region25: #{double_conv.3} parent=5 // pred_check
      %p295 = pneg %p294
    $region26: #{double_conv.3} parent=5 // pred_check_branch
      %297 = sbr.rel (%p295) target = $region28
    $region27: #{double_conv.3} parent=5 // pred_region
      // Predicated region
      $region29: #{double_conv.3} parent=27 // pred_check
        %p298 = pneg %p57
      $region30: #{double_conv.3} parent=27 // pred_check_branch
        %300 = sbr.rel (%p298) target = $region32
      $region31: #{double_conv.3} parent=27 // pred_region
        %s301 = smul.u32 %s23, 8
        %s302 = ssub.s32 %s301, 1
        %p303 = scmp.gt.s32.totalorder %s302, 0
        %s304 = scalar_select %p303, %s302, 0
        %p305 = scmp.lt.s32.totalorder %s22, 1
        %s306 = scalar_select %p305, %s22, 1
        %p307 = scmp.lt.s32.totalorder %s304, 15
        %s308 = scalar_select %p307, %s304, 15
        %s309 = smul.addr %s308, 4
        %s310 = smul.addr %s306, 64
        %s311 = sadd.s32 %s309, %s310
        %s312 = smul.addr %s311, 8
        %s313 = scalar_lea.vmem %s0, %s312
        %s314 = smul.u32 %s23, 8
        %s315 = ssub.s32 %s314, 1
        %p316 = scmp.gt.s32.totalorder %s315, 0
        %s317 = scalar_select %p316, %s315, 0
      $region32: #{double_conv.3} parent=27 // pred_fallthru
        _
      // Predicated region
      $region33: #{double_conv.3} parent=27 // pred_check
        %p318 = pneg %p85
      $region34: #{double_conv.3} parent=27 // pred_check_branch
        %320 = sbr.rel (%p318) target = $region36
      $region35: #{double_conv.3} parent=27 // pred_region
        %s321 = smul.u32 8, %s23
        %p322 = scmp.lt.s32.totalorder %s22, 1
        %s323 = scalar_select %p322, %s22, 1
        %p324 = scmp.lt.s32.totalorder %s321, 15
        %s325 = scalar_select %p324, %s321, 15
        %s326 = smul.addr %s325, 4
        %s327 = smul.addr %s323, 64
        %s328 = sadd.s32 %s326, %s327
        %s329 = smul.addr %s328, 8
        %s330 = scalar_lea.vmem %s1, %s329
        %s331 = smul.u32 8, %s23
      $region36: #{double_conv.3} parent=27 // pred_fallthru
        _
      // Predicated region
      $region37: #{double_conv.3} parent=27 // pred_check
        %p332 = pneg %p121
      $region38: #{double_conv.3} parent=27 // pred_check_branch
        %334 = sbr.rel (%p332) target = $region40
      $region39: #{double_conv.3} parent=27 // pred_region
        %s335 = smul.u32 %s23, 8
        %s336 = sadd.s32 %s335, 8
        %p337 = scmp.lt.s32.totalorder %s336, 15
        %s338 = scalar_select %p337, %s336, 15
        %p339 = scmp.lt.s32.totalorder %s22, 1
        %s340 = scalar_select %p339, %s22, 1
        %p341 = scmp.lt.s32.totalorder %s338, 15
        %s342 = scalar_select %p341, %s338, 15
        %s343 = smul.addr %s342, 4
        %s344 = smul.addr %s340, 64
        %s345 = sadd.s32 %s343, %s344
        %s346 = smul.addr %s345, 8
        %s347 = scalar_lea.vmem %s2, %s346
        %s348 = smul.u32 %s23, 8
        %s349 = sadd.s32 %s348, 8
        %p350 = scmp.lt.s32.totalorder %s349, 15
        %s351 = scalar_select %p350, %s349, 15
      $region40: #{double_conv.3} parent=27 // pred_fallthru
        _
    $region28: #{double_conv.3} parent=5 // pred_fallthru
      _
    %p352 = scmp.le.s32.totalorder 1, %s15
    %p353 = scmp.lt.s32.totalorder %s15, 5
    %p354 = pnand %p352, %p353
    %p355 = pneg %p354
    // Predicated region
    $region41: #{double_conv.3} parent=5 // pred_check
      _
    $region42: #{double_conv.3} parent=5 // pred_check_branch
      %357 = sbr.rel (%p354) target = $region44
    $region43: #{double_conv.3} parent=5 // pred_region
      %s358 = ssub.s32 %s15, 1
      %s359 = smul.u32 %s25, 8
      %s360 = ssub.s32 %s359, 1
      %p361 = scmp.gt.s32.totalorder %s360, 0
      %s362 = scalar_select %p361, %s360, 0
      %p363 = scmp.lt.s32.totalorder %s24, 1
      %s364 = scalar_select %p363, %s24, 1
      %p365 = scmp.lt.s32.totalorder %s362, 15
      %s366 = scalar_select %p365, %s362, 15
      %s367 = smul.addr %s366, 4
      %s368 = smul.addr %s364, 64
      %s369 = sadd.s32 %s367, %s368
      %s370 = smul.addr %s369, 8
      %s371 = scalar_lea.vmem %s0, %s370
      %p372 = pneg %p63
      %p373 = pneg %p60
      %s374 = smul.u32 8, %s25
      %p375 = scmp.lt.s32.totalorder %s24, 1
      %s376 = scalar_select %p375, %s24, 1
      %p377 = scmp.lt.s32.totalorder %s374, 15
      %s378 = scalar_select %p377, %s374, 15
      %s379 = smul.addr %s378, 4
      %s380 = smul.addr %s376, 64
      %s381 = sadd.s32 %s379, %s380
      %s382 = smul.addr %s381, 8
      %s383 = scalar_lea.vmem %s1, %s382
      %p384 = pneg %p91
      %p385 = pneg %p88
      %s386 = smul.u32 %s25, 8
      %s387 = sadd.s32 %s386, 8
      %p388 = scmp.lt.s32.totalorder %s387, 15
      %s389 = scalar_select %p388, %s387, 15
      %p390 = scmp.lt.s32.totalorder %s24, 1
      %s391 = scalar_select %p390, %s24, 1
      %p392 = scmp.lt.s32.totalorder %s389, 15
      %s393 = scalar_select %p392, %s389, 15
      %s394 = smul.addr %s393, 4
      %s395 = smul.addr %s391, 64
      %s396 = sadd.s32 %s394, %s395
      %s397 = smul.addr %s396, 8
      %s398 = scalar_lea.vmem %s2, %s397
      %p399 = pneg %p127
      %p400 = pneg %p124
      %p401 = pneg %p148
      %p402 = pneg %p145
      %p403 = pneg %p169
      %p404 = pneg %p166
      %p405 = pneg %p190
      %p406 = pneg %p187
      %p407 = pneg %p218
      %p408 = pneg %p215
      %s409 = smul.u32 8, %s25
      %p410 = scmp.lt.s32.totalorder %s24, 1
      %s411 = scalar_select %p410, %s24, 1
      %p412 = scmp.lt.s32.totalorder %s409, 15
      %s413 = scalar_select %p412, %s409, 15
      %s414 = smul.addr %s413, 3
      %s415 = smul.addr %s411, 48
      %s416 = sadd.s32 %s414, %s415
      %s417 = smul.addr %s416, 8
      %s418 = scalar_lea.vmem %s6, %s417
      %p419 = pneg %p244
      %p420 = pneg %p241
      %p421 = scmp.lt.s32.totalorder %s24, 1
      %s422 = scalar_select %p421, %s24, 1
      %s423 = scalar_lea.vmem %s7, %s422
      %p424 = pneg %p270
      %p425 = pneg %p267
      %p426 = scmp.lt.s32.totalorder %s24, 1
      %s427 = scalar_select %p426, %s24, 1
      %s428 = scalar_lea.vmem %s8, %s427
      %s429 = smul.u32 %s25, 8
      %s430 = ssub.s32 %s429, 1
      %p431 = scmp.gt.s32.totalorder %s430, 0
      %s432 = scalar_select %p431, %s430, 0
      %p433 = scmp.lt.s32.totalorder %s24, 1
      %s434 = scalar_select %p433, %s24, 1
      %p435 = scmp.lt.s32.totalorder %s432, 15
      %s436 = scalar_select %p435, %s432, 15
      %s437 = smul.addr %s436, 4
      %s438 = smul.addr %s434, 64
      %s439 = sadd.s32 %s437, %s438
      %s440 = smul.addr %s439, 8
      %s441 = scalar_lea.vmem %s0, %s440
      %s442 = smul.u32 %s25, 8
      %s443 = ssub.s32 %s442, 1
      %p444 = scmp.gt.s32.totalorder %s443, 0
      %s445 = scalar_select %p444, %s443, 0
      %s446 = smul.u32 8, %s25
      %p447 = scmp.lt.s32.totalorder %s24, 1
      %s448 = scalar_select %p447, %s24, 1
      %p449 = scmp.lt.s32.totalorder %s446, 15
      %s450 = scalar_select %p449, %s446, 15
      %s451 = smul.addr %s450, 4
      %s452 = smul.addr %s448, 64
      %s453 = sadd.s32 %s451, %s452
      %s454 = smul.addr %s453, 8
      %s455 = scalar_lea.vmem %s1, %s454
      %s456 = smul.u32 8, %s25
      %s457 = smul.u32 %s25, 8
      %s458 = sadd.s32 %s457, 8
      %p459 = scmp.lt.s32.totalorder %s458, 15
      %s460 = scalar_select %p459, %s458, 15
      %p461 = scmp.lt.s32.totalorder %s24, 1
      %s462 = scalar_select %p461, %s24, 1
      %p463 = scmp.lt.s32.totalorder %s460, 15
      %s464 = scalar_select %p463, %s460, 15
      %s465 = smul.addr %s464, 4
      %s466 = smul.addr %s462, 64
      %s467 = sadd.s32 %s465, %s466
      %s468 = smul.addr %s467, 8
      %s469 = scalar_lea.vmem %s2, %s468
      %s470 = smul.u32 %s25, 8
      %s471 = sadd.s32 %s470, 8
      %p472 = scmp.lt.s32.totalorder %s471, 15
      %s473 = scalar_select %p472, %s471, 15
      %s474 = smul.u32 8, %s25
      %p475 = scmp.lt.s32.totalorder %s24, 1
      %s476 = scalar_select %p475, %s24, 1
      %p477 = scmp.lt.s32.totalorder %s474, 15
      %s478 = scalar_select %p477, %s474, 15
      %s479 = smul.addr %s478, 3
      %s480 = smul.addr %s476, 48
      %s481 = sadd.s32 %s479, %s480
      %s482 = smul.addr %s481, 8
      %s483 = scalar_lea.vmem %s6, %s482
      %s484 = smul.u32 8, %s25
      %p485 = scmp.lt.s32.totalorder %s24, 1
      %s486 = scalar_select %p485, %s24, 1
      %s487 = scalar_lea.vmem %s7, %s486
      %p488 = scmp.lt.s32.totalorder %s24, 1
      %s489 = scalar_select %p488, %s24, 1
      %s490 = scalar_lea.vmem %s8, %s489
      %v492 = vld [vmem:[%s441] sm:$0xff]
      %v493 = vld [vmem:[%s441 + $0x8] sm:$0xff]
      %v494 = vld [vmem:[%s441 + $0x10] sm:$0xff]
      %v495 = vld [vmem:[%s441 + $0x18] sm:$0x3]
      %p496 = scmp.gt.s32.totalorder %s25, 0
      %s497 = scalar_select %p496, 1, 0
      %s498 = scvt.s32.f32 %s497
      %v499 = vstv %s498
      %v500 = vmul.f32 %v492, %v499
      %v501 = vmul.f32 %v493, %v499
      %v502 = vmul.f32 %v494, %v499
      %v503 = vmul.f32 %v495, %v499
      %v504 = vld [vmem:[%s469] sm:$0xff]
      %v505 = vld [vmem:[%s469 + $0x8] sm:$0xff]
      %v506 = vld [vmem:[%s469 + $0x10] sm:$0xff]
      %v507 = vld [vmem:[%s469 + $0x18] sm:$0x3]
      %p508 = scmp.lt.s32.totalorder %s25, 1
      %s509 = scalar_select %p508, 1, 0
      %s510 = scvt.s32.f32 %s509
      %v511 = vstv %s510
      %v512 = vmul.f32 %v504, %v511
      %v513 = vmul.f32 %v505, %v511
      %v514 = vmul.f32 %v506, %v511
      %v515 = vmul.f32 %v507, %v511
      %vm516 = vcmask 31744
      %517 = vst.msk [vmem:[#allocation2] sm:$0xff] %vm516, %v500
      %518 = vst.msk [vmem:[#allocation2 + $0x8] sm:$0xff] %vm516, %v501
      %519 = vst.msk [vmem:[#allocation2 + $0x10] sm:$0xff] %vm516, %v502
      %vm520 = vcmask 25600
      %521 = vst.msk [vmem:[#allocation2 + $0x18] sm:$0x3] %vm520, %v503
      %v522 = vld [vmem:[%s455] sm:$0xff]
      %v523 = vld [vmem:[%s455 + $0x8] sm:$0xff]
      %v524 = vld [vmem:[%s455 + $0x10] sm:$0xff]
      %v525 = vld [vmem:[%s455 + $0x18] sm:$0x3]
      %v526 = vld [vmem:[%s455 + $0x20] sm:$0xff]
      %v527 = vld [vmem:[%s455 + $0x28] sm:$0xff]
      %v528 = vld [vmem:[%s455 + $0x30] sm:$0xff]
      %v529 = vld [vmem:[%s455 + $0x38] sm:$0x3]
      %v530 = vld [vmem:[%s455 + $0x40] sm:$0xff]
      %v531 = vld [vmem:[%s455 + $0x48] sm:$0xff]
      %v532 = vld [vmem:[%s455 + $0x50] sm:$0xff]
      %v533 = vld [vmem:[%s455 + $0x58] sm:$0x3]
      %v534 = vld [vmem:[%s455 + $0x60] sm:$0xff]
      %v535 = vld [vmem:[%s455 + $0x68] sm:$0xff]
      %v536 = vld [vmem:[%s455 + $0x70] sm:$0xff]
      %v537 = vld [vmem:[%s455 + $0x78] sm:$0x3]
      %v538 = vld [vmem:[%s455 + $0x80] sm:$0xff]
      %v539 = vld [vmem:[%s455 + $0x88] sm:$0xff]
      %v540 = vld [vmem:[%s455 + $0x90] sm:$0xff]
      %v541 = vld [vmem:[%s455 + $0x98] sm:$0x3]
      %v542 = vld [vmem:[%s455 + $0xa0] sm:$0xff]
      %v543 = vld [vmem:[%s455 + $0xa8] sm:$0xff]
      %v544 = vld [vmem:[%s455 + $0xb0] sm:$0xff]
      %v545 = vld [vmem:[%s455 + $0xb8] sm:$0x3]
      %v546 = vld [vmem:[%s455 + $0xc0] sm:$0xff]
      %v547 = vld [vmem:[%s455 + $0xc8] sm:$0xff]
      %v548 = vld [vmem:[%s455 + $0xd0] sm:$0xff]
      %v549 = vld [vmem:[%s455 + $0xd8] sm:$0x3]
      %v550 = vld [vmem:[%s455 + $0xe0] sm:$0xff]
      %v551 = vld [vmem:[%s455 + $0xe8] sm:$0xff]
      %v552 = vld [vmem:[%s455 + $0xf0] sm:$0xff]
      %v553 = vld [vmem:[%s455 + $0xf8] sm:$0x3]
      %s554 = scalar_lea.vmem [#allocation2], 32
      %555 = vst.msk [vmem:[%s554] sm:$0xff] %vm516, %v522
      %556 = vst.msk [vmem:[%s554 + $0x8] sm:$0xff] %vm516, %v523
      %557 = vst.msk [vmem:[%s554 + $0x10] sm:$0xff] %vm516, %v524
      %558 = vst.msk [vmem:[%s554 + $0x18] sm:$0x3] %vm520, %v525
      %559 = vst.msk [vmem:[%s554 + $0x20] sm:$0xff] %vm516, %v526
      %560 = vst.msk [vmem:[%s554 + $0x28] sm:$0xff] %vm516, %v527
      %561 = vst.msk [vmem:[%s554 + $0x30] sm:$0xff] %vm516, %v528
      %562 = vst.msk [vmem:[%s554 + $0x38] sm:$0x3] %vm520, %v529
      %563 = vst.msk [vmem:[%s554 + $0x40] sm:$0xff] %vm516, %v530
      %564 = vst.msk [vmem:[%s554 + $0x48] sm:$0xff] %vm516, %v531
      %565 = vst.msk [vmem:[%s554 + $0x50] sm:$0xff] %vm516, %v532
      %566 = vst.msk [vmem:[%s554 + $0x58] sm:$0x3] %vm520, %v533
      %567 = vst.msk [vmem:[%s554 + $0x60] sm:$0xff] %vm516, %v534
      %568 = vst.msk [vmem:[%s554 + $0x68] sm:$0xff] %vm516, %v535
      %569 = vst.msk [vmem:[%s554 + $0x70] sm:$0xff] %vm516, %v536
      %570 = vst.msk [vmem:[%s554 + $0x78] sm:$0x3] %vm520, %v537
      %571 = vst.msk [vmem:[%s554 + $0x80] sm:$0xff] %vm516, %v538
      %572 = vst.msk [vmem:[%s554 + $0x88] sm:$0xff] %vm516, %v539
      %573 = vst.msk [vmem:[%s554 + $0x90] sm:$0xff] %vm516, %v540
      %574 = vst.msk [vmem:[%s554 + $0x98] sm:$0x3] %vm520, %v541
      %575 = vst.msk [vmem:[%s554 + $0xa0] sm:$0xff] %vm516, %v542
      %576 = vst.msk [vmem:[%s554 + $0xa8] sm:$0xff] %vm516, %v543
      %577 = vst.msk [vmem:[%s554 + $0xb0] sm:$0xff] %vm516, %v544
      %578 = vst.msk [vmem:[%s554 + $0xb8] sm:$0x3] %vm520, %v545
      %579 = vst.msk [vmem:[%s554 + $0xc0] sm:$0xff] %vm516, %v546
      %580 = vst.msk [vmem:[%s554 + $0xc8] sm:$0xff] %vm516, %v547
      %581 = vst.msk [vmem:[%s554 + $0xd0] sm:$0xff] %vm516, %v548
      %582 = vst.msk [vmem:[%s554 + $0xd8] sm:$0x3] %vm520, %v549
      %583 = vst.msk [vmem:[%s554 + $0xe0] sm:$0xff] %vm516, %v550
      %584 = vst.msk [vmem:[%s554 + $0xe8] sm:$0xff] %vm516, %v551
      %585 = vst.msk [vmem:[%s554 + $0xf0] sm:$0xff] %vm516, %v552
      %586 = vst.msk [vmem:[%s554 + $0xf8] sm:$0x3] %vm520, %v553
      %s587 = scalar_lea.vmem [#allocation2], 288
      %588 = vst.msk [vmem:[%s587] sm:$0xff] %vm516, %v512
      %589 = vst.msk [vmem:[%s587 + $0x8] sm:$0xff] %vm516, %v513
      %590 = vst.msk [vmem:[%s587 + $0x10] sm:$0xff] %vm516, %v514
      %591 = vst.msk [vmem:[%s587 + $0x18] sm:$0x3] %vm520, %v515
      %v592 = vld [vmem:[#allocation2] sm:$0xff]
      %v593 = vld [vmem:[#allocation2 + $0x8] sm:$0xff]
      %v594 = vld [vmem:[#allocation2 + $0x10] sm:$0xff]
      %v595 = vld [vmem:[#allocation2 + $0x18] sm:$0x3]
      %v596 = vld [vmem:[#allocation2 + $0x20] sm:$0xff]
      %v597 = vld [vmem:[#allocation2 + $0x28] sm:$0xff]
      %v598 = vld [vmem:[#allocation2 + $0x30] sm:$0xff]
      %v599 = vld [vmem:[#allocation2 + $0x38] sm:$0x3]
      %v600 = vld [vmem:[#allocation2 + $0x40] sm:$0xff]
      %v601 = vld [vmem:[#allocation2 + $0x48] sm:$0xff]
      %v602 = vld [vmem:[#allocation2 + $0x50] sm:$0xff]
      %v603 = vld [vmem:[#allocation2 + $0x58] sm:$0x3]
      %v604 = vld [vmem:[#allocation2 + $0x60] sm:$0xff]
      %v605 = vld [vmem:[#allocation2 + $0x68] sm:$0xff]
      %v606 = vld [vmem:[#allocation2 + $0x70] sm:$0xff]
      %v607 = vld [vmem:[#allocation2 + $0x78] sm:$0x3]
      %v608 = vld [vmem:[#allocation2 + $0x80] sm:$0xff]
      %v609 = vld [vmem:[#allocation2 + $0x88] sm:$0xff]
      %v610 = vld [vmem:[#allocation2 + $0x90] sm:$0xff]
      %v611 = vld [vmem:[#allocation2 + $0x98] sm:$0x3]
      %v612 = vld [vmem:[#allocation2 + $0xa0] sm:$0xff]
      %v613 = vld [vmem:[#allocation2 + $0xa8] sm:$0xff]
      %v614 = vld [vmem:[#allocation2 + $0xb0] sm:$0xff]
      %v615 = vld [vmem:[#allocation2 + $0xb8] sm:$0x3]
      %v616 = vld [vmem:[#allocation2 + $0xc0] sm:$0xff]
      %v617 = vld [vmem:[#allocation2 + $0xc8] sm:$0xff]
      %v618 = vld [vmem:[#allocation2 + $0xd0] sm:$0xff]
      %v619 = vld [vmem:[#allocation2 + $0xd8] sm:$0x3]
      %v620 = vld [vmem:[#allocation2 + $0xe0] sm:$0xff]
      %v621 = vld [vmem:[#allocation2 + $0xe8] sm:$0xff]
      %v622 = vld [vmem:[#allocation2 + $0xf0] sm:$0xff]
      %v623 = vld [vmem:[#allocation2 + $0xf8] sm:$0x3]
      %v624 = vld [vmem:[#allocation2 + $0x100] sm:$0xff]
      %v625 = vld [vmem:[#allocation2 + $0x108] sm:$0xff]
      %v626 = vld [vmem:[#allocation2 + $0x110] sm:$0xff]
      %v627 = vld [vmem:[#allocation2 + $0x118] sm:$0x3]
      %v628 = vld [vmem:[#allocation2 + $0x120] sm:$0xff]
      %v629 = vld [vmem:[#allocation2 + $0x128] sm:$0xff]
      %v630 = vld [vmem:[#allocation2 + $0x130] sm:$0xff]
      %v631 = vld [vmem:[#allocation2 + $0x138] sm:$0x3]
      %v632 = vpack.c.bf16 %v593, %v592
      %v633 = vpack.c.bf16 %v596, %v594
      %v634 = vpack.c.bf16 %v598, %v597
      %v635 = vpack.c.bf16 %v601, %v600
      %v636 = vpack.c.bf16 %v604, %v602
      %v637 = vpack.c.bf16 %v606, %v605
      %v638 = vpack.c.bf16 %v609, %v608
      %v639 = vpack.c.bf16 %v612, %v610
      %v640 = vpack.c.bf16 %v614, %v613
      %v641 = vpack.c.bf16 %v617, %v616
      %v642 = vpack.c.bf16 %v620, %v618
      %v643 = vpack.c.bf16 %v622, %v621
      %v644 = vld [vmem:[%s3] sm:$0x3]
      %vm677 = vcmask 1046528
      %v678 = vrot.slane %v592, 1
      %v679 = vrot.slane %v593, 1
      %v680 = vsel %vm677, %v678, %v679
      %v681 = vrot.slane %v594, 1
      %v682 = vsel %vm677, %v679, %v681
      %v683 = vrot.slane %v595, 1
      %v684 = vsel %vm677, %v681, %v683
      %v685 = vrot.slane %v596, 1
      %v686 = vrot.slane %v597, 1
      %v687 = vsel %vm677, %v685, %v686
      %v688 = vrot.slane %v598, 1
      %v689 = vsel %vm677, %v686, %v688
      %v690 = vrot.slane %v599, 1
      %v691 = vsel %vm677, %v688, %v690
      %v692 = vrot.slane %v600, 1
      %v693 = vrot.slane %v601, 1
      %v694 = vsel %vm677, %v692, %v693
      %v695 = vrot.slane %v602, 1
      %v696 = vsel %vm677, %v693, %v695
      %v697 = vrot.slane %v603, 1
      %v698 = vsel %vm677, %v695, %v697
      %v699 = vrot.slane %v604, 1
      %v700 = vrot.slane %v605, 1
      %v701 = vsel %vm677, %v699, %v700
      %v702 = vrot.slane %v606, 1
      %v703 = vsel %vm677, %v700, %v702
      %v704 = vrot.slane %v607, 1
      %v705 = vsel %vm677, %v702, %v704
      %v706 = vrot.slane %v608, 1
      %v707 = vrot.slane %v609, 1
      %v708 = vsel %vm677, %v706, %v707
      %v709 = vrot.slane %v610, 1
      %v710 = vsel %vm677, %v707, %v709
      %v711 = vrot.slane %v611, 1
      %v712 = vsel %vm677, %v709, %v711
      %v713 = vrot.slane %v612, 1
      %v714 = vrot.slane %v613, 1
      %v715 = vsel %vm677, %v713, %v714
      %v716 = vrot.slane %v614, 1
      %v717 = vsel %vm677, %v714, %v716
      %v718 = vrot.slane %v615, 1
      %v719 = vsel %vm677, %v716, %v718
      %v720 = vrot.slane %v616, 1
      %v721 = vrot.slane %v617, 1
      %v722 = vsel %vm677, %v720, %v721
      %v723 = vrot.slane %v618, 1
      %v724 = vsel %vm677, %v721, %v723
      %v725 = vrot.slane %v619, 1
      %v726 = vsel %vm677, %v723, %v725
      %v727 = vrot.slane %v620, 1
      %v728 = vrot.slane %v621, 1
      %v729 = vsel %vm677, %v727, %v728
      %v730 = vrot.slane %v622, 1
      %v731 = vsel %vm677, %v728, %v730
      %v732 = vrot.slane %v623, 1
      %v733 = vsel %vm677, %v730, %v732
      %v758 = vpack.c.bf16 %v682, %v680
      %v759 = vpack.c.bf16 %v687, %v684
      %v760 = vpack.c.bf16 %v691, %v689
      %v761 = vpack.c.bf16 %v696, %v694
      %v762 = vpack.c.bf16 %v701, %v698
      %v763 = vpack.c.bf16 %v705, %v703
      %v764 = vpack.c.bf16 %v710, %v708
      %v765 = vpack.c.bf16 %v715, %v712
      %v766 = vpack.c.bf16 %v719, %v717
      %v767 = vpack.c.bf16 %v724, %v722
      %v768 = vpack.c.bf16 %v729, %v726
      %v769 = vpack.c.bf16 %v733, %v731
      %s770 = scalar_lea.vmem %s3, 2
      %v771 = vld [vmem:[%s770] sm:$0x3]
      %v773 = vsel %vm516, %v758, 0
      %v776 = vsel %vm516, %v759, 0
      %v779 = vsel %vm516, %v760, 0
      %v782 = vsel %vm516, %v761, 0
      %v785 = vsel %vm516, %v762, 0
      %v788 = vsel %vm516, %v763, 0
      %v791 = vsel %vm516, %v764, 0
      %v794 = vsel %vm516, %v765, 0
      %v797 = vsel %vm516, %v766, 0
      %v800 = vsel %vm516, %v767, 0
      %v803 = vsel %vm516, %v768, 0
      %v806 = vsel %vm516, %v769, 0
      %vm808 = vcmask 1041408
      %v810 = vsel %vm808, %v771, 0
      %812 = vmatprep.subr.bf16.mxu0 0
      %813 = vmatpush1.bf16.msra.mxu0 %v810
      %814 = vmatprep.subr.bf16.mxu0 0
      %815 = vmatpush1.bf16.msra.mxu0 0
      %816 = vmatprep.subr.bf16.mxu0 0
      %817 = vmatpush1.bf16.msra.mxu0 0
      %818 = vmatprep.subr.bf16.mxu0 0
      %819 = vmatpush1.bf16.msra.mxu0 0
      %820 = vmatprep.subr.bf16.mxu0 0
      %821 = vmatpush1.bf16.msra.mxu0 0
      %822 = vmatprep.subr.bf16.mxu0 0
      %823 = vmatpush1.bf16.msra.mxu0 0
      %824 = vmatprep.subr.bf16.mxu0 0
      %825 = vmatpush1.bf16.msra.mxu0 0
      %826 = vmatprep.subr.bf16.mxu0 0
      %827 = vmatpush1.bf16.msra.mxu0 0
      %828 = vmatprep.subr.bf16.mxu0 0
      %829 = vmatpush1.bf16.msra.mxu0 0
      %830 = vmatprep.subr.bf16.mxu0 0
      %831 = vmatpush1.bf16.msra.mxu0 0
      %832 = vmatprep.subr.bf16.mxu0 0
      %833 = vmatpush1.bf16.msra.mxu0 0
      %834 = vmatprep.subr.bf16.mxu0 0
      %835 = vmatpush1.bf16.msra.mxu0 0
      %836 = vmatprep.subr.bf16.mxu0 0
      %837 = vmatpush1.bf16.msra.mxu0 0
      %838 = vmatprep.subr.bf16.mxu0 0
      %839 = vmatpush1.bf16.msra.mxu0 0
      %840 = vmatprep.subr.bf16.mxu0 0
      %841 = vmatpush1.bf16.msra.mxu0 0
      %842 = vmatprep.subr.bf16.mxu0 0
      %843 = vmatpush1.bf16.msra.mxu0 0
      %844 = vmatprep.mubr.bf16.mxu0 0
      %845 = vmatmul.mubr.bf16.gmra.mrb[0].mxu0 %v773
      %v846 = vpop.f32.mrb[0].mxu0
      %v847 = vadd.f32 0.0, %v846
      %v848 = vpop.f32.mrb[0].mxu0
      %v849 = vpop.f32.mrb[0].mxu0
      %v850 = vadd.f32 0.0, %v849
      %v851 = vpop.f32.mrb[0].mxu0
      %852 = vmatprep.mubr.bf16.mxu0 0
      %853 = vmatmul.mubr.bf16.gmra.mrb[0].mxu0 %v776
      %v854 = vpop.f32.mrb[0].mxu0
      %v855 = vadd.f32 0.0, %v854
      %v856 = vpop.f32.mrb[0].mxu0
      %v857 = vpop.f32.mrb[0].mxu0
      %v858 = vadd.f32 0.0, %v857
      %v859 = vpop.f32.mrb[0].mxu0
      %860 = vmatprep.mubr.bf16.mxu0 0
      %861 = vmatmul.mubr.bf16.gmra.mrb[0].mxu0 %v779
      %v862 = vpop.f32.mrb[0].mxu0
      %v863 = vadd.f32 0.0, %v862
      %v864 = vpop.f32.mrb[0].mxu0
      %v865 = vpop.f32.mrb[0].mxu0
      %v866 = vadd.f32 0.0, %v865
      %v867 = vpop.f32.mrb[0].mxu0
      %868 = vmatprep.mubr.bf16.mxu0 0
      %869 = vmatmul.mubr.bf16.gmra.mrb[0].mxu0 %v782
      %v870 = vpop.f32.mrb[0].mxu0
      %v871 = vadd.f32 0.0, %v870
      %v872 = vpop.f32.mrb[0].mxu0
      %v873 = vpop.f32.mrb[0].mxu0
      %v874 = vadd.f32 0.0, %v873
      %v875 = vpop.f32.mrb[0].mxu0
      %876 = vmatprep.mubr.bf16.mxu0 0
      %877 = vmatmul.mubr.bf16.gmra.mrb[0].mxu0 %v785
      %v878 = vpop.f32.mrb[0].mxu0
      %v879 = vadd.f32 0.0, %v878
      %v880 = vpop.f32.mrb[0].mxu0
      %v881 = vpop.f32.mrb[0].mxu0
      %v882 = vadd.f32 0.0, %v881
      %v883 = vpop.f32.mrb[0].mxu0
      %884 = vmatprep.mubr.bf16.mxu0 0
      %885 = vmatmul.mubr.bf16.gmra.mrb[0].mxu0 %v788
      %v886 = vpop.f32.mrb[0].mxu0
      %v887 = vadd.f32 0.0, %v886
      %v888 = vpop.f32.mrb[0].mxu0
      %v889 = vpop.f32.mrb[0].mxu0
      %v890 = vadd.f32 0.0, %v889
      %v891 = vpop.f32.mrb[0].mxu0
      %892 = vmatprep.mubr.bf16.mxu0 0
      %893 = vmatmul.mubr.bf16.gmra.mrb[0].mxu0 %v791
      %v894 = vpop.f32.mrb[0].mxu0
      %v895 = vadd.f32 0.0, %v894
      %v896 = vpop.f32.mrb[0].mxu0
      %v897 = vpop.f32.mrb[0].mxu0
      %v898 = vadd.f32 0.0, %v897
      %v899 = vpop.f32.mrb[0].mxu0
      %900 = vmatprep.mubr.bf16.mxu0 0
      %901 = vmatmul.mubr.bf16.gmra.mrb[0].mxu0 %v794
      %v902 = vpop.f32.mrb[0].mxu0
      %v903 = vadd.f32 0.0, %v902
      %v904 = vpop.f32.mrb[0].mxu0
      %v905 = vpop.f32.mrb[0].mxu0
      %v906 = vadd.f32 0.0, %v905
      %v907 = vpop.f32.mrb[0].mxu0
      %908 = vmatprep.mubr.bf16.mxu0 0
      %909 = vmatmul.mubr.bf16.gmra.mrb[0].mxu0 %v797
      %v910 = vpop.f32.mrb[0].mxu0
      %v911 = vadd.f32 0.0, %v910
      %v912 = vpop.f32.mrb[0].mxu0
      %v913 = vpop.f32.mrb[0].mxu0
      %v914 = vadd.f32 0.0, %v913
      %v915 = vpop.f32.mrb[0].mxu0
      %916 = vmatprep.mubr.bf16.mxu0 0
      %917 = vmatmul.mubr.bf16.gmra.mrb[0].mxu0 %v800
      %v918 = vpop.f32.mrb[0].mxu0
      %v919 = vadd.f32 0.0, %v918
      %v920 = vpop.f32.mrb[0].mxu0
      %v921 = vpop.f32.mrb[0].mxu0
      %v922 = vadd.f32 0.0, %v921
      %v923 = vpop.f32.mrb[0].mxu0
      %924 = vmatprep.mubr.bf16.mxu0 0
      %925 = vmatmul.mubr.bf16.gmra.mrb[0].mxu0 %v803
      %v926 = vpop.f32.mrb[0].mxu0
      %v927 = vadd.f32 0.0, %v926
      %v928 = vpop.f32.mrb[0].mxu0
      %v929 = vpop.f32.mrb[0].mxu0
      %v930 = vadd.f32 0.0, %v929
      %v931 = vpop.f32.mrb[0].mxu0
      %932 = vmatprep.mubr.bf16.mxu0 0
      %933 = vmatmul.mubr.bf16.gmra.mrb[0].mxu0 %v806
      %v934 = vpop.f32.mrb[0].mxu0
      %v935 = vadd.f32 0.0, %v934
      %v936 = vpop.f32.mrb[0].mxu0
      %v937 = vpop.f32.mrb[0].mxu0
      %v938 = vadd.f32 0.0, %v937
      %v939 = vpop.f32.mrb[0].mxu0
      %940 = vdwg.mxu0
      %v942 = vsel %vm516, %v632, 0
      %v945 = vsel %vm516, %v633, 0
      %v948 = vsel %vm516, %v634, 0
      %v951 = vsel %vm516, %v635, 0
      %v954 = vsel %vm516, %v636, 0
      %v957 = vsel %vm516, %v637, 0
      %v960 = vsel %vm516, %v638, 0
      %v963 = vsel %vm516, %v639, 0
      %v966 = vsel %vm516, %v640, 0
      %v969 = vsel %vm516, %v641, 0
      %v972 = vsel %vm516, %v642, 0
      %v975 = vsel %vm516, %v643, 0
      %v978 = vsel %vm808, %v644, 0
      %980 = vmatprep.subr.bf16.mxu0 0
      %981 = vmatpush1.bf16.msra.mxu0 %v978
      %982 = vmatprep.subr.bf16.mxu0 0
      %983 = vmatpush1.bf16.msra.mxu0 0
      %984 = vmatprep.subr.bf16.mxu0 0
      %985 = vmatpush1.bf16.msra.mxu0 0
      %986 = vmatprep.subr.bf16.mxu0 0
      %987 = vmatpush1.bf16.msra.mxu0 0
      %988 = vmatprep.subr.bf16.mxu0 0
      %989 = vmatpush1.bf16.msra.mxu0 0
      %990 = vmatprep.subr.bf16.mxu0 0
      %991 = vmatpush1.bf16.msra.mxu0 0
      %992 = vmatprep.subr.bf16.mxu0 0
      %993 = vmatpush1.bf16.msra.mxu0 0
      %994 = vmatprep.subr.bf16.mxu0 0
      %995 = vmatpush1.bf16.msra.mxu0 0
      %996 = vmatprep.subr.bf16.mxu0 0
      %997 = vmatpush1.bf16.msra.mxu0 0
      %998 = vmatprep.subr.bf16.mxu0 0
      %999 = vmatpush1.bf16.msra.mxu0 0
      %1000 = vmatprep.subr.bf16.mxu0 0
      %1001 = vmatpush1.bf16.msra.mxu0 0
      %1002 = vmatprep.subr.bf16.mxu0 0
      %1003 = vmatpush1.bf16.msra.mxu0 0
      %1004 = vmatprep.subr.bf16.mxu0 0
      %1005 = vmatpush1.bf16.msra.mxu0 0
      %1006 = vmatprep.subr.bf16.mxu0 0
      %1007 = vmatpush1.bf16.msra.mxu0 0
      %1008 = vmatprep.subr.bf16.mxu0 0
      %1009 = vmatpush1.bf16.msra.mxu0 0
      %1010 = vmatprep.subr.bf16.mxu0 0
      %1011 = vmatpush1.bf16.msra.mxu0 0
      %1012 = vmatprep.mubr.bf16.mxu0 0
      %1013 = vmatmul.mubr.bf16.gmra.mrb[0].mxu0 %v942
      %v1014 = vpop.f32.mrb[0].mxu0
      %v1015 = vadd.f32 %v847, %v1014
      %v1016 = vpop.f32.mrb[0].mxu0
      %v1017 = vpop.f32.mrb[0].mxu0
      %v1018 = vadd.f32 %v850, %v1017
      %v1019 = vpop.f32.mrb[0].mxu0
      %1020 = vmatprep.mubr.bf16.mxu0 0
      %1021 = vmatmul.mubr.bf16.gmra.mrb[0].mxu0 %v945
      %v1022 = vpop.f32.mrb[0].mxu0
      %v1023 = vadd.f32 %v855, %v1022
      %v1024 = vpop.f32.mrb[0].mxu0
      %v1025 = vpop.f32.mrb[0].mxu0
      %v1026 = vadd.f32 %v858, %v1025
      %v1027 = vpop.f32.mrb[0].mxu0
      %1028 = vmatprep.mubr.bf16.mxu0 0
      %1029 = vmatmul.mubr.bf16.gmra.mrb[0].mxu0 %v948
      %v1030 = vpop.f32.mrb[0].mxu0
      %v1031 = vadd.f32 %v863, %v1030
      %v1032 = vpop.f32.mrb[0].mxu0
      %v1033 = vpop.f32.mrb[0].mxu0
      %v1034 = vadd.f32 %v866, %v1033
      %v1035 = vpop.f32.mrb[0].mxu0
      %1036 = vmatprep.mubr.bf16.mxu0 0
      %1037 = vmatmul.mubr.bf16.gmra.mrb[0].mxu0 %v951
      %v1038 = vpop.f32.mrb[0].mxu0
      %v1039 = vadd.f32 %v871, %v1038
      %v1040 = vpop.f32.mrb[0].mxu0
      %v1041 = vpop.f32.mrb[0].mxu0
      %v1042 = vadd.f32 %v874, %v1041
      %v1043 = vpop.f32.mrb[0].mxu0
      %1044 = vmatprep.mubr.bf16.mxu0 0
      %1045 = vmatmul.mubr.bf16.gmra.mrb[0].mxu0 %v954
      %v1046 = vpop.f32.mrb[0].mxu0
      %v1047 = vadd.f32 %v879, %v1046
      %v1048 = vpop.f32.mrb[0].mxu0
      %v1049 = vpop.f32.mrb[0].mxu0
      %v1050 = vadd.f32 %v882, %v1049
      %v1051 = vpop.f32.mrb[0].mxu0
      %1052 = vmatprep.mubr.bf16.mxu0 0
      %1053 = vmatmul.mubr.bf16.gmra.mrb[0].mxu0 %v957
      %v1054 = vpop.f32.mrb[0].mxu0
      %v1055 = vadd.f32 %v887, %v1054
      %v1056 = vpop.f32.mrb[0].mxu0
      %v1057 = vpop.f32.mrb[0].mxu0
      %v1058 = vadd.f32 %v890, %v1057
      %v1059 = vpop.f32.mrb[0].mxu0
      %1060 = vmatprep.mubr.bf16.mxu0 0
      %1061 = vmatmul.mubr.bf16.gmra.mrb[0].mxu0 %v960
      %v1062 = vpop.f32.mrb[0].mxu0
      %v1063 = vadd.f32 %v895, %v1062
      %v1064 = vpop.f32.mrb[0].mxu0
      %v1065 = vpop.f32.mrb[0].mxu0
      %v1066 = vadd.f32 %v898, %v1065
      %v1067 = vpop.f32.mrb[0].mxu0
      %1068 = vmatprep.mubr.bf16.mxu0 0
      %1069 = vmatmul.mubr.bf16.gmra.mrb[0].mxu0 %v963
      %v1070 = vpop.f32.mrb[0].mxu0
      %v1071 = vadd.f32 %v903, %v1070
      %v1072 = vpop.f32.mrb[0].mxu0
      %v1073 = vpop.f32.mrb[0].mxu0
      %v1074 = vadd.f32 %v906, %v1073
      %v1075 = vpop.f32.mrb[0].mxu0
      %1076 = vmatprep.mubr.bf16.mxu0 0
      %1077 = vmatmul.mubr.bf16.gmra.mrb[0].mxu0 %v966
      %v1078 = vpop.f32.mrb[0].mxu0
      %v1079 = vadd.f32 %v911, %v1078
      %v1080 = vpop.f32.mrb[0].mxu0
      %v1081 = vpop.f32.mrb[0].mxu0
      %v1082 = vadd.f32 %v914, %v1081
      %v1083 = vpop.f32.mrb[0].mxu0
      %1084 = vmatprep.mubr.bf16.mxu0 0
      %1085 = vmatmul.mubr.bf16.gmra.mrb[0].mxu0 %v969
      %v1086 = vpop.f32.mrb[0].mxu0
      %v1087 = vadd.f32 %v919, %v1086
      %v1088 = vpop.f32.mrb[0].mxu0
      %v1089 = vpop.f32.mrb[0].mxu0
      %v1090 = vadd.f32 %v922, %v1089
      %v1091 = vpop.f32.mrb[0].mxu0
      %1092 = vmatprep.mubr.bf16.mxu0 0
      %1093 = vmatmul.mubr.bf16.gmra.mrb[0].mxu0 %v972
      %v1094 = vpop.f32.mrb[0].mxu0
      %v1095 = vadd.f32 %v927, %v1094
      %v1096 = vpop.f32.mrb[0].mxu0
      %v1097 = vpop.f32.mrb[0].mxu0
      %v1098 = vadd.f32 %v930, %v1097
      %v1099 = vpop.f32.mrb[0].mxu0
      %1100 = vmatprep.mubr.bf16.mxu0 0
      %1101 = vmatmul.mubr.bf16.gmra.mrb[0].mxu0 %v975
      %v1102 = vpop.f32.mrb[0].mxu0
      %v1103 = vadd.f32 %v935, %v1102
      %v1104 = vpop.f32.mrb[0].mxu0
      %v1105 = vpop.f32.mrb[0].mxu0
      %v1106 = vadd.f32 %v938, %v1105
      %v1107 = vpop.f32.mrb[0].mxu0
      %1108 = vdwg.mxu0
      %vm1109 = vcmask 1045504
      %v1110 = vrot.slane %v592, 2
      %v1111 = vrot.slane %v593, 2
      %v1112 = vsel %vm1109, %v1110, %v1111
      %v1113 = vrot.slane %v594, 2
      %v1114 = vsel %vm1109, %v1111, %v1113
      %v1115 = vrot.slane %v595, 2
      %v1116 = vsel %vm1109, %v1113, %v1115
      %v1117 = vrot.slane %v596, 2
      %v1118 = vrot.slane %v597, 2
      %v1119 = vsel %vm1109, %v1117, %v1118
      %v1120 = vrot.slane %v598, 2
      %v1121 = vsel %vm1109, %v1118, %v1120
      %v1122 = vrot.slane %v599, 2
      %v1123 = vsel %vm1109, %v1120, %v1122
      %v1124 = vrot.slane %v600, 2
      %v1125 = vrot.slane %v601, 2
      %v1126 = vsel %vm1109, %v1124, %v1125
      %v1127 = vrot.slane %v602, 2
      %v1128 = vsel %vm1109, %v1125, %v1127
      %v1129 = vrot.slane %v603, 2
      %v1130 = vsel %vm1109, %v1127, %v1129
      %v1131 = vrot.slane %v604, 2
      %v1132 = vrot.slane %v605, 2
      %v1133 = vsel %vm1109, %v1131, %v1132
      %v1134 = vrot.slane %v606, 2
      %v1135 = vsel %vm1109, %v1132, %v1134
      %v1136 = vrot.slane %v607, 2
      %v1137 = vsel %vm1109, %v1134, %v1136
      %v1138 = vrot.slane %v608, 2
      %v1139 = vrot.slane %v609, 2
      %v1140 = vsel %vm1109, %v1138, %v1139
      %v1141 = vrot.slane %v610, 2
      %v1142 = vsel %vm1109, %v1139, %v1141
      %v1143 = vrot.slane %v611, 2
      %v1144 = vsel %vm1109, %v1141, %v1143
      %v1145 = vrot.slane %v612, 2
      %v1146 = vrot.slane %v613, 2
      %v1147 = vsel %vm1109, %v1145, %v1146
      %v1148 = vrot.slane %v614, 2
      %v1149 = vsel %vm1109, %v1146, %v1148
      %v1150 = vrot.slane %v615, 2
      %v1151 = vsel %vm1109, %v1148, %v1150
      %v1152 = vrot.slane %v616, 2
      %v1153 = vrot.slane %v617, 2
      %v1154 = vsel %vm1109, %v1152, %v1153
      %v1155 = vrot.slane %v618, 2
      %v1156 = vsel %vm1109, %v1153, %v1155
      %v1157 = vrot.slane %v619, 2
      %v1158 = vsel %vm1109, %v1155, %v1157
      %v1159 = vrot.slane %v620, 2
      %v1160 = vrot.slane %v621, 2
      %v1161 = vsel %vm1109, %v1159, %v1160
      %v1162 = vrot.slane %v622, 2
      %v1163 = vsel %vm1109, %v1160, %v1162
      %v1164 = vrot.slane %v623, 2
      %v1165 = vsel %vm1109, %v1162, %v1164
      %v1190 = vpack.c.bf16 %v1114, %v1112
      %v1191 = vpack.c.bf16 %v1119, %v1116
      %v1192 = vpack.c.bf16 %v1123, %v1121
      %v1193 = vpack.c.bf16 %v1128, %v1126
      %v1194 = vpack.c.bf16 %v1133, %v1130
      %v1195 = vpack.c.bf16 %v1137, %v1135
      %v1196 = vpack.c.bf16 %v1142, %v1140
      %v1197 = vpack.c.bf16 %v1147, %v1144
      %v1198 = vpack.c.bf16 %v1151, %v1149
      %v1199 = vpack.c.bf16 %v1156, %v1154
      %v1200 = vpack.c.bf16 %v1161, %v1158
      %v1201 = vpack.c.bf16 %v1165, %v1163
      %s1202 = scalar_lea.vmem %s3, 4
      %v1203 = vld [vmem:[%s1202] sm:$0x3]
      %v1205 = vsel %vm516, %v1190, 0
      %v1208 = vsel %vm516, %v1191, 0
      %v1211 = vsel %vm516, %v1192, 0
      %v1214 = vsel %vm516, %v1193, 0
      %v1217 = vsel %vm516, %v1194, 0
      %v1220 = vsel %vm516, %v1195, 0
      %v1223 = vsel %vm516, %v1196, 0
      %v1226 = vsel %vm516, %v1197, 0
      %v1229 = vsel %vm516, %v1198, 0
      %v1232 = vsel %vm516, %v1199, 0
      %v1235 = vsel %vm516, %v1200, 0
      %v1238 = vsel %vm516, %v1201, 0
      %v1241 = vsel %vm808, %v1203, 0
      %1243 = vmatprep.subr.bf16.mxu0 0
      %1244 = vmatpush1.bf16.msra.mxu0 %v1241
      %1245 = vmatprep.subr.bf16.mxu0 0
      %1246 = vmatpush1.bf16.msra.mxu0 0
      %1247 = vmatprep.subr.bf16.mxu0 0
      %1248 = vmatpush1.bf16.msra.mxu0 0
      %1249 = vmatprep.subr.bf16.mxu0 0
      %1250 = vmatpush1.bf16.msra.mxu0 0
      %1251 = vmatprep.subr.bf16.mxu0 0
      %1252 = vmatpush1.bf16.msra.mxu0 0
      %1253 = vmatprep.subr.bf16.mxu0 0
      %1254 = vmatpush1.bf16.msra.mxu0 0
      %1255 = vmatprep.subr.bf16.mxu0 0
      %1256 = vmatpush1.bf16.msra.mxu0 0
      %1257 = vmatprep.subr.bf16.mxu0 0
      %1258 = vmatpush1.bf16.msra.mxu0 0
      %1259 = vmatprep.subr.bf16.mxu0 0
      %1260 = vmatpush1.bf16.msra.mxu0 0
      %1261 = vmatprep.subr.bf16.mxu0 0
      %1262 = vmatpush1.bf16.msra.mxu0 0
      %1263 = vmatprep.subr.bf16.mxu0 0
      %1264 = vmatpush1.bf16.msra.mxu0 0
      %1265 = vmatprep.subr.bf16.mxu0 0
      %1266 = vmatpush1.bf16.msra.mxu0 0
      %1267 = vmatprep.subr.bf16.mxu0 0
      %1268 = vmatpush1.bf16.msra.mxu0 0
      %1269 = vmatprep.subr.bf16.mxu0 0
      %1270 = vmatpush1.bf16.msra.mxu0 0
      %1271 = vmatprep.subr.bf16.mxu0 0
      %1272 = vmatpush1.bf16.msra.mxu0 0
      %1273 = vmatprep.subr.bf16.mxu0 0
      %1274 = vmatpush1.bf16.msra.mxu0 0
      %1275 = vmatprep.mubr.bf16.mxu0 0
      %1276 = vmatmul.mubr.bf16.gmra.mrb[0].mxu0 %v1205
      %v1277 = vpop.f32.mrb[0].mxu0
      %v1278 = vadd.f32 0.0, %v1277
      %v1279 = vpop.f32.mrb[0].mxu0
      %v1280 = vpop.f32.mrb[0].mxu0
      %v1281 = vadd.f32 0.0, %v1280
      %v1282 = vpop.f32.mrb[0].mxu0
      %1283 = vmatprep.mubr.bf16.mxu0 0
      %1284 = vmatmul.mubr.bf16.gmra.mrb[0].mxu0 %v1208
      %v1285 = vpop.f32.mrb[0].mxu0
      %v1286 = vadd.f32 0.0, %v1285
      %v1287 = vpop.f32.mrb[0].mxu0
      %v1288 = vpop.f32.mrb[0].mxu0
      %v1289 = vadd.f32 0.0, %v1288
      %v1290 = vpop.f32.mrb[0].mxu0
      %1291 = vmatprep.mubr.bf16.mxu0 0
      %1292 = vmatmul.mubr.bf16.gmra.mrb[0].mxu0 %v1211
      %v1293 = vpop.f32.mrb[0].mxu0
      %v1294 = vadd.f32 0.0, %v1293
      %v1295 = vpop.f32.mrb[0].mxu0
      %v1296 = vpop.f32.mrb[0].mxu0
      %v1297 = vadd.f32 0.0, %v1296
      %v1298 = vpop.f32.mrb[0].mxu0
      %1299 = vmatprep.mubr.bf16.mxu0 0
      %1300 = vmatmul.mubr.bf16.gmra.mrb[0].mxu0 %v1214
      %v1301 = vpop.f32.mrb[0].mxu0
      %v1302 = vadd.f32 0.0, %v1301
      %v1303 = vpop.f32.mrb[0].mxu0
      %v1304 = vpop.f32.mrb[0].mxu0
      %v1305 = vadd.f32 0.0, %v1304
      %v1306 = vpop.f32.mrb[0].mxu0
      %1307 = vmatprep.mubr.bf16.mxu0 0
      %1308 = vmatmul.mubr.bf16.gmra.mrb[0].mxu0 %v1217
      %v1309 = vpop.f32.mrb[0].mxu0
      %v1310 = vadd.f32 0.0, %v1309
      %v1311 = vpop.f32.mrb[0].mxu0
      %v1312 = vpop.f32.mrb[0].mxu0
      %v1313 = vadd.f32 0.0, %v1312
      %v1314 = vpop.f32.mrb[0].mxu0
      %1315 = vmatprep.mubr.bf16.mxu0 0
      %1316 = vmatmul.mubr.bf16.gmra.mrb[0].mxu0 %v1220
      %v1317 = vpop.f32.mrb[0].mxu0
      %v1318 = vadd.f32 0.0, %v1317
      %v1319 = vpop.f32.mrb[0].mxu0
      %v1320 = vpop.f32.mrb[0].mxu0
      %v1321 = vadd.f32 0.0, %v1320
      %v1322 = vpop.f32.mrb[0].mxu0
      %1323 = vmatprep.mubr.bf16.mxu0 0
      %1324 = vmatmul.mubr.bf16.gmra.mrb[0].mxu0 %v1223
      %v1325 = vpop.f32.mrb[0].mxu0
      %v1326 = vadd.f32 0.0, %v1325
      %v1327 = vpop.f32.mrb[0].mxu0
      %v1328 = vpop.f32.mrb[0].mxu0
      %v1329 = vadd.f32 0.0, %v1328
      %v1330 = vpop.f32.mrb[0].mxu0
      %1331 = vmatprep.mubr.bf16.mxu0 0
      %1332 = vmatmul.mubr.bf16.gmra.mrb[0].mxu0 %v1226
      %v1333 = vpop.f32.mrb[0].mxu0
      %v1334 = vadd.f32 0.0, %v1333
      %v1335 = vpop.f32.mrb[0].mxu0
      %v1336 = vpop.f32.mrb[0].mxu0
      %v1337 = vadd.f32 0.0, %v1336
      %v1338 = vpop.f32.mrb[0].mxu0
      %1339 = vmatprep.mubr.bf16.mxu0 0
      %1340 = vmatmul.mubr.bf16.gmra.mrb[0].mxu0 %v1229
      %v1341 = vpop.f32.mrb[0].mxu0
      %v1342 = vadd.f32 0.0, %v1341
      %v1343 = vpop.f32.mrb[0].mxu0
      %v1344 = vpop.f32.mrb[0].mxu0
      %v1345 = vadd.f32 0.0, %v1344
      %v1346 = vpop.f32.mrb[0].mxu0
      %1347 = vmatprep.mubr.bf16.mxu0 0
      %1348 = vmatmul.mubr.bf16.gmra.mrb[0].mxu0 %v1232
      %v1349 = vpop.f32.mrb[0].mxu0
      %v1350 = vadd.f32 0.0, %v1349
      %v1351 = vpop.f32.mrb[0].mxu0
      %v1352 = vpop.f32.mrb[0].mxu0
      %v1353 = vadd.f32 0.0, %v1352
      %v1354 = vpop.f32.mrb[0].mxu0
      %1355 = vmatprep.mubr.bf16.mxu0 0
      %1356 = vmatmul.mubr.bf16.gmra.mrb[0].mxu0 %v1235
      %v1357 = vpop.f32.mrb[0].mxu0
      %v1358 = vadd.f32 0.0, %v1357
      %v1359 = vpop.f32.mrb[0].mxu0
      %v1360 = vpop.f32.mrb[0].mxu0
      %v1361 = vadd.f32 0.0, %v1360
      %v1362 = vpop.f32.mrb[0].mxu0
      %1363 = vmatprep.mubr.bf16.mxu0 0
      %1364 = vmatmul.mubr.bf16.gmra.mrb[0].mxu0 %v1238
      %v1365 = vpop.f32.mrb[0].mxu0
      %v1366 = vadd.f32 0.0, %v1365
      %v1367 = vpop.f32.mrb[0].mxu0
      %v1368 = vpop.f32.mrb[0].mxu0
      %v1369 = vadd.f32 0.0, %v1368
      %v1370 = vpop.f32.mrb[0].mxu0
      %1371 = vdwg.mxu0
      %v1372 = vadd.f32 %v1015, %v1278
      %v1373 = vadd.f32 %v1018, %v1281
      %v1374 = vadd.f32 %v1023, %v1286
      %v1375 = vadd.f32 %v1026, %v1289
      %v1376 = vadd.f32 %v1031, %v1294
      %v1377 = vadd.f32 %v1034, %v1297
      %v1378 = vadd.f32 %v1039, %v1302
      %v1379 = vadd.f32 %v1042, %v1305
      %v1380 = vadd.f32 %v1047, %v1310
      %v1381 = vadd.f32 %v1050, %v1313
      %v1382 = vadd.f32 %v1055, %v1318
      %v1383 = vadd.f32 %v1058, %v1321
      %v1384 = vadd.f32 %v1063, %v1326
      %v1385 = vadd.f32 %v1066, %v1329
      %v1386 = vadd.f32 %v1071, %v1334
      %v1387 = vadd.f32 %v1074, %v1337
      %v1388 = vadd.f32 %v1079, %v1342
      %v1389 = vadd.f32 %v1082, %v1345
      %v1390 = vadd.f32 %v1087, %v1350
      %v1391 = vadd.f32 %v1090, %v1353
      %v1392 = vadd.f32 %v1095, %v1358
      %v1393 = vadd.f32 %v1098, %v1361
      %v1394 = vadd.f32 %v1103, %v1366
      %v1395 = vadd.f32 %v1106, %v1369
      %v1396 = vpack.c.bf16 %v597, %v596
      %v1397 = vpack.c.bf16 %v600, %v598
      %v1398 = vpack.c.bf16 %v602, %v601
      %v1399 = vpack.c.bf16 %v605, %v604
      %v1400 = vpack.c.bf16 %v608, %v606
      %v1401 = vpack.c.bf16 %v610, %v609
      %v1402 = vpack.c.bf16 %v613, %v612
      %v1403 = vpack.c.bf16 %v616, %v614
      %v1404 = vpack.c.bf16 %v618, %v617
      %v1405 = vpack.c.bf16 %v621, %v620
      %v1406 = vpack.c.bf16 %v624, %v622
      %v1407 = vpack.c.bf16 %v626, %v625
      %s1408 = scalar_lea.vmem %s3, 6
      %v1409 = vld [vmem:[%s1408] sm:$0x3]
      %v1411 = vsel %vm516, %v1396, 0
      %v1414 = vsel %vm516, %v1397, 0
      %v1417 = vsel %vm516, %v1398, 0
      %v1420 = vsel %vm516, %v1399, 0
      %v1423 = vsel %vm516, %v1400, 0
      %v1426 = vsel %vm516, %v1401, 0
      %v1429 = vsel %vm516, %v1402, 0
      %v1432 = vsel %vm516, %v1403, 0
      %v1435 = vsel %vm516, %v1404, 0
      %v1438 = vsel %vm516, %v1405, 0
      %v1441 = vsel %vm516, %v1406, 0
      %v1444 = vsel %vm516, %v1407, 0
      %v1447 = vsel %vm808, %v1409, 0
      %1449 = vmatprep.subr.bf16.mxu0 0
      %1450 = vmatpush1.bf16.msra.mxu0 %v1447
      %1451 = vmatprep.subr.bf16.mxu0 0
      %1452 = vmatpush1.bf16.msra.mxu0 0
      %1453 = vmatprep.subr.bf16.mxu0 0
      %1454 = vmatpush1.bf16.msra.mxu0 0
      %1455 = vmatprep.subr.bf16.mxu0 0
      %1456 = vmatpush1.bf16.msra.mxu0 0
      %1457 = vmatprep.subr.bf16.mxu0 0
      %1458 = vmatpush1.bf16.msra.mxu0 0
      %1459 = vmatprep.subr.bf16.mxu0 0
      %1460 = vmatpush1.bf16.msra.mxu0 0
      %1461 = vmatprep.subr.bf16.mxu0 0
      %1462 = vmatpush1.bf16.msra.mxu0 0
      %1463 = vmatprep.subr.bf16.mxu0 0
      %1464 = vmatpush1.bf16.msra.mxu0 0
      %1465 = vmatprep.subr.bf16.mxu0 0
      %1466 = vmatpush1.bf16.msra.mxu0 0
      %1467 = vmatprep.subr.bf16.mxu0 0
      %1468 = vmatpush1.bf16.msra.mxu0 0
      %1469 = vmatprep.subr.bf16.mxu0 0
      %1470 = vmatpush1.bf16.msra.mxu0 0
      %1471 = vmatprep.subr.bf16.mxu0 0
      %1472 = vmatpush1.bf16.msra.mxu0 0
      %1473 = vmatprep.subr.bf16.mxu0 0
      %1474 = vmatpush1.bf16.msra.mxu0 0
      %1475 = vmatprep.subr.bf16.mxu0 0
      %1476 = vmatpush1.bf16.msra.mxu0 0
      %1477 = vmatprep.subr.bf16.mxu0 0
      %1478 = vmatpush1.bf16.msra.mxu0 0
      %1479 = vmatprep.subr.bf16.mxu0 0
      %1480 = vmatpush1.bf16.msra.mxu0 0
      %1481 = vmatprep.mubr.bf16.mxu0 0
      %1482 = vmatmul.mubr.bf16.gmra.mrb[0].mxu0 %v1411
      %v1483 = vpop.f32.mrb[0].mxu0
      %v1484 = vadd.f32 0.0, %v1483
      %v1485 = vpop.f32.mrb[0].mxu0
      %v1486 = vpop.f32.mrb[0].mxu0
      %v1487 = vadd.f32 0.0, %v1486
      %v1488 = vpop.f32.mrb[0].mxu0
      %1489 = vmatprep.mubr.bf16.mxu0 0
      %1490 = vmatmul.mubr.bf16.gmra.mrb[0].mxu0 %v1414
      %v1491 = vpop.f32.mrb[0].mxu0
      %v1492 = vadd.f32 0.0, %v1491
      %v1493 = vpop.f32.mrb[0].mxu0
      %v1494 = vpop.f32.mrb[0].mxu0
      %v1495 = vadd.f32 0.0, %v1494
      %v1496 = vpop.f32.mrb[0].mxu0
      %1497 = vmatprep.mubr.bf16.mxu0 0
      %1498 = vmatmul.mubr.bf16.gmra.mrb[0].mxu0 %v1417
      %v1499 = vpop.f32.mrb[0].mxu0
      %v1500 = vadd.f32 0.0, %v1499
      %v1501 = vpop.f32.mrb[0].mxu0
      %v1502 = vpop.f32.mrb[0].mxu0
      %v1503 = vadd.f32 0.0, %v1502
      %v1504 = vpop.f32.mrb[0].mxu0
      %1505 = vmatprep.mubr.bf16.mxu0 0
      %1506 = vmatmul.mubr.bf16.gmra.mrb[0].mxu0 %v1420
      %v1507 = vpop.f32.mrb[0].mxu0
      %v1508 = vadd.f32 0.0, %v1507
      %v1509 = vpop.f32.mrb[0].mxu0
      %v1510 = vpop.f32.mrb[0].mxu0
      %v1511 = vadd.f32 0.0, %v1510
      %v1512 = vpop.f32.mrb[0].mxu0
      %1513 = vmatprep.mubr.bf16.mxu0 0
      %1514 = vmatmul.mubr.bf16.gmra.mrb[0].mxu0 %v1423
      %v1515 = vpop.f32.mrb[0].mxu0
      %v1516 = vadd.f32 0.0, %v1515
      %v1517 = vpop.f32.mrb[0].mxu0
      %v1518 = vpop.f32.mrb[0].mxu0
      %v1519 = vadd.f32 0.0, %v1518
      %v1520 = vpop.f32.mrb[0].mxu0
      %1521 = vmatprep.mubr.bf16.mxu0 0
      %1522 = vmatmul.mubr.bf16.gmra.mrb[0].mxu0 %v1426
      %v1523 = vpop.f32.mrb[0].mxu0
      %v1524 = vadd.f32 0.0, %v1523
      %v1525 = vpop.f32.mrb[0].mxu0
      %v1526 = vpop.f32.mrb[0].mxu0
      %v1527 = vadd.f32 0.0, %v1526
      %v1528 = vpop.f32.mrb[0].mxu0
      %1529 = vmatprep.mubr.bf16.mxu0 0
      %1530 = vmatmul.mubr.bf16.gmra.mrb[0].mxu0 %v1429
      %v1531 = vpop.f32.mrb[0].mxu0
      %v1532 = vadd.f32 0.0, %v1531
      %v1533 = vpop.f32.mrb[0].mxu0
      %v1534 = vpop.f32.mrb[0].mxu0
      %v1535 = vadd.f32 0.0, %v1534
      %v1536 = vpop.f32.mrb[0].mxu0
      %1537 = vmatprep.mubr.bf16.mxu0 0
      %1538 = vmatmul.mubr.bf16.gmra.mrb[0].mxu0 %v1432
      %v1539 = vpop.f32.mrb[0].mxu0
      %v1540 = vadd.f32 0.0, %v1539
      %v1541 = vpop.f32.mrb[0].mxu0
      %v1542 = vpop.f32.mrb[0].mxu0
      %v1543 = vadd.f32 0.0, %v1542
      %v1544 = vpop.f32.mrb[0].mxu0
      %1545 = vmatprep.mubr.bf16.mxu0 0
      %1546 = vmatmul.mubr.bf16.gmra.mrb[0].mxu0 %v1435
      %v1547 = vpop.f32.mrb[0].mxu0
      %v1548 = vadd.f32 0.0, %v1547
      %v1549 = vpop.f32.mrb[0].mxu0
      %v1550 = vpop.f32.mrb[0].mxu0
      %v1551 = vadd.f32 0.0, %v1550
      %v1552 = vpop.f32.mrb[0].mxu0
      %1553 = vmatprep.mubr.bf16.mxu0 0
      %1554 = vmatmul.mubr.bf16.gmra.mrb[0].mxu0 %v1438
      %v1555 = vpop.f32.mrb[0].mxu0
      %v1556 = vadd.f32 0.0, %v1555
      %v1557 = vpop.f32.mrb[0].mxu0
      %v1558 = vpop.f32.mrb[0].mxu0
      %v1559 = vadd.f32 0.0, %v1558
      %v1560 = vpop.f32.mrb[0].mxu0
      %1561 = vmatprep.mubr.bf16.mxu0 0
      %1562 = vmatmul.mubr.bf16.gmra.mrb[0].mxu0 %v1441
      %v1563 = vpop.f32.mrb[0].mxu0
      %v1564 = vadd.f32 0.0, %v1563
      %v1565 = vpop.f32.mrb[0].mxu0
      %v1566 = vpop.f32.mrb[0].mxu0
      %v1567 = vadd.f32 0.0, %v1566
      %v1568 = vpop.f32.mrb[0].mxu0
      %1569 = vmatprep.mubr.bf16.mxu0 0
      %1570 = vmatmul.mubr.bf16.gmra.mrb[0].mxu0 %v1444
      %v1571 = vpop.f32.mrb[0].mxu0
      %v1572 = vadd.f32 0.0, %v1571
      %v1573 = vpop.f32.mrb[0].mxu0
      %v1574 = vpop.f32.mrb[0].mxu0
      %v1575 = vadd.f32 0.0, %v1574
      %v1576 = vpop.f32.mrb[0].mxu0
      %1577 = vdwg.mxu0
      %v1578 = vadd.f32 %v1372, %v1484
      %v1579 = vadd.f32 %v1373, %v1487
      %v1580 = vadd.f32 %v1374, %v1492
      %v1581 = vadd.f32 %v1375, %v1495
      %v1582 = vadd.f32 %v1376, %v1500
      %v1583 = vadd.f32 %v1377, %v1503
      %v1584 = vadd.f32 %v1378, %v1508
      %v1585 = vadd.f32 %v1379, %v1511
      %v1586 = vadd.f32 %v1380, %v1516
      %v1587 = vadd.f32 %v1381, %v1519
      %v1588 = vadd.f32 %v1382, %v1524
      %v1589 = vadd.f32 %v1383, %v1527
      %v1590 = vadd.f32 %v1384, %v1532
      %v1591 = vadd.f32 %v1385, %v1535
      %v1592 = vadd.f32 %v1386, %v1540
      %v1593 = vadd.f32 %v1387, %v1543
      %v1594 = vadd.f32 %v1388, %v1548
      %v1595 = vadd.f32 %v1389, %v1551
      %v1596 = vadd.f32 %v1390, %v1556
      %v1597 = vadd.f32 %v1391, %v1559
      %v1598 = vadd.f32 %v1392, %v1564
      %v1599 = vadd.f32 %v1393, %v1567
      %v1600 = vadd.f32 %v1394, %v1572
      %v1601 = vadd.f32 %v1395, %v1575
      %v1606 = vrot.slane %v624, 1
      %v1607 = vrot.slane %v625, 1
      %v1608 = vsel %vm677, %v1606, %v1607
      %v1609 = vrot.slane %v626, 1
      %v1610 = vsel %vm677, %v1607, %v1609
      %v1611 = vrot.slane %v627, 1
      %v1612 = vsel %vm677, %v1609, %v1611
      %v1616 = vpack.c.bf16 %v689, %v687
      %v1617 = vpack.c.bf16 %v694, %v691
      %v1618 = vpack.c.bf16 %v698, %v696
      %v1619 = vpack.c.bf16 %v703, %v701
      %v1620 = vpack.c.bf16 %v708, %v705
      %v1621 = vpack.c.bf16 %v712, %v710
      %v1622 = vpack.c.bf16 %v717, %v715
      %v1623 = vpack.c.bf16 %v722, %v719
      %v1624 = vpack.c.bf16 %v726, %v724
      %v1625 = vpack.c.bf16 %v731, %v729
      %v1626 = vpack.c.bf16 %v1608, %v733
      %v1627 = vpack.c.bf16 %v1612, %v1610
      %s1628 = scalar_lea.vmem %s3, 8
      %v1629 = vld [vmem:[%s1628] sm:$0x3]
      %v1631 = vsel %vm516, %v1616, 0
      %v1634 = vsel %vm516, %v1617, 0
      %v1637 = vsel %vm516, %v1618, 0
      %v1640 = vsel %vm516, %v1619, 0
      %v1643 = vsel %vm516, %v1620, 0
      %v1646 = vsel %vm516, %v1621, 0
      %v1649 = vsel %vm516, %v1622, 0
      %v1652 = vsel %vm516, %v1623, 0
      %v1655 = vsel %vm516, %v1624, 0
      %v1658 = vsel %vm516, %v1625, 0
      %v1661 = vsel %vm516, %v1626, 0
      %v1664 = vsel %vm516, %v1627, 0
      %v1667 = vsel %vm808, %v1629, 0
      %1669 = vmatprep.subr.bf16.mxu0 0
      %1670 = vmatpush1.bf16.msra.mxu0 %v1667
      %1671 = vmatprep.subr.bf16.mxu0 0
      %1672 = vmatpush1.bf16.msra.mxu0 0
      %1673 = vmatprep.subr.bf16.mxu0 0
      %1674 = vmatpush1.bf16.msra.mxu0 0
      %1675 = vmatprep.subr.bf16.mxu0 0
      %1676 = vmatpush1.bf16.msra.mxu0 0
      %1677 = vmatprep.subr.bf16.mxu0 0
      %1678 = vmatpush1.bf16.msra.mxu0 0
      %1679 = vmatprep.subr.bf16.mxu0 0
      %1680 = vmatpush1.bf16.msra.mxu0 0
      %1681 = vmatprep.subr.bf16.mxu0 0
      %1682 = vmatpush1.bf16.msra.mxu0 0
      %1683 = vmatprep.subr.bf16.mxu0 0
      %1684 = vmatpush1.bf16.msra.mxu0 0
      %1685 = vmatprep.subr.bf16.mxu0 0
      %1686 = vmatpush1.bf16.msra.mxu0 0
      %1687 = vmatprep.subr.bf16.mxu0 0
      %1688 = vmatpush1.bf16.msra.mxu0 0
      %1689 = vmatprep.subr.bf16.mxu0 0
      %1690 = vmatpush1.bf16.msra.mxu0 0
      %1691 = vmatprep.subr.bf16.mxu0 0
      %1692 = vmatpush1.bf16.msra.mxu0 0
      %1693 = vmatprep.subr.bf16.mxu0 0
      %1694 = vmatpush1.bf16.msra.mxu0 0
      %1695 = vmatprep.subr.bf16.mxu0 0
      %1696 = vmatpush1.bf16.msra.mxu0 0
      %1697 = vmatprep.subr.bf16.mxu0 0
      %1698 = vmatpush1.bf16.msra.mxu0 0
      %1699 = vmatprep.subr.bf16.mxu0 0
      %1700 = vmatpush1.bf16.msra.mxu0 0
      %1701 = vmatprep.mubr.bf16.mxu0 0
      %1702 = vmatmul.mubr.bf16.gmra.mrb[0].mxu0 %v1631
      %v1703 = vpop.f32.mrb[0].mxu0
      %v1704 = vadd.f32 0.0, %v1703
      %v1705 = vpop.f32.mrb[0].mxu0
      %v1706 = vpop.f32.mrb[0].mxu0
      %v1707 = vadd.f32 0.0, %v1706
      %v1708 = vpop.f32.mrb[0].mxu0
      %1709 = vmatprep.mubr.bf16.mxu0 0
      %1710 = vmatmul.mubr.bf16.gmra.mrb[0].mxu0 %v1634
      %v1711 = vpop.f32.mrb[0].mxu0
      %v1712 = vadd.f32 0.0, %v1711
      %v1713 = vpop.f32.mrb[0].mxu0
      %v1714 = vpop.f32.mrb[0].mxu0
      %v1715 = vadd.f32 0.0, %v1714
      %v1716 = vpop.f32.mrb[0].mxu0
      %1717 = vmatprep.mubr.bf16.mxu0 0
      %1718 = vmatmul.mubr.bf16.gmra.mrb[0].mxu0 %v1637
      %v1719 = vpop.f32.mrb[0].mxu0
      %v1720 = vadd.f32 0.0, %v1719
      %v1721 = vpop.f32.mrb[0].mxu0
      %v1722 = vpop.f32.mrb[0].mxu0
      %v1723 = vadd.f32 0.0, %v1722
      %v1724 = vpop.f32.mrb[0].mxu0
      %1725 = vmatprep.mubr.bf16.mxu0 0
      %1726 = vmatmul.mubr.bf16.gmra.mrb[0].mxu0 %v1640
      %v1727 = vpop.f32.mrb[0].mxu0
      %v1728 = vadd.f32 0.0, %v1727
      %v1729 = vpop.f32.mrb[0].mxu0
      %v1730 = vpop.f32.mrb[0].mxu0
      %v1731 = vadd.f32 0.0, %v1730
      %v1732 = vpop.f32.mrb[0].mxu0
      %1733 = vmatprep.mubr.bf16.mxu0 0
      %1734 = vmatmul.mubr.bf16.gmra.mrb[0].mxu0 %v1643
      %v1735 = vpop.f32.mrb[0].mxu0
      %v1736 = vadd.f32 0.0, %v1735
      %v1737 = vpop.f32.mrb[0].mxu0
      %v1738 = vpop.f32.mrb[0].mxu0
      %v1739 = vadd.f32 0.0, %v1738
      %v1740 = vpop.f32.mrb[0].mxu0
      %1741 = vmatprep.mubr.bf16.mxu0 0
      %1742 = vmatmul.mubr.bf16.gmra.mrb[0].mxu0 %v1646
      %v1743 = vpop.f32.mrb[0].mxu0
      %v1744 = vadd.f32 0.0, %v1743
      %v1745 = vpop.f32.mrb[0].mxu0
      %v1746 = vpop.f32.mrb[0].mxu0
      %v1747 = vadd.f32 0.0, %v1746
      %v1748 = vpop.f32.mrb[0].mxu0
      %1749 = vmatprep.mubr.bf16.mxu0 0
      %1750 = vmatmul.mubr.bf16.gmra.mrb[0].mxu0 %v1649
      %v1751 = vpop.f32.mrb[0].mxu0
      %v1752 = vadd.f32 0.0, %v1751
      %v1753 = vpop.f32.mrb[0].mxu0
      %v1754 = vpop.f32.mrb[0].mxu0
      %v1755 = vadd.f32 0.0, %v1754
      %v1756 = vpop.f32.mrb[0].mxu0
      %1757 = vmatprep.mubr.bf16.mxu0 0
      %1758 = vmatmul.mubr.bf16.gmra.mrb[0].mxu0 %v1652
      %v1759 = vpop.f32.mrb[0].mxu0
      %v1760 = vadd.f32 0.0, %v1759
      %v1761 = vpop.f32.mrb[0].mxu0
      %v1762 = vpop.f32.mrb[0].mxu0
      %v1763 = vadd.f32 0.0, %v1762
      %v1764 = vpop.f32.mrb[0].mxu0
      %1765 = vmatprep.mubr.bf16.mxu0 0
      %1766 = vmatmul.mubr.bf16.gmra.mrb[0].mxu0 %v1655
      %v1767 = vpop.f32.mrb[0].mxu0
      %v1768 = vadd.f32 0.0, %v1767
      %v1769 = vpop.f32.mrb[0].mxu0
      %v1770 = vpop.f32.mrb[0].mxu0
      %v1771 = vadd.f32 0.0, %v1770
      %v1772 = vpop.f32.mrb[0].mxu0
      %1773 = vmatprep.mubr.bf16.mxu0 0
      %1774 = vmatmul.mubr.bf16.gmra.mrb[0].mxu0 %v1658
      %v1775 = vpop.f32.mrb[0].mxu0
      %v1776 = vadd.f32 0.0, %v1775
      %v1777 = vpop.f32.mrb[0].mxu0
      %v1778 = vpop.f32.mrb[0].mxu0
      %v1779 = vadd.f32 0.0, %v1778
      %v1780 = vpop.f32.mrb[0].mxu0
      %1781 = vmatprep.mubr.bf16.mxu0 0
      %1782 = vmatmul.mubr.bf16.gmra.mrb[0].mxu0 %v1661
      %v1783 = vpop.f32.mrb[0].mxu0
      %v1784 = vadd.f32 0.0, %v1783
      %v1785 = vpop.f32.mrb[0].mxu0
      %v1786 = vpop.f32.mrb[0].mxu0
      %v1787 = vadd.f32 0.0, %v1786
      %v1788 = vpop.f32.mrb[0].mxu0
      %1789 = vmatprep.mubr.bf16.mxu0 0
      %1790 = vmatmul.mubr.bf16.gmra.mrb[0].mxu0 %v1664
      %v1791 = vpop.f32.mrb[0].mxu0
      %v1792 = vadd.f32 0.0, %v1791
      %v1793 = vpop.f32.mrb[0].mxu0
      %v1794 = vpop.f32.mrb[0].mxu0
      %v1795 = vadd.f32 0.0, %v1794
      %v1796 = vpop.f32.mrb[0].mxu0
      %1797 = vdwg.mxu0
      %v1798 = vadd.f32 %v1578, %v1704
      %v1799 = vadd.f32 %v1579, %v1707
      %v1800 = vadd.f32 %v1580, %v1712
      %v1801 = vadd.f32 %v1581, %v1715
      %v1802 = vadd.f32 %v1582, %v1720
      %v1803 = vadd.f32 %v1583, %v1723
      %v1804 = vadd.f32 %v1584, %v1728
      %v1805 = vadd.f32 %v1585, %v1731
      %v1806 = vadd.f32 %v1586, %v1736
      %v1807 = vadd.f32 %v1587, %v1739
      %v1808 = vadd.f32 %v1588, %v1744
      %v1809 = vadd.f32 %v1589, %v1747
      %v1810 = vadd.f32 %v1590, %v1752
      %v1811 = vadd.f32 %v1591, %v1755
      %v1812 = vadd.f32 %v1592, %v1760
      %v1813 = vadd.f32 %v1593, %v1763
      %v1814 = vadd.f32 %v1594, %v1768
      %v1815 = vadd.f32 %v1595, %v1771
      %v1816 = vadd.f32 %v1596, %v1776
      %v1817 = vadd.f32 %v1597, %v1779
      %v1818 = vadd.f32 %v1598, %v1784
      %v1819 = vadd.f32 %v1599, %v1787
      %v1820 = vadd.f32 %v1600, %v1792
      %v1821 = vadd.f32 %v1601, %v1795
      %v1822 = vrot.slane %v624, 2
      %v1823 = vrot.slane %v625, 2
      %v1824 = vsel %vm1109, %v1822, %v1823
      %v1825 = vrot.slane %v626, 2
      %v1826 = vsel %vm1109, %v1823, %v1825
      %v1827 = vrot.slane %v627, 2
      %v1828 = vsel %vm1109, %v1825, %v1827
      %v1832 = vpack.c.bf16 %v1121, %v1119
      %v1833 = vpack.c.bf16 %v1126, %v1123
      %v1834 = vpack.c.bf16 %v1130, %v1128
      %v1835 = vpack.c.bf16 %v1135, %v1133
      %v1836 = vpack.c.bf16 %v1140, %v1137
      %v1837 = vpack.c.bf16 %v1144, %v1142
      %v1838 = vpack.c.bf16 %v1149, %v1147
      %v1839 = vpack.c.bf16 %v1154, %v1151
      %v1840 = vpack.c.bf16 %v1158, %v1156
      %v1841 = vpack.c.bf16 %v1163, %v1161
      %v1842 = vpack.c.bf16 %v1824, %v1165
      %v1843 = vpack.c.bf16 %v1828, %v1826
      %s1844 = scalar_lea.vmem %s3, 10
      %v1845 = vld [vmem:[%s1844] sm:$0x3]
      %v1847 = vsel %vm516, %v1832, 0
      %v1850 = vsel %vm516, %v1833, 0
      %v1853 = vsel %vm516, %v1834, 0
      %v1856 = vsel %vm516, %v1835, 0
      %v1859 = vsel %vm516, %v1836, 0
      %v1862 = vsel %vm516, %v1837, 0
      %v1865 = vsel %vm516, %v1838, 0
      %v1868 = vsel %vm516, %v1839, 0
      %v1871 = vsel %vm516, %v1840, 0
      %v1874 = vsel %vm516, %v1841, 0
      %v1877 = vsel %vm516, %v1842, 0
      %v1880 = vsel %vm516, %v1843, 0
      %v1883 = vsel %vm808, %v1845, 0
      %1885 = vmatprep.subr.bf16.mxu0 0
      %1886 = vmatpush1.bf16.msra.mxu0 %v1883
      %1887 = vmatprep.subr.bf16.mxu0 0
      %1888 = vmatpush1.bf16.msra.mxu0 0
      %1889 = vmatprep.subr.bf16.mxu0 0
      %1890 = vmatpush1.bf16.msra.mxu0 0
      %1891 = vmatprep.subr.bf16.mxu0 0
      %1892 = vmatpush1.bf16.msra.mxu0 0
      %1893 = vmatprep.subr.bf16.mxu0 0
      %1894 = vmatpush1.bf16.msra.mxu0 0
      %1895 = vmatprep.subr.bf16.mxu0 0
      %1896 = vmatpush1.bf16.msra.mxu0 0
      %1897 = vmatprep.subr.bf16.mxu0 0
      %1898 = vmatpush1.bf16.msra.mxu0 0
      %1899 = vmatprep.subr.bf16.mxu0 0
      %1900 = vmatpush1.bf16.msra.mxu0 0
      %1901 = vmatprep.subr.bf16.mxu0 0
      %1902 = vmatpush1.bf16.msra.mxu0 0
      %1903 = vmatprep.subr.bf16.mxu0 0
      %1904 = vmatpush1.bf16.msra.mxu0 0
      %1905 = vmatprep.subr.bf16.mxu0 0
      %1906 = vmatpush1.bf16.msra.mxu0 0
      %1907 = vmatprep.subr.bf16.mxu0 0
      %1908 = vmatpush1.bf16.msra.mxu0 0
      %1909 = vmatprep.subr.bf16.mxu0 0
      %1910 = vmatpush1.bf16.msra.mxu0 0
      %1911 = vmatprep.subr.bf16.mxu0 0
      %1912 = vmatpush1.bf16.msra.mxu0 0
      %1913 = vmatprep.subr.bf16.mxu0 0
      %1914 = vmatpush1.bf16.msra.mxu0 0
      %1915 = vmatprep.subr.bf16.mxu0 0
      %1916 = vmatpush1.bf16.msra.mxu0 0
      %1917 = vmatprep.mubr.bf16.mxu0 0
      %1918 = vmatmul.mubr.bf16.gmra.mrb[0].mxu0 %v1847
      %v1919 = vpop.f32.mrb[0].mxu0
      %v1920 = vadd.f32 0.0, %v1919
      %v1921 = vpop.f32.mrb[0].mxu0
      %v1922 = vpop.f32.mrb[0].mxu0
      %v1923 = vadd.f32 0.0, %v1922
      %v1924 = vpop.f32.mrb[0].mxu0
      %1925 = vmatprep.mubr.bf16.mxu0 0
      %1926 = vmatmul.mubr.bf16.gmra.mrb[0].mxu0 %v1850
      %v1927 = vpop.f32.mrb[0].mxu0
      %v1928 = vadd.f32 0.0, %v1927
      %v1929 = vpop.f32.mrb[0].mxu0
      %v1930 = vpop.f32.mrb[0].mxu0
      %v1931 = vadd.f32 0.0, %v1930
      %v1932 = vpop.f32.mrb[0].mxu0
      %1933 = vmatprep.mubr.bf16.mxu0 0
      %1934 = vmatmul.mubr.bf16.gmra.mrb[0].mxu0 %v1853
      %v1935 = vpop.f32.mrb[0].mxu0
      %v1936 = vadd.f32 0.0, %v1935
      %v1937 = vpop.f32.mrb[0].mxu0
      %v1938 = vpop.f32.mrb[0].mxu0
      %v1939 = vadd.f32 0.0, %v1938
      %v1940 = vpop.f32.mrb[0].mxu0
      %1941 = vmatprep.mubr.bf16.mxu0 0
      %1942 = vmatmul.mubr.bf16.gmra.mrb[0].mxu0 %v1856
      %v1943 = vpop.f32.mrb[0].mxu0
      %v1944 = vadd.f32 0.0, %v1943
      %v1945 = vpop.f32.mrb[0].mxu0
      %v1946 = vpop.f32.mrb[0].mxu0
      %v1947 = vadd.f32 0.0, %v1946
      %v1948 = vpop.f32.mrb[0].mxu0
      %1949 = vmatprep.mubr.bf16.mxu0 0
      %1950 = vmatmul.mubr.bf16.gmra.mrb[0].mxu0 %v1859
      %v1951 = vpop.f32.mrb[0].mxu0
      %v1952 = vadd.f32 0.0, %v1951
      %v1953 = vpop.f32.mrb[0].mxu0
      %v1954 = vpop.f32.mrb[0].mxu0
      %v1955 = vadd.f32 0.0, %v1954
      %v1956 = vpop.f32.mrb[0].mxu0
      %1957 = vmatprep.mubr.bf16.mxu0 0
      %1958 = vmatmul.mubr.bf16.gmra.mrb[0].mxu0 %v1862
      %v1959 = vpop.f32.mrb[0].mxu0
      %v1960 = vadd.f32 0.0, %v1959
      %v1961 = vpop.f32.mrb[0].mxu0
      %v1962 = vpop.f32.mrb[0].mxu0
      %v1963 = vadd.f32 0.0, %v1962
      %v1964 = vpop.f32.mrb[0].mxu0
      %1965 = vmatprep.mubr.bf16.mxu0 0
      %1966 = vmatmul.mubr.bf16.gmra.mrb[0].mxu0 %v1865
      %v1967 = vpop.f32.mrb[0].mxu0
      %v1968 = vadd.f32 0.0, %v1967
      %v1969 = vpop.f32.mrb[0].mxu0
      %v1970 = vpop.f32.mrb[0].mxu0
      %v1971 = vadd.f32 0.0, %v1970
      %v1972 = vpop.f32.mrb[0].mxu0
      %1973 = vmatprep.mubr.bf16.mxu0 0
      %1974 = vmatmul.mubr.bf16.gmra.mrb[0].mxu0 %v1868
      %v1975 = vpop.f32.mrb[0].mxu0
      %v1976 = vadd.f32 0.0, %v1975
      %v1977 = vpop.f32.mrb[0].mxu0
      %v1978 = vpop.f32.mrb[0].mxu0
      %v1979 = vadd.f32 0.0, %v1978
      %v1980 = vpop.f32.mrb[0].mxu0
      %1981 = vmatprep.mubr.bf16.mxu0 0
      %1982 = vmatmul.mubr.bf16.gmra.mrb[0].mxu0 %v1871
      %v1983 = vpop.f32.mrb[0].mxu0
      %v1984 = vadd.f32 0.0, %v1983
      %v1985 = vpop.f32.mrb[0].mxu0
      %v1986 = vpop.f32.mrb[0].mxu0
      %v1987 = vadd.f32 0.0, %v1986
      %v1988 = vpop.f32.mrb[0].mxu0
      %1989 = vmatprep.mubr.bf16.mxu0 0
      %1990 = vmatmul.mubr.bf16.gmra.mrb[0].mxu0 %v1874
      %v1991 = vpop.f32.mrb[0].mxu0
      %v1992 = vadd.f32 0.0, %v1991
      %v1993 = vpop.f32.mrb[0].mxu0
      %v1994 = vpop.f32.mrb[0].mxu0
      %v1995 = vadd.f32 0.0, %v1994
      %v1996 = vpop.f32.mrb[0].mxu0
      %1997 = vmatprep.mubr.bf16.mxu0 0
      %1998 = vmatmul.mubr.bf16.gmra.mrb[0].mxu0 %v1877
      %v1999 = vpop.f32.mrb[0].mxu0
      %v2000 = vadd.f32 0.0, %v1999
      %v2001 = vpop.f32.mrb[0].mxu0
      %v2002 = vpop.f32.mrb[0].mxu0
      %v2003 = vadd.f32 0.0, %v2002
      %v2004 = vpop.f32.mrb[0].mxu0
      %2005 = vmatprep.mubr.bf16.mxu0 0
      %2006 = vmatmul.mubr.bf16.gmra.mrb[0].mxu0 %v1880
      %v2007 = vpop.f32.mrb[0].mxu0
      %v2008 = vadd.f32 0.0, %v2007
      %v2009 = vpop.f32.mrb[0].mxu0
      %v2010 = vpop.f32.mrb[0].mxu0
      %v2011 = vadd.f32 0.0, %v2010
      %v2012 = vpop.f32.mrb[0].mxu0
      %2013 = vdwg.mxu0
      %v2014 = vadd.f32 %v1798, %v1920
      %v2015 = vadd.f32 %v1799, %v1923
      %v2016 = vadd.f32 %v1800, %v1928
      %v2017 = vadd.f32 %v1801, %v1931
      %v2018 = vadd.f32 %v1802, %v1936
      %v2019 = vadd.f32 %v1803, %v1939
      %v2020 = vadd.f32 %v1804, %v1944
      %v2021 = vadd.f32 %v1805, %v1947
      %v2022 = vadd.f32 %v1806, %v1952
      %v2023 = vadd.f32 %v1807, %v1955
      %v2024 = vadd.f32 %v1808, %v1960
      %v2025 = vadd.f32 %v1809, %v1963
      %v2026 = vadd.f32 %v1810, %v1968
      %v2027 = vadd.f32 %v1811, %v1971
      %v2028 = vadd.f32 %v1812, %v1976
      %v2029 = vadd.f32 %v1813, %v1979
      %v2030 = vadd.f32 %v1814, %v1984
      %v2031 = vadd.f32 %v1815, %v1987
      %v2032 = vadd.f32 %v1816, %v1992
      %v2033 = vadd.f32 %v1817, %v1995
      %v2034 = vadd.f32 %v1818, %v2000
      %v2035 = vadd.f32 %v1819, %v2003
      %v2036 = vadd.f32 %v1820, %v2008
      %v2037 = vadd.f32 %v1821, %v2011
      %v2038 = vpack.c.bf16 %v625, %v624
      %v2039 = vpack.c.bf16 %v628, %v626
      %v2040 = vpack.c.bf16 %v630, %v629
      %s2041 = scalar_lea.vmem %s3, 12
      %v2042 = vld [vmem:[%s2041] sm:$0x3]
      %v2044 = vsel %vm516, %v2038, 0
      %v2047 = vsel %vm516, %v2039, 0
      %v2050 = vsel %vm516, %v2040, 0
      %v2053 = vsel %vm808, %v2042, 0
      %2055 = vmatprep.subr.bf16.mxu0 0
      %2056 = vmatpush1.bf16.msra.mxu0 %v2053
      %2057 = vmatprep.subr.bf16.mxu0 0
      %2058 = vmatpush1.bf16.msra.mxu0 0
      %2059 = vmatprep.subr.bf16.mxu0 0
      %2060 = vmatpush1.bf16.msra.mxu0 0
      %2061 = vmatprep.subr.bf16.mxu0 0
      %2062 = vmatpush1.bf16.msra.mxu0 0
      %2063 = vmatprep.subr.bf16.mxu0 0
      %2064 = vmatpush1.bf16.msra.mxu0 0
      %2065 = vmatprep.subr.bf16.mxu0 0
      %2066 = vmatpush1.bf16.msra.mxu0 0
      %2067 = vmatprep.subr.bf16.mxu0 0
      %2068 = vmatpush1.bf16.msra.mxu0 0
      %2069 = vmatprep.subr.bf16.mxu0 0
      %2070 = vmatpush1.bf16.msra.mxu0 0
      %2071 = vmatprep.subr.bf16.mxu0 0
      %2072 = vmatpush1.bf16.msra.mxu0 0
      %2073 = vmatprep.subr.bf16.mxu0 0
      %2074 = vmatpush1.bf16.msra.mxu0 0
      %2075 = vmatprep.subr.bf16.mxu0 0
      %2076 = vmatpush1.bf16.msra.mxu0 0
      %2077 = vmatprep.subr.bf16.mxu0 0
      %2078 = vmatpush1.bf16.msra.mxu0 0
      %2079 = vmatprep.subr.bf16.mxu0 0
      %2080 = vmatpush1.bf16.msra.mxu0 0
      %2081 = vmatprep.subr.bf16.mxu0 0
      %2082 = vmatpush1.bf16.msra.mxu0 0
      %2083 = vmatprep.subr.bf16.mxu0 0
      %2084 = vmatpush1.bf16.msra.mxu0 0
      %2085 = vmatprep.subr.bf16.mxu0 0
      %2086 = vmatpush1.bf16.msra.mxu0 0
      %2087 = vmatprep.mubr.bf16.mxu0 0
      %2088 = vmatmul.mubr.bf16.gmra.mrb[0].mxu0 %v951
      %v2089 = vpop.f32.mrb[0].mxu0
      %v2090 = vadd.f32 0.0, %v2089
      %v2091 = vpop.f32.mrb[0].mxu0
      %v2092 = vpop.f32.mrb[0].mxu0
      %v2093 = vadd.f32 0.0, %v2092
      %v2094 = vpop.f32.mrb[0].mxu0
      %2095 = vmatprep.mubr.bf16.mxu0 0
      %2096 = vmatmul.mubr.bf16.gmra.mrb[0].mxu0 %v954
      %v2097 = vpop.f32.mrb[0].mxu0
      %v2098 = vadd.f32 0.0, %v2097
      %v2099 = vpop.f32.mrb[0].mxu0
      %v2100 = vpop.f32.mrb[0].mxu0
      %v2101 = vadd.f32 0.0, %v2100
      %v2102 = vpop.f32.mrb[0].mxu0
      %2103 = vmatprep.mubr.bf16.mxu0 0
      %2104 = vmatmul.mubr.bf16.gmra.mrb[0].mxu0 %v957
      %v2105 = vpop.f32.mrb[0].mxu0
      %v2106 = vadd.f32 0.0, %v2105
      %v2107 = vpop.f32.mrb[0].mxu0
      %v2108 = vpop.f32.mrb[0].mxu0
      %v2109 = vadd.f32 0.0, %v2108
      %v2110 = vpop.f32.mrb[0].mxu0
      %2111 = vmatprep.mubr.bf16.mxu0 0
      %2112 = vmatmul.mubr.bf16.gmra.mrb[0].mxu0 %v960
      %v2113 = vpop.f32.mrb[0].mxu0
      %v2114 = vadd.f32 0.0, %v2113
      %v2115 = vpop.f32.mrb[0].mxu0
      %v2116 = vpop.f32.mrb[0].mxu0
      %v2117 = vadd.f32 0.0, %v2116
      %v2118 = vpop.f32.mrb[0].mxu0
      %2119 = vmatprep.mubr.bf16.mxu0 0
      %2120 = vmatmul.mubr.bf16.gmra.mrb[0].mxu0 %v963
      %v2121 = vpop.f32.mrb[0].mxu0
      %v2122 = vadd.f32 0.0, %v2121
      %v2123 = vpop.f32.mrb[0].mxu0
      %v2124 = vpop.f32.mrb[0].mxu0
      %v2125 = vadd.f32 0.0, %v2124
      %v2126 = vpop.f32.mrb[0].mxu0
      %2127 = vmatprep.mubr.bf16.mxu0 0
      %2128 = vmatmul.mubr.bf16.gmra.mrb[0].mxu0 %v966
      %v2129 = vpop.f32.mrb[0].mxu0
      %v2130 = vadd.f32 0.0, %v2129
      %v2131 = vpop.f32.mrb[0].mxu0
      %v2132 = vpop.f32.mrb[0].mxu0
      %v2133 = vadd.f32 0.0, %v2132
      %v2134 = vpop.f32.mrb[0].mxu0
      %2135 = vmatprep.mubr.bf16.mxu0 0
      %2136 = vmatmul.mubr.bf16.gmra.mrb[0].mxu0 %v969
      %v2137 = vpop.f32.mrb[0].mxu0
      %v2138 = vadd.f32 0.0, %v2137
      %v2139 = vpop.f32.mrb[0].mxu0
      %v2140 = vpop.f32.mrb[0].mxu0
      %v2141 = vadd.f32 0.0, %v2140
      %v2142 = vpop.f32.mrb[0].mxu0
      %2143 = vmatprep.mubr.bf16.mxu0 0
      %2144 = vmatmul.mubr.bf16.gmra.mrb[0].mxu0 %v972
      %v2145 = vpop.f32.mrb[0].mxu0
      %v2146 = vadd.f32 0.0, %v2145
      %v2147 = vpop.f32.mrb[0].mxu0
      %v2148 = vpop.f32.mrb[0].mxu0
      %v2149 = vadd.f32 0.0, %v2148
      %v2150 = vpop.f32.mrb[0].mxu0
      %2151 = vmatprep.mubr.bf16.mxu0 0
      %2152 = vmatmul.mubr.bf16.gmra.mrb[0].mxu0 %v975
      %v2153 = vpop.f32.mrb[0].mxu0
      %v2154 = vadd.f32 0.0, %v2153
      %v2155 = vpop.f32.mrb[0].mxu0
      %v2156 = vpop.f32.mrb[0].mxu0
      %v2157 = vadd.f32 0.0, %v2156
      %v2158 = vpop.f32.mrb[0].mxu0
      %2159 = vmatprep.mubr.bf16.mxu0 0
      %2160 = vmatmul.mubr.bf16.gmra.mrb[0].mxu0 %v2044
      %v2161 = vpop.f32.mrb[0].mxu0
      %v2162 = vadd.f32 0.0, %v2161
      %v2163 = vpop.f32.mrb[0].mxu0
      %v2164 = vpop.f32.mrb[0].mxu0
      %v2165 = vadd.f32 0.0, %v2164
      %v2166 = vpop.f32.mrb[0].mxu0
      %2167 = vmatprep.mubr.bf16.mxu0 0
      %2168 = vmatmul.mubr.bf16.gmra.mrb[0].mxu0 %v2047
      %v2169 = vpop.f32.mrb[0].mxu0
      %v2170 = vadd.f32 0.0, %v2169
      %v2171 = vpop.f32.mrb[0].mxu0
      %v2172 = vpop.f32.mrb[0].mxu0
      %v2173 = vadd.f32 0.0, %v2172
      %v2174 = vpop.f32.mrb[0].mxu0
      %2175 = vmatprep.mubr.bf16.mxu0 0
      %2176 = vmatmul.mubr.bf16.gmra.mrb[0].mxu0 %v2050
      %v2177 = vpop.f32.mrb[0].mxu0
      %v2178 = vadd.f32 0.0, %v2177
      %v2179 = vpop.f32.mrb[0].mxu0
      %v2180 = vpop.f32.mrb[0].mxu0
      %v2181 = vadd.f32 0.0, %v2180
      %v2182 = vpop.f32.mrb[0].mxu0
      %2183 = vdwg.mxu0
      %v2184 = vadd.f32 %v2014, %v2090
      %v2185 = vadd.f32 %v2015, %v2093
      %v2186 = vadd.f32 %v2016, %v2098
      %v2187 = vadd.f32 %v2017, %v2101
      %v2188 = vadd.f32 %v2018, %v2106
      %v2189 = vadd.f32 %v2019, %v2109
      %v2190 = vadd.f32 %v2020, %v2114
      %v2191 = vadd.f32 %v2021, %v2117
      %v2192 = vadd.f32 %v2022, %v2122
      %v2193 = vadd.f32 %v2023, %v2125
      %v2194 = vadd.f32 %v2024, %v2130
      %v2195 = vadd.f32 %v2025, %v2133
      %v2196 = vadd.f32 %v2026, %v2138
      %v2197 = vadd.f32 %v2027, %v2141
      %v2198 = vadd.f32 %v2028, %v2146
      %v2199 = vadd.f32 %v2029, %v2149
      %v2200 = vadd.f32 %v2030, %v2154
      %v2201 = vadd.f32 %v2031, %v2157
      %v2202 = vadd.f32 %v2032, %v2162
      %v2203 = vadd.f32 %v2033, %v2165
      %v2204 = vadd.f32 %v2034, %v2170
      %v2205 = vadd.f32 %v2035, %v2173
      %v2206 = vadd.f32 %v2036, %v2178
      %v2207 = vadd.f32 %v2037, %v2181
      %v2212 = vrot.slane %v628, 1
      %v2213 = vrot.slane %v629, 1
      %v2214 = vsel %vm677, %v2212, %v2213
      %v2215 = vrot.slane %v630, 1
      %v2216 = vsel %vm677, %v2213, %v2215
      %v2217 = vrot.slane %v631, 1
      %v2218 = vsel %vm677, %v2215, %v2217
      %v2222 = vpack.c.bf16 %v1610, %v1608
      %v2223 = vpack.c.bf16 %v2214, %v1612
      %v2224 = vpack.c.bf16 %v2218, %v2216
      %s2225 = scalar_lea.vmem %s3, 14
      %v2226 = vld [vmem:[%s2225] sm:$0x3]
      %v2228 = vsel %vm516, %v2222, 0
      %v2231 = vsel %vm516, %v2223, 0
      %v2234 = vsel %vm516, %v2224, 0
      %v2237 = vsel %vm808, %v2226, 0
      %2239 = vmatprep.subr.bf16.mxu0 0
      %2240 = vmatpush1.bf16.msra.mxu0 %v2237
      %2241 = vmatprep.subr.bf16.mxu0 0
      %2242 = vmatpush1.bf16.msra.mxu0 0
      %2243 = vmatprep.subr.bf16.mxu0 0
      %2244 = vmatpush1.bf16.msra.mxu0 0
      %2245 = vmatprep.subr.bf16.mxu0 0
      %2246 = vmatpush1.bf16.msra.mxu0 0
      %2247 = vmatprep.subr.bf16.mxu0 0
      %2248 = vmatpush1.bf16.msra.mxu0 0
      %2249 = vmatprep.subr.bf16.mxu0 0
      %2250 = vmatpush1.bf16.msra.mxu0 0
      %2251 = vmatprep.subr.bf16.mxu0 0
      %2252 = vmatpush1.bf16.msra.mxu0 0
      %2253 = vmatprep.subr.bf16.mxu0 0
      %2254 = vmatpush1.bf16.msra.mxu0 0
      %2255 = vmatprep.subr.bf16.mxu0 0
      %2256 = vmatpush1.bf16.msra.mxu0 0
      %2257 = vmatprep.subr.bf16.mxu0 0
      %2258 = vmatpush1.bf16.msra.mxu0 0
      %2259 = vmatprep.subr.bf16.mxu0 0
      %2260 = vmatpush1.bf16.msra.mxu0 0
      %2261 = vmatprep.subr.bf16.mxu0 0
      %2262 = vmatpush1.bf16.msra.mxu0 0
      %2263 = vmatprep.subr.bf16.mxu0 0
      %2264 = vmatpush1.bf16.msra.mxu0 0
      %2265 = vmatprep.subr.bf16.mxu0 0
      %2266 = vmatpush1.bf16.msra.mxu0 0
      %2267 = vmatprep.subr.bf16.mxu0 0
      %2268 = vmatpush1.bf16.msra.mxu0 0
      %2269 = vmatprep.subr.bf16.mxu0 0
      %2270 = vmatpush1.bf16.msra.mxu0 0
      %2271 = vmatprep.mubr.bf16.mxu0 0
      %2272 = vmatmul.mubr.bf16.gmra.mrb[0].mxu0 %v782
      %v2273 = vpop.f32.mrb[0].mxu0
      %v2274 = vadd.f32 0.0, %v2273
      %v2275 = vpop.f32.mrb[0].mxu0
      %v2276 = vpop.f32.mrb[0].mxu0
      %v2277 = vadd.f32 0.0, %v2276
      %v2278 = vpop.f32.mrb[0].mxu0
      %2279 = vmatprep.mubr.bf16.mxu0 0
      %2280 = vmatmul.mubr.bf16.gmra.mrb[0].mxu0 %v785
      %v2281 = vpop.f32.mrb[0].mxu0
      %v2282 = vadd.f32 0.0, %v2281
      %v2283 = vpop.f32.mrb[0].mxu0
      %v2284 = vpop.f32.mrb[0].mxu0
      %v2285 = vadd.f32 0.0, %v2284
      %v2286 = vpop.f32.mrb[0].mxu0
      %2287 = vmatprep.mubr.bf16.mxu0 0
      %2288 = vmatmul.mubr.bf16.gmra.mrb[0].mxu0 %v788
      %v2289 = vpop.f32.mrb[0].mxu0
      %v2290 = vadd.f32 0.0, %v2289
      %v2291 = vpop.f32.mrb[0].mxu0
      %v2292 = vpop.f32.mrb[0].mxu0
      %v2293 = vadd.f32 0.0, %v2292
      %v2294 = vpop.f32.mrb[0].mxu0
      %2295 = vmatprep.mubr.bf16.mxu0 0
      %2296 = vmatmul.mubr.bf16.gmra.mrb[0].mxu0 %v791
      %v2297 = vpop.f32.mrb[0].mxu0
      %v2298 = vadd.f32 0.0, %v2297
      %v2299 = vpop.f32.mrb[0].mxu0
      %v2300 = vpop.f32.mrb[0].mxu0
      %v2301 = vadd.f32 0.0, %v2300
      %v2302 = vpop.f32.mrb[0].mxu0
      %2303 = vmatprep.mubr.bf16.mxu0 0
      %2304 = vmatmul.mubr.bf16.gmra.mrb[0].mxu0 %v794
      %v2305 = vpop.f32.mrb[0].mxu0
      %v2306 = vadd.f32 0.0, %v2305
      %v2307 = vpop.f32.mrb[0].mxu0
      %v2308 = vpop.f32.mrb[0].mxu0
      %v2309 = vadd.f32 0.0, %v2308
      %v2310 = vpop.f32.mrb[0].mxu0
      %2311 = vmatprep.mubr.bf16.mxu0 0
      %2312 = vmatmul.mubr.bf16.gmra.mrb[0].mxu0 %v797
      %v2313 = vpop.f32.mrb[0].mxu0
      %v2314 = vadd.f32 0.0, %v2313
      %v2315 = vpop.f32.mrb[0].mxu0
      %v2316 = vpop.f32.mrb[0].mxu0
      %v2317 = vadd.f32 0.0, %v2316
      %v2318 = vpop.f32.mrb[0].mxu0
      %2319 = vmatprep.mubr.bf16.mxu0 0
      %2320 = vmatmul.mubr.bf16.gmra.mrb[0].mxu0 %v800
      %v2321 = vpop.f32.mrb[0].mxu0
      %v2322 = vadd.f32 0.0, %v2321
      %v2323 = vpop.f32.mrb[0].mxu0
      %v2324 = vpop.f32.mrb[0].mxu0
      %v2325 = vadd.f32 0.0, %v2324
      %v2326 = vpop.f32.mrb[0].mxu0
      %2327 = vmatprep.mubr.bf16.mxu0 0
      %2328 = vmatmul.mubr.bf16.gmra.mrb[0].mxu0 %v803
      %v2329 = vpop.f32.mrb[0].mxu0
      %v2330 = vadd.f32 0.0, %v2329
      %v2331 = vpop.f32.mrb[0].mxu0
      %v2332 = vpop.f32.mrb[0].mxu0
      %v2333 = vadd.f32 0.0, %v2332
      %v2334 = vpop.f32.mrb[0].mxu0
      %2335 = vmatprep.mubr.bf16.mxu0 0
      %2336 = vmatmul.mubr.bf16.gmra.mrb[0].mxu0 %v806
      %v2337 = vpop.f32.mrb[0].mxu0
      %v2338 = vadd.f32 0.0, %v2337
      %v2339 = vpop.f32.mrb[0].mxu0
      %v2340 = vpop.f32.mrb[0].mxu0
      %v2341 = vadd.f32 0.0, %v2340
      %v2342 = vpop.f32.mrb[0].mxu0
      %2343 = vmatprep.mubr.bf16.mxu0 0
      %2344 = vmatmul.mubr.bf16.gmra.mrb[0].mxu0 %v2228
      %v2345 = vpop.f32.mrb[0].mxu0
      %v2346 = vadd.f32 0.0, %v2345
      %v2347 = vpop.f32.mrb[0].mxu0
      %v2348 = vpop.f32.mrb[0].mxu0
      %v2349 = vadd.f32 0.0, %v2348
      %v2350 = vpop.f32.mrb[0].mxu0
      %2351 = vmatprep.mubr.bf16.mxu0 0
      %2352 = vmatmul.mubr.bf16.gmra.mrb[0].mxu0 %v2231
      %v2353 = vpop.f32.mrb[0].mxu0
      %v2354 = vadd.f32 0.0, %v2353
      %v2355 = vpop.f32.mrb[0].mxu0
      %v2356 = vpop.f32.mrb[0].mxu0
      %v2357 = vadd.f32 0.0, %v2356
      %v2358 = vpop.f32.mrb[0].mxu0
      %2359 = vmatprep.mubr.bf16.mxu0 0
      %2360 = vmatmul.mubr.bf16.gmra.mrb[0].mxu0 %v2234
      %v2361 = vpop.f32.mrb[0].mxu0
      %v2362 = vadd.f32 0.0, %v2361
      %v2363 = vpop.f32.mrb[0].mxu0
      %v2364 = vpop.f32.mrb[0].mxu0
      %v2365 = vadd.f32 0.0, %v2364
      %v2366 = vpop.f32.mrb[0].mxu0
      %2367 = vdwg.mxu0
      %v2368 = vadd.f32 %v2184, %v2274
      %v2369 = vadd.f32 %v2185, %v2277
      %v2370 = vadd.f32 %v2186, %v2282
      %v2371 = vadd.f32 %v2187, %v2285
      %v2372 = vadd.f32 %v2188, %v2290
      %v2373 = vadd.f32 %v2189, %v2293
      %v2374 = vadd.f32 %v2190, %v2298
      %v2375 = vadd.f32 %v2191, %v2301
      %v2376 = vadd.f32 %v2192, %v2306
      %v2377 = vadd.f32 %v2193, %v2309
      %v2378 = vadd.f32 %v2194, %v2314
      %v2379 = vadd.f32 %v2195, %v2317
      %v2380 = vadd.f32 %v2196, %v2322
      %v2381 = vadd.f32 %v2197, %v2325
      %v2382 = vadd.f32 %v2198, %v2330
      %v2383 = vadd.f32 %v2199, %v2333
      %v2384 = vadd.f32 %v2200, %v2338
      %v2385 = vadd.f32 %v2201, %v2341
      %v2386 = vadd.f32 %v2202, %v2346
      %v2387 = vadd.f32 %v2203, %v2349
      %v2388 = vadd.f32 %v2204, %v2354
      %v2389 = vadd.f32 %v2205, %v2357
      %v2390 = vadd.f32 %v2206, %v2362
      %v2391 = vadd.f32 %v2207, %v2365
      %v2392 = vrot.slane %v628, 2
      %v2393 = vrot.slane %v629, 2
      %v2394 = vsel %vm1109, %v2392, %v2393
      %v2395 = vrot.slane %v630, 2
      %v2396 = vsel %vm1109, %v2393, %v2395
      %v2397 = vrot.slane %v631, 2
      %v2398 = vsel %vm1109, %v2395, %v2397
      %v2402 = vpack.c.bf16 %v1826, %v1824
      %v2403 = vpack.c.bf16 %v2394, %v1828
      %v2404 = vpack.c.bf16 %v2398, %v2396
      %s2405 = scalar_lea.vmem %s3, 16
      %v2406 = vld [vmem:[%s2405] sm:$0x3]
      %v2408 = vsel %vm516, %v2402, 0
      %v2411 = vsel %vm516, %v2403, 0
      %v2414 = vsel %vm516, %v2404, 0
      %v2417 = vsel %vm808, %v2406, 0
      %2419 = vmatprep.subr.bf16.mxu0 0
      %2420 = vmatpush1.bf16.msra.mxu0 %v2417
      %2421 = vmatprep.subr.bf16.mxu0 0
      %2422 = vmatpush1.bf16.msra.mxu0 0
      %2423 = vmatprep.subr.bf16.mxu0 0
      %2424 = vmatpush1.bf16.msra.mxu0 0
      %2425 = vmatprep.subr.bf16.mxu0 0
      %2426 = vmatpush1.bf16.msra.mxu0 0
      %2427 = vmatprep.subr.bf16.mxu0 0
      %2428 = vmatpush1.bf16.msra.mxu0 0
      %2429 = vmatprep.subr.bf16.mxu0 0
      %2430 = vmatpush1.bf16.msra.mxu0 0
      %2431 = vmatprep.subr.bf16.mxu0 0
      %2432 = vmatpush1.bf16.msra.mxu0 0
      %2433 = vmatprep.subr.bf16.mxu0 0
      %2434 = vmatpush1.bf16.msra.mxu0 0
      %2435 = vmatprep.subr.bf16.mxu0 0
      %2436 = vmatpush1.bf16.msra.mxu0 0
      %2437 = vmatprep.subr.bf16.mxu0 0
      %2438 = vmatpush1.bf16.msra.mxu0 0
      %2439 = vmatprep.subr.bf16.mxu0 0
      %2440 = vmatpush1.bf16.msra.mxu0 0
      %2441 = vmatprep.subr.bf16.mxu0 0
      %2442 = vmatpush1.bf16.msra.mxu0 0
      %2443 = vmatprep.subr.bf16.mxu0 0
      %2444 = vmatpush1.bf16.msra.mxu0 0
      %2445 = vmatprep.subr.bf16.mxu0 0
      %2446 = vmatpush1.bf16.msra.mxu0 0
      %2447 = vmatprep.subr.bf16.mxu0 0
      %2448 = vmatpush1.bf16.msra.mxu0 0
      %2449 = vmatprep.subr.bf16.mxu0 0
      %2450 = vmatpush1.bf16.msra.mxu0 0
      %2451 = vmatprep.mubr.bf16.mxu0 0
      %2452 = vmatmul.mubr.bf16.gmra.mrb[0].mxu0 %v1214
      %v2453 = vpop.f32.mrb[0].mxu0
      %v2454 = vadd.f32 0.0, %v2453
      %v2455 = vpop.f32.mrb[0].mxu0
      %v2456 = vpop.f32.mrb[0].mxu0
      %v2457 = vadd.f32 0.0, %v2456
      %v2458 = vpop.f32.mrb[0].mxu0
      %2459 = vmatprep.mubr.bf16.mxu0 0
      %2460 = vmatmul.mubr.bf16.gmra.mrb[0].mxu0 %v1217
      %v2461 = vpop.f32.mrb[0].mxu0
      %v2462 = vadd.f32 0.0, %v2461
      %v2463 = vpop.f32.mrb[0].mxu0
      %v2464 = vpop.f32.mrb[0].mxu0
      %v2465 = vadd.f32 0.0, %v2464
      %v2466 = vpop.f32.mrb[0].mxu0
      %2467 = vmatprep.mubr.bf16.mxu0 0
      %2468 = vmatmul.mubr.bf16.gmra.mrb[0].mxu0 %v1220
      %v2469 = vpop.f32.mrb[0].mxu0
      %v2470 = vadd.f32 0.0, %v2469
      %v2471 = vpop.f32.mrb[0].mxu0
      %v2472 = vpop.f32.mrb[0].mxu0
      %v2473 = vadd.f32 0.0, %v2472
      %v2474 = vpop.f32.mrb[0].mxu0
      %2475 = vmatprep.mubr.bf16.mxu0 0
      %2476 = vmatmul.mubr.bf16.gmra.mrb[0].mxu0 %v1223
      %v2477 = vpop.f32.mrb[0].mxu0
      %v2478 = vadd.f32 0.0, %v2477
      %v2479 = vpop.f32.mrb[0].mxu0
      %v2480 = vpop.f32.mrb[0].mxu0
      %v2481 = vadd.f32 0.0, %v2480
      %v2482 = vpop.f32.mrb[0].mxu0
      %2483 = vmatprep.mubr.bf16.mxu0 0
      %2484 = vmatmul.mubr.bf16.gmra.mrb[0].mxu0 %v1226
      %v2485 = vpop.f32.mrb[0].mxu0
      %v2486 = vadd.f32 0.0, %v2485
      %v2487 = vpop.f32.mrb[0].mxu0
      %v2488 = vpop.f32.mrb[0].mxu0
      %v2489 = vadd.f32 0.0, %v2488
      %v2490 = vpop.f32.mrb[0].mxu0
      %2491 = vmatprep.mubr.bf16.mxu0 0
      %2492 = vmatmul.mubr.bf16.gmra.mrb[0].mxu0 %v1229
      %v2493 = vpop.f32.mrb[0].mxu0
      %v2494 = vadd.f32 0.0, %v2493
      %v2495 = vpop.f32.mrb[0].mxu0
      %v2496 = vpop.f32.mrb[0].mxu0
      %v2497 = vadd.f32 0.0, %v2496
      %v2498 = vpop.f32.mrb[0].mxu0
      %2499 = vmatprep.mubr.bf16.mxu0 0
      %2500 = vmatmul.mubr.bf16.gmra.mrb[0].mxu0 %v1232
      %v2501 = vpop.f32.mrb[0].mxu0
      %v2502 = vadd.f32 0.0, %v2501
      %v2503 = vpop.f32.mrb[0].mxu0
      %v2504 = vpop.f32.mrb[0].mxu0
      %v2505 = vadd.f32 0.0, %v2504
      %v2506 = vpop.f32.mrb[0].mxu0
      %2507 = vmatprep.mubr.bf16.mxu0 0
      %2508 = vmatmul.mubr.bf16.gmra.mrb[0].mxu0 %v1235
      %v2509 = vpop.f32.mrb[0].mxu0
      %v2510 = vadd.f32 0.0, %v2509
      %v2511 = vpop.f32.mrb[0].mxu0
      %v2512 = vpop.f32.mrb[0].mxu0
      %v2513 = vadd.f32 0.0, %v2512
      %v2514 = vpop.f32.mrb[0].mxu0
      %2515 = vmatprep.mubr.bf16.mxu0 0
      %2516 = vmatmul.mubr.bf16.gmra.mrb[0].mxu0 %v1238
      %v2517 = vpop.f32.mrb[0].mxu0
      %v2518 = vadd.f32 0.0, %v2517
      %v2519 = vpop.f32.mrb[0].mxu0
      %v2520 = vpop.f32.mrb[0].mxu0
      %v2521 = vadd.f32 0.0, %v2520
      %v2522 = vpop.f32.mrb[0].mxu0
      %2523 = vmatprep.mubr.bf16.mxu0 0
      %2524 = vmatmul.mubr.bf16.gmra.mrb[0].mxu0 %v2408
      %v2525 = vpop.f32.mrb[0].mxu0
      %v2526 = vadd.f32 0.0, %v2525
      %v2527 = vpop.f32.mrb[0].mxu0
      %v2528 = vpop.f32.mrb[0].mxu0
      %v2529 = vadd.f32 0.0, %v2528
      %v2530 = vpop.f32.mrb[0].mxu0
      %2531 = vmatprep.mubr.bf16.mxu0 0
      %2532 = vmatmul.mubr.bf16.gmra.mrb[0].mxu0 %v2411
      %v2533 = vpop.f32.mrb[0].mxu0
      %v2534 = vadd.f32 0.0, %v2533
      %v2535 = vpop.f32.mrb[0].mxu0
      %v2536 = vpop.f32.mrb[0].mxu0
      %v2537 = vadd.f32 0.0, %v2536
      %v2538 = vpop.f32.mrb[0].mxu0
      %2539 = vmatprep.mubr.bf16.mxu0 0
      %2540 = vmatmul.mubr.bf16.gmra.mrb[0].mxu0 %v2414
      %v2541 = vpop.f32.mrb[0].mxu0
      %v2542 = vadd.f32 0.0, %v2541
      %v2543 = vpop.f32.mrb[0].mxu0
      %v2544 = vpop.f32.mrb[0].mxu0
      %v2545 = vadd.f32 0.0, %v2544
      %v2546 = vpop.f32.mrb[0].mxu0
      %2547 = vdwg.mxu0
      %v2548 = vadd.f32 %v2368, %v2454
      %v2549 = vadd.f32 %v2369, %v2457
      %v2550 = vadd.f32 %v2370, %v2462
      %v2551 = vadd.f32 %v2371, %v2465
      %v2552 = vadd.f32 %v2372, %v2470
      %v2553 = vadd.f32 %v2373, %v2473
      %v2554 = vadd.f32 %v2374, %v2478
      %v2555 = vadd.f32 %v2375, %v2481
      %v2556 = vadd.f32 %v2376, %v2486
      %v2557 = vadd.f32 %v2377, %v2489
      %v2558 = vadd.f32 %v2378, %v2494
      %v2559 = vadd.f32 %v2379, %v2497
      %v2560 = vadd.f32 %v2380, %v2502
      %v2561 = vadd.f32 %v2381, %v2505
      %v2562 = vadd.f32 %v2382, %v2510
      %v2563 = vadd.f32 %v2383, %v2513
      %v2564 = vadd.f32 %v2384, %v2518
      %v2565 = vadd.f32 %v2385, %v2521
      %v2566 = vadd.f32 %v2386, %v2526
      %v2567 = vadd.f32 %v2387, %v2529
      %v2568 = vadd.f32 %v2388, %v2534
      %v2569 = vadd.f32 %v2389, %v2537
      %v2570 = vadd.f32 %v2390, %v2542
      %v2571 = vadd.f32 %v2391, %v2545
      %v2572 = vlaneseq
      %v2573 = vshrl.u32 %v2572, 7
      %v2574 = vadd.s32 %v2573, 8
      %v2575 = vadd.s32 %v2573, 16
      %vm2576 = vcmp.ge.s32.totalorder %v2573, 4
      %vm2577 = vcmp.ge.s32.totalorder %v2574, 4
      %vm2578 = vcmp.ge.s32.totalorder %v2575, 4
      %vm2579 = vcmp.lt.s32.totalorder %v2573, 20
      %vm2580 = vcmp.lt.s32.totalorder %v2574, 20
      %vm2581 = vcmp.lt.s32.totalorder %v2575, 20
      %vm2582 = vmand %vm2576, %vm2579
      %vm2583 = vmand %vm2577, %vm2580
      %vm2584 = vmand %vm2578, %vm2581
      %v2585 = vsel %vm2582, 1, 0
      %v2586 = vsel %vm2583, 1, 0
      %v2587 = vsel %vm2584, 1, 0
      %vm2588 = vcmp.eq.s32.totalorder %v2585, 1
      %vm2589 = vcmp.eq.s32.totalorder %v2586, 1
      %vm2590 = vcmp.eq.s32.totalorder %v2587, 1
      %v2591 = vsel %vm2588, %v2548, 0.0
      %v2592 = vsel %vm2589, %v2549, 0.0
      %v2593 = vsel %vm2590, %v2550, 0.0
      %v2594 = vsel %vm2588, %v2551, 0.0
      %v2595 = vsel %vm2589, %v2552, 0.0
      %v2596 = vsel %vm2590, %v2553, 0.0
      %v2597 = vsel %vm2588, %v2554, 0.0
      %v2598 = vsel %vm2589, %v2555, 0.0
      %v2599 = vsel %vm2590, %v2556, 0.0
      %v2600 = vsel %vm2588, %v2557, 0.0
      %v2601 = vsel %vm2589, %v2558, 0.0
      %v2602 = vsel %vm2590, %v2559, 0.0
      %v2603 = vsel %vm2588, %v2560, 0.0
      %v2604 = vsel %vm2589, %v2561, 0.0
      %v2605 = vsel %vm2590, %v2562, 0.0
      %v2606 = vsel %vm2588, %v2563, 0.0
      %v2607 = vsel %vm2589, %v2564, 0.0
      %v2608 = vsel %vm2590, %v2565, 0.0
      %v2609 = vsel %vm2588, %v2566, 0.0
      %v2610 = vsel %vm2589, %v2567, 0.0
      %v2611 = vsel %vm2590, %v2568, 0.0
      %v2612 = vsel %vm2588, %v2569, 0.0
      %v2613 = vsel %vm2589, %v2570, 0.0
      %v2614 = vsel %vm2590, %v2571, 0.0
      %vm2615 = vcmask 64512
      %v2616 = vsel %vm2615, %v2591, 0.0
      %v2617 = vsel %vm2615, %v2592, 0.0
      %v2618 = vadd.f32 %v2616, %v2617
      %v2619 = vsel %vm2615, %v2593, 0.0
      %v2620 = vadd.f32 %v2618, %v2619
      %v2621 = vsel %vm2615, %v2594, 0.0
      %v2622 = vadd.f32 %v2620, %v2621
      %v2623 = vsel %vm2615, %v2595, 0.0
      %v2624 = vadd.f32 %v2622, %v2623
      %v2625 = vsel %vm2615, %v2596, 0.0
      %v2626 = vadd.f32 %v2624, %v2625
      %v2627 = vsel %vm2615, %v2597, 0.0
      %v2628 = vadd.f32 %v2626, %v2627
      %v2629 = vsel %vm2615, %v2598, 0.0
      %v2630 = vadd.f32 %v2628, %v2629
      %v2631 = vsel %vm2615, %v2599, 0.0
      %v2632 = vadd.f32 %v2630, %v2631
      %v2633 = vsel %vm2615, %v2600, 0.0
      %v2634 = vadd.f32 %v2632, %v2633
      %v2635 = vsel %vm2615, %v2601, 0.0
      %v2636 = vadd.f32 %v2634, %v2635
      %v2637 = vsel %vm2615, %v2602, 0.0
      %v2638 = vadd.f32 %v2636, %v2637
      %v2639 = vsel %vm2615, %v2603, 0.0
      %v2640 = vadd.f32 %v2638, %v2639
      %v2641 = vsel %vm2615, %v2604, 0.0
      %v2642 = vadd.f32 %v2640, %v2641
      %v2643 = vsel %vm2615, %v2605, 0.0
      %v2644 = vadd.f32 %v2642, %v2643
      %v2645 = vsel %vm2615, %v2606, 0.0
      %v2646 = vadd.f32 %v2644, %v2645
      %v2647 = vsel %vm2615, %v2607, 0.0
      %v2648 = vadd.f32 %v2646, %v2647
      %v2649 = vsel %vm2615, %v2608, 0.0
      %v2650 = vadd.f32 %v2648, %v2649
      %v2651 = vsel %vm2615, %v2609, 0.0
      %v2652 = vadd.f32 %v2650, %v2651
      %v2653 = vsel %vm2615, %v2610, 0.0
      %v2654 = vadd.f32 %v2652, %v2653
      %v2655 = vsel %vm2615, %v2611, 0.0
      %v2656 = vadd.f32 %v2654, %v2655
      %v2657 = vsel %vm2615, %v2612, 0.0
      %v2658 = vadd.f32 %v2656, %v2657
      %v2659 = vsel %vm2615, %v2613, 0.0
      %v2660 = vadd.f32 %v2658, %v2659
      %v2661 = vsel %vm2615, %v2614, 0.0
      %v2662 = vadd.f32 %v2660, %v2661
      %v2663 = vrot.slane %v2662, 4
      %v2664 = vadd.f32 %v2662, %v2663
      %v2665 = vrot.slane %v2664, 2
      %v2666 = vadd.f32 %v2664, %v2665
      %v2667 = vrot.slane %v2666, 1
      %v2668 = vadd.f32 %v2666, %v2667
      %v2669 = vmul.f32 %v2591, %v2591
      %v2670 = vmul.f32 %v2592, %v2592
      %v2671 = vmul.f32 %v2593, %v2593
      %v2672 = vmul.f32 %v2594, %v2594
      %v2673 = vmul.f32 %v2595, %v2595
      %v2674 = vmul.f32 %v2596, %v2596
      %v2675 = vmul.f32 %v2597, %v2597
      %v2676 = vmul.f32 %v2598, %v2598
      %v2677 = vmul.f32 %v2599, %v2599
      %v2678 = vmul.f32 %v2600, %v2600
      %v2679 = vmul.f32 %v2601, %v2601
      %v2680 = vmul.f32 %v2602, %v2602
      %v2681 = vmul.f32 %v2603, %v2603
      %v2682 = vmul.f32 %v2604, %v2604
      %v2683 = vmul.f32 %v2605, %v2605
      %v2684 = vmul.f32 %v2606, %v2606
      %v2685 = vmul.f32 %v2607, %v2607
      %v2686 = vmul.f32 %v2608, %v2608
      %v2687 = vmul.f32 %v2609, %v2609
      %v2688 = vmul.f32 %v2610, %v2610
      %v2689 = vmul.f32 %v2611, %v2611
      %v2690 = vmul.f32 %v2612, %v2612
      %v2691 = vmul.f32 %v2613, %v2613
      %v2692 = vmul.f32 %v2614, %v2614
      %v2693 = vsel %vm2615, %v2669, 0.0
      %v2694 = vsel %vm2615, %v2670, 0.0
      %v2695 = vadd.f32 %v2693, %v2694
      %v2696 = vsel %vm2615, %v2671, 0.0
      %v2697 = vadd.f32 %v2695, %v2696
      %v2698 = vsel %vm2615, %v2672, 0.0
      %v2699 = vadd.f32 %v2697, %v2698
      %v2700 = vsel %vm2615, %v2673, 0.0
      %v2701 = vadd.f32 %v2699, %v2700
      %v2702 = vsel %vm2615, %v2674, 0.0
      %v2703 = vadd.f32 %v2701, %v2702
      %v2704 = vsel %vm2615, %v2675, 0.0
      %v2705 = vadd.f32 %v2703, %v2704
      %v2706 = vsel %vm2615, %v2676, 0.0
      %v2707 = vadd.f32 %v2705, %v2706
      %v2708 = vsel %vm2615, %v2677, 0.0
      %v2709 = vadd.f32 %v2707, %v2708
      %v2710 = vsel %vm2615, %v2678, 0.0
      %v2711 = vadd.f32 %v2709, %v2710
      %v2712 = vsel %vm2615, %v2679, 0.0
      %v2713 = vadd.f32 %v2711, %v2712
      %v2714 = vsel %vm2615, %v2680, 0.0
      %v2715 = vadd.f32 %v2713, %v2714
      %v2716 = vsel %vm2615, %v2681, 0.0
      %v2717 = vadd.f32 %v2715, %v2716
      %v2718 = vsel %vm2615, %v2682, 0.0
      %v2719 = vadd.f32 %v2717, %v2718
      %v2720 = vsel %vm2615, %v2683, 0.0
      %v2721 = vadd.f32 %v2719, %v2720
      %v2722 = vsel %vm2615, %v2684, 0.0
      %v2723 = vadd.f32 %v2721, %v2722
      %v2724 = vsel %vm2615, %v2685, 0.0
      %v2725 = vadd.f32 %v2723, %v2724
      %v2726 = vsel %vm2615, %v2686, 0.0
      %v2727 = vadd.f32 %v2725, %v2726
      %v2728 = vsel %vm2615, %v2687, 0.0
      %v2729 = vadd.f32 %v2727, %v2728
      %v2730 = vsel %vm2615, %v2688, 0.0
      %v2731 = vadd.f32 %v2729, %v2730
      %v2732 = vsel %vm2615, %v2689, 0.0
      %v2733 = vadd.f32 %v2731, %v2732
      %v2734 = vsel %vm2615, %v2690, 0.0
      %v2735 = vadd.f32 %v2733, %v2734
      %v2736 = vsel %vm2615, %v2691, 0.0
      %v2737 = vadd.f32 %v2735, %v2736
      %v2738 = vsel %vm2615, %v2692, 0.0
      %v2739 = vadd.f32 %v2737, %v2738
      %v2740 = vrot.slane %v2739, 4
      %v2741 = vadd.f32 %v2739, %v2740
      %v2742 = vrot.slane %v2741, 2
      %v2743 = vadd.f32 %v2741, %v2742
      %v2744 = vrot.slane %v2743, 1
      %v2745 = vadd.f32 %v2743, %v2744
      %p2746 = scmp.eq.s32.totalorder %s25, 0
      // Predicated region
      $region45: #{double_conv.3} parent=43 // pred_check
        %p2747 = pneg %p2746
      $region46: #{double_conv.3} parent=43 // pred_check_branch
        %2749 = sbr.rel (%p2747) target = $region48
      $region47: #{double_conv.3} parent=43 // pred_region
        %vm2750 = vcmask 57344
        %2751 = vst.msk [vmem:[%s487] sm:$0x1] %vm2750, 0.0
        %2752 = vst.msk [vmem:[%s490] sm:$0x1] %vm2750, 0.0
      $region48: #{double_conv.3} parent=43 // pred_fallthru
        _
      %v2753 = vld [vmem:[%s487] sm:$0x1]
      %v2754 = vadd.f32 %v2753, %v2668
      %vm2755 = vcmask 57344
      %2756 = vst.msk [vmem:[%s487] sm:$0x1] %vm2755, %v2754
      %v2757 = vld [vmem:[%s490] sm:$0x1]
      %v2758 = vadd.f32 %v2757, %v2745
      %2759 = vst.msk [vmem:[%s490] sm:$0x1] %vm2755, %v2758
      %2760 = vst.msk [vmem:[%s483] sm:$0xff] %vm2615, %v2591
      %2761 = vst.msk [vmem:[%s483 + $0x8] sm:$0xff] %vm2615, %v2592
      %2762 = vst.msk [vmem:[%s483 + $0x10] sm:$0xff] %vm2615, %v2593
      %2763 = vst.msk [vmem:[%s483 + $0x18] sm:$0xff] %vm2615, %v2594
      %2764 = vst.msk [vmem:[%s483 + $0x20] sm:$0xff] %vm2615, %v2595
      %2765 = vst.msk [vmem:[%s483 + $0x28] sm:$0xff] %vm2615, %v2596
      %2766 = vst.msk [vmem:[%s483 + $0x30] sm:$0xff] %vm2615, %v2597
      %2767 = vst.msk [vmem:[%s483 + $0x38] sm:$0xff] %vm2615, %v2598
      %2768 = vst.msk [vmem:[%s483 + $0x40] sm:$0xff] %vm2615, %v2599
      %2769 = vst.msk [vmem:[%s483 + $0x48] sm:$0xff] %vm2615, %v2600
      %2770 = vst.msk [vmem:[%s483 + $0x50] sm:$0xff] %vm2615, %v2601
      %2771 = vst.msk [vmem:[%s483 + $0x58] sm:$0xff] %vm2615, %v2602
      %2772 = vst.msk [vmem:[%s483 + $0x60] sm:$0xff] %vm2615, %v2603
      %2773 = vst.msk [vmem:[%s483 + $0x68] sm:$0xff] %vm2615, %v2604
      %2774 = vst.msk [vmem:[%s483 + $0x70] sm:$0xff] %vm2615, %v2605
      %2775 = vst.msk [vmem:[%s483 + $0x78] sm:$0xff] %vm2615, %v2606
      %2776 = vst.msk [vmem:[%s483 + $0x80] sm:$0xff] %vm2615, %v2607
      %2777 = vst.msk [vmem:[%s483 + $0x88] sm:$0xff] %vm2615, %v2608
      %2778 = vst.msk [vmem:[%s483 + $0x90] sm:$0xff] %vm2615, %v2609
      %2779 = vst.msk [vmem:[%s483 + $0x98] sm:$0xff] %vm2615, %v2610
      %2780 = vst.msk [vmem:[%s483 + $0xa0] sm:$0xff] %vm2615, %v2611
      %2781 = vst.msk [vmem:[%s483 + $0xa8] sm:$0xff] %vm2615, %v2612
      %2782 = vst.msk [vmem:[%s483 + $0xb0] sm:$0xff] %vm2615, %v2613
      %2783 = vst.msk [vmem:[%s483 + $0xb8] sm:$0xff] %vm2615, %v2614
      %s2784 = smul.u32 8, %s25
      %p2785 = scmp.lt.s32.totalorder %s24, 1
      %s2786 = scalar_select %p2785, %s24, 1
      %p2787 = scmp.lt.s32.totalorder %s2784, 15
      %s2788 = scalar_select %p2787, %s2784, 15
      %s2789 = smul.addr %s2788, 3
      %s2790 = smul.addr %s2786, 48
      %s2791 = sadd.s32 %s2789, %s2790
      %s2792 = smul.addr %s2791, 8
      %s2793 = scalar_lea.vmem %s6, %s2792
      %p2794 = scmp.lt.s32.totalorder %s24, 1
      %s2795 = scalar_select %p2794, %s24, 1
      %s2796 = scalar_lea.vmem %s7, %s2795
      %p2797 = scmp.lt.s32.totalorder %s24, 1
      %s2798 = scalar_select %p2797, %s24, 1
      %s2799 = scalar_lea.vmem %s8, %s2798
      // Predicated region
      $region49: #{double_conv.3} parent=43 // pred_check
        %p2800 = pneg %p215
      $region50: #{double_conv.3} parent=43 // pred_check_branch
        %2802 = sbr.rel (%p2800) target = $region52
      $region51: #{double_conv.3} parent=43 // pred_region
        %s2803 = smul.u32 8, %s25
      $region52: #{double_conv.3} parent=43 // pred_fallthru
        _
      // Predicated region
      $region53: #{double_conv.3} parent=43 // pred_check
        %p2804 = pneg %p241
      $region54: #{double_conv.3} parent=43 // pred_check_branch
        %2806 = sbr.rel (%p2804) target = $region56
      $region55: #{double_conv.3} parent=43 // pred_region
        _
      $region56: #{double_conv.3} parent=43 // pred_fallthru
        _
      // Predicated region
      $region57: #{double_conv.3} parent=43 // pred_check
        %p2807 = pneg %p267
      $region58: #{double_conv.3} parent=43 // pred_check_branch
        %2809 = sbr.rel (%p2807) target = $region60
      $region59: #{double_conv.3} parent=43 // pred_region
        _
      $region60: #{double_conv.3} parent=43 // pred_fallthru
        _
    $region44: #{double_conv.3} parent=5 // pred_fallthru
      _
    %p2810 = scmp.le.s32.totalorder 2, %s15
    // Predicated region
    $region61: #{double_conv.3} parent=5 // pred_check
      %p2811 = pneg %p2810
    $region62: #{double_conv.3} parent=5 // pred_check_branch
      %2813 = sbr.rel (%p2811) target = $region64
    $region63: #{double_conv.3} parent=5 // pred_region
      %s2814 = ssub.s32 %s15, 2
      // Predicated region
      $region65: #{double_conv.3} parent=63 // pred_check
        %p2815 = pneg %p221
      $region66: #{double_conv.3} parent=63 // pred_check_branch
        %2817 = sbr.rel (%p2815) target = $region68
      $region67: #{double_conv.3} parent=63 // pred_region
        %s2818 = smul.u32 8, %s27
        %p2819 = scmp.lt.s32.totalorder %s26, 1
        %s2820 = scalar_select %p2819, %s26, 1
        %p2821 = scmp.lt.s32.totalorder %s2818, 15
        %s2822 = scalar_select %p2821, %s2818, 15
        %s2823 = smul.addr %s2822, 3
        %s2824 = smul.addr %s2820, 48
        %s2825 = sadd.s32 %s2823, %s2824
        %s2826 = smul.addr %s2825, 8
        %s2827 = scalar_lea.vmem %s6, %s2826
      $region68: #{double_conv.3} parent=63 // pred_fallthru
        _
      // Predicated region
      $region69: #{double_conv.3} parent=63 // pred_check
        %p2828 = pneg %p247
      $region70: #{double_conv.3} parent=63 // pred_check_branch
        %2830 = sbr.rel (%p2828) target = $region72
      $region71: #{double_conv.3} parent=63 // pred_region
        %p2831 = scmp.lt.s32.totalorder %s26, 1
        %s2832 = scalar_select %p2831, %s26, 1
        %s2833 = scalar_lea.vmem %s7, %s2832
      $region72: #{double_conv.3} parent=63 // pred_fallthru
        _
      // Predicated region
      $region73: #{double_conv.3} parent=63 // pred_check
        %p2834 = pneg %p273
      $region74: #{double_conv.3} parent=63 // pred_check_branch
        %2836 = sbr.rel (%p2834) target = $region76
      $region75: #{double_conv.3} parent=63 // pred_region
        %p2837 = scmp.lt.s32.totalorder %s26, 1
        %s2838 = scalar_select %p2837, %s26, 1
        %s2839 = scalar_lea.vmem %s8, %s2838
      $region76: #{double_conv.3} parent=63 // pred_fallthru
        _
    $region64: #{double_conv.3} parent=5 // pred_fallthru
      _
  $region6: #{double_conv.3} parent=0 // loop_footer
    %s19 = sadd.s32 1, %s15
  $region7: #{double_conv.3} parent=0 // loop_footer_branch
    %14 = sbr.rel target = $region3
  $region8: #{double_conv.3} parent=0 // loop_exit
    _

// kernel: double_conv.4
$region0: #{double_conv.4}
  #allocation0 [shape = 'u32[]', space=smem, size = 0x4, offset = 0x4, fixed_abs, tag = 'smem constant byte address 0x4 - core index']
  #allocation1 [shape = 'u32[144,128]{1,0:T(1,128)}', space=vmem, size = 0x12000, scoped, tag = 'internal scratch']
  #allocation2 [shape = 'f32[10,24,8]{2,1,0:T(8,128)}', space=vmem, size = 0x1e000, scoped, tag = 'scratch operand']
  %s0 = inlined_call_operand.vmem [shape: f32[2,16,24,8], index: 0, kind: input, shape index: {}, may-alias: {0,1,2}]
  %s1 = inlined_call_operand.vmem [shape: f32[2,16,24,8], index: 1, kind: input, shape index: {}, may-alias: {0,1,2}]
  %s2 = inlined_call_operand.vmem [shape: f32[2,16,24,8], index: 2, kind: input, shape index: {}, may-alias: {0,1,2}]
  %s3 = inlined_call_operand.vmem [shape: bf16[9,8,8], index: 3, kind: input, shape index: {}]
  %s4 = inlined_call_operand.vmem [shape: f32[1,8], index: 4, kind: input, shape index: {}]
  %s5 = inlined_call_operand.vmem [shape: f32[1,8], index: 5, kind: input, shape index: {}]
  %s6 = inlined_call_operand.vmem [shape: f32[2,16,16,8], index: 6, kind: output, shape index: {0}]
  %s7 = inlined_call_operand.vmem [shape: f32[2,1,8], index: 7, kind: output, shape index: {1}]
  %s8 = inlined_call_operand.vmem [shape: f32[2,1,8], index: 8, kind: output, shape index: {2}]
  %9 = xla_tuple %s6, %s7, %s8
  %s10 = sld [smem:[#allocation0]]
  $region77: #{double_conv.4} parent=0
    _
  %s12 = ssub.s32 1, %s10
  %s13 = scalar_select 0, %s12, %s10
  loop: start=0, step=1, limit=6
  $region2: #{double_conv.4} parent=0 // loop_pre_header
    _
  $region3: #{double_conv.4} parent=0 // loop_header
    %s15 = sphi 0, %s19
    %p16 = scmp.ge.s32.totalorder %s15, 6
    %s22 = sphi 0, %s34
    %s23 = sphi 0, %s30
    %s24 = sphi 0, %s22
    %s25 = sphi 0, %s23
    %s26 = sphi 0, %s24
    %s27 = sphi 0, %s25
    %s47 = sphi 0, %s49
    %s50 = sphi 0, %s47
    %s51 = sphi 0, %s50
    %s67 = sphi 0, %s51
    %s75 = sphi 0, %s77
    %s78 = sphi 0, %s75
    %s79 = sphi 0, %s78
    %s95 = sphi 0, %s79
    %s111 = sphi 0, %s113
    %s114 = sphi 0, %s111
    %s115 = sphi 0, %s114
    %s131 = sphi 0, %s115
    %s135 = sphi 0, %s135
    %s137 = sphi 0, %s135
    %s138 = sphi 0, %s137
    %s152 = sphi 0, %s138
    %s156 = sphi 0, %s156
    %s158 = sphi 0, %s156
    %s159 = sphi 0, %s158
    %s173 = sphi 0, %s159
    %s177 = sphi 0, %s177
    %s179 = sphi 0, %s177
    %s180 = sphi 0, %s179
    %s194 = sphi 0, %s180
    %s202 = sphi 0, %s204
    %s205 = sphi 0, %s202
    %s206 = sphi 0, %s205
    %s222 = sphi 0, %s206
    %s228 = sphi 0, %s230
    %s231 = sphi 0, %s228
    %s232 = sphi 0, %s231
    %s248 = sphi 0, %s232
    %s254 = sphi 0, %s256
    %s257 = sphi 0, %s254
    %s258 = sphi 0, %s257
    %s274 = sphi 0, %s258
  $region4: #{double_conv.4} parent=0 // loop_header_branch
    %18 = sbr.rel (%p16) target = $region8
  $region5: #{double_conv.4} parent=0 // loop_body
    %s20 = ssub.s32 %s15, 1
    %s21 = ssub.s32 %s15, 2
    %s28 = sadd.s32 1, %s23
    %p29 = scmp.ge.s32.totalorder %s28, 2
    %s30 = scalar_select %p29, 0, %s28
    %s31 = sadd.s32 1, %s22
    %s32 = scalar_select %p29, %s31, %s22
    %p33 = scmp.ge.s32.totalorder %s32, 2
    %s34 = scalar_select %p33, 0, %s32
    %s35 = smul.u32 %s23, 8
    %s36 = ssub.s32 %s35, 1
    %p37 = scmp.gt.s32.totalorder %s36, 0
    %s38 = scalar_select %p37, %s36, 0
    %s39 = smul.u32 %s30, 8
    %s40 = ssub.s32 %s39, 1
    %p41 = scmp.gt.s32.totalorder %s40, 0
    %s42 = scalar_select %p41, %s40, 0
    %s43 = ssub.s32 %s22, %s34
    %s44 = ssub.s32 %s38, %s42
    %s45 = sor.u32 %s43, %s44
    %p46 = scmp.eq.s32.totalorder %s45, 0
    %s48 = sadd.s32 %s47, 1
    %s49 = scalar_select %p46, %s47, %s48
    %p52 = pneg %p46
    %p53 = scmp.eq.s32.totalorder %s15, 3
    %p54 = por %p52, %p53
    %p55 = scmp.ne.s32.totalorder %s47, %s50
    %p56 = scmp.eq.s32.totalorder %s15, 0
    %p57 = por %p55, %p56
    %p58 = scmp.ne.s32.totalorder %s47, %s50
    %p59 = scmp.eq.s32.totalorder %s20, 3
    %p60 = por %p58, %p59
    %p61 = scmp.ne.s32.totalorder %s50, %s51
    %p62 = scmp.eq.s32.totalorder %s20, 0
    %p63 = por %p61, %p62
    %p64 = scmp.ne.s32.totalorder %s50, %s51
    %p65 = scmp.eq.s32.totalorder %s21, 3
    %p66 = por %p64, %p65
    %p68 = scmp.ne.s32.totalorder %s51, %s67
    %p69 = scmp.eq.s32.totalorder %s21, 0
    %p70 = por %p68, %p69
    %s71 = ssub.s32 %s22, %s34
    %s72 = ssub.s32 %s23, %s30
    %s73 = sor.u32 %s71, %s72
    %p74 = scmp.eq.s32.totalorder %s73, 0
    %s76 = sadd.s32 %s75, 1
    %s77 = scalar_select %p74, %s75, %s76
    %p80 = pneg %p74
    %p81 = scmp.eq.s32.totalorder %s15, 3
    %p82 = por %p80, %p81
    %p83 = scmp.ne.s32.totalorder %s75, %s78
    %p84 = scmp.eq.s32.totalorder %s15, 0
    %p85 = por %p83, %p84
    %p86 = scmp.ne.s32.totalorder %s75, %s78
    %p87 = scmp.eq.s32.totalorder %s20, 3
    %p88 = por %p86, %p87
    %p89 = scmp.ne.s32.totalorder %s78, %s79
    %p90 = scmp.eq.s32.totalorder %s20, 0
    %p91 = por %p89, %p90
    %p92 = scmp.ne.s32.totalorder %s78, %s79
    %p93 = scmp.eq.s32.totalorder %s21, 3
    %p94 = por %p92, %p93
    %p96 = scmp.ne.s32.totalorder %s79, %s95
    %p97 = scmp.eq.s32.totalorder %s21, 0
    %p98 = por %p96, %p97
    %s99 = smul.u32 %s23, 8
    %s100 = sadd.s32 %s99, 8
    %p101 = scmp.lt.s32.totalorder %s100, 15
    %s102 = scalar_select %p101, %s100, 15
    %s103 = smul.u32 %s30, 8
    %s104 = sadd.s32 %s103, 8
    %p105 = scmp.lt.s32.totalorder %s104, 15
    %s106 = scalar_select %p105, %s104, 15
    %s107 = ssub.s32 %s22, %s34
    %s108 = ssub.s32 %s102, %s106
    %s109 = sor.u32 %s107, %s108
    %p110 = scmp.eq.s32.totalorder %s109, 0
    %s112 = sadd.s32 %s111, 1
    %s113 = scalar_select %p110, %s111, %s112
    %p116 = pneg %p110
    %p117 = scmp.eq.s32.totalorder %s15, 3
    %p118 = por %p116, %p117
    %p119 = scmp.ne.s32.totalorder %s111, %s114
    %p120 = scmp.eq.s32.totalorder %s15, 0
    %p121 = por %p119, %p120
    %p122 = scmp.ne.s32.totalorder %s111, %s114
    %p123 = scmp.eq.s32.totalorder %s20, 3
    %p124 = por %p122, %p123
    %p125 = scmp.ne.s32.totalorder %s114, %s115
    %p126 = scmp.eq.s32.totalorder %s20, 0
    %p127 = por %p125, %p126
    %p128 = scmp.ne.s32.totalorder %s114, %s115
    %p129 = scmp.eq.s32.totalorder %s21, 3
    %p130 = por %p128, %p129
    %p132 = scmp.ne.s32.totalorder %s115, %s131
    %p133 = scmp.eq.s32.totalorder %s21, 0
    %p134 = por %p132, %p133
    %s136 = sadd.s32 %s135, 1
    %p139 = scmp.eq.s32.totalorder %s15, 3
    %p140 = scmp.ne.s32.totalorder %s135, %s137
    %p141 = scmp.eq.s32.totalorder %s15, 0
    %p142 = por %p140, %p141
    %p143 = scmp.ne.s32.totalorder %s135, %s137
    %p144 = scmp.eq.s32.totalorder %s20, 3
    %p145 = por %p143, %p144
    %p146 = scmp.ne.s32.totalorder %s137, %s138
    %p147 = scmp.eq.s32.totalorder %s20, 0
    %p148 = por %p146, %p147
    %p149 = scmp.ne.s32.totalorder %s137, %s138
    %p150 = scmp.eq.s32.totalorder %s21, 3
    %p151 = por %p149, %p150
    %p153 = scmp.ne.s32.totalorder %s138, %s152
    %p154 = scmp.eq.s32.totalorder %s21, 0
    %p155 = por %p153, %p154
    %s157 = sadd.s32 %s156, 1
    %p160 = scmp.eq.s32.totalorder %s15, 3
    %p161 = scmp.ne.s32.totalorder %s156, %s158
    %p162 = scmp.eq.s32.totalorder %s15, 0
    %p163 = por %p161, %p162
    %p164 = scmp.ne.s32.totalorder %s156, %s158
    %p165 = scmp.eq.s32.totalorder %s20, 3
    %p166 = por %p164, %p165
    %p167 = scmp.ne.s32.totalorder %s158, %s159
    %p168 = scmp.eq.s32.totalorder %s20, 0
    %p169 = por %p167, %p168
    %p170 = scmp.ne.s32.totalorder %s158, %s159
    %p171 = scmp.eq.s32.totalorder %s21, 3
    %p172 = por %p170, %p171
    %p174 = scmp.ne.s32.totalorder %s159, %s173
    %p175 = scmp.eq.s32.totalorder %s21, 0
    %p176 = por %p174, %p175
    %s178 = sadd.s32 %s177, 1
    %p181 = scmp.eq.s32.totalorder %s15, 3
    %p182 = scmp.ne.s32.totalorder %s177, %s179
    %p183 = scmp.eq.s32.totalorder %s15, 0
    %p184 = por %p182, %p183
    %p185 = scmp.ne.s32.totalorder %s177, %s179
    %p186 = scmp.eq.s32.totalorder %s20, 3
    %p187 = por %p185, %p186
    %p188 = scmp.ne.s32.totalorder %s179, %s180
    %p189 = scmp.eq.s32.totalorder %s20, 0
    %p190 = por %p188, %p189
    %p191 = scmp.ne.s32.totalorder %s179, %s180
    %p192 = scmp.eq.s32.totalorder %s21, 3
    %p193 = por %p191, %p192
    %p195 = scmp.ne.s32.totalorder %s180, %s194
    %p196 = scmp.eq.s32.totalorder %s21, 0
    %p197 = por %p195, %p196
    %s198 = ssub.s32 %s22, %s34
    %s199 = ssub.s32 %s23, %s30
    %s200 = sor.u32 %s198, %s199
    %p201 = scmp.eq.s32.totalorder %s200, 0
    %s203 = sadd.s32 %s202, 1
    %s204 = scalar_select %p201, %s202, %s203
    %p207 = pneg %p201
    %p208 = scmp.eq.s32.totalorder %s15, 3
    %p209 = por %p207, %p208
    %p210 = scmp.ne.s32.totalorder %s202, %s205
    %p211 = scmp.eq.s32.totalorder %s15, 0
    %p212 = por %p210, %p211
    %p213 = scmp.ne.s32.totalorder %s202, %s205
    %p214 = scmp.eq.s32.totalorder %s20, 3
    %p215 = por %p213, %p214
    %p216 = scmp.ne.s32.totalorder %s205, %s206
    %p217 = scmp.eq.s32.totalorder %s20, 0
    %p218 = por %p216, %p217
    %p219 = scmp.ne.s32.totalorder %s205, %s206
    %p220 = scmp.eq.s32.totalorder %s21, 3
    %p221 = por %p219, %p220
    %p223 = scmp.ne.s32.totalorder %s206, %s222
    %p224 = scmp.eq.s32.totalorder %s21, 0
    %p225 = por %p223, %p224
    %s226 = ssub.s32 %s22, %s34
    %p227 = scmp.eq.s32.totalorder %s226, 0
    %s229 = sadd.s32 %s228, 1
    %s230 = scalar_select %p227, %s228, %s229
    %p233 = pneg %p227
    %p234 = scmp.eq.s32.totalorder %s15, 3
    %p235 = por %p233, %p234
    %p236 = scmp.ne.s32.totalorder %s228, %s231
    %p237 = scmp.eq.s32.totalorder %s15, 0
    %p238 = por %p236, %p237
    %p239 = scmp.ne.s32.totalorder %s228, %s231
    %p240 = scmp.eq.s32.totalorder %s20, 3
    %p241 = por %p239, %p240
    %p242 = scmp.ne.s32.totalorder %s231, %s232
    %p243 = scmp.eq.s32.totalorder %s20, 0
    %p244 = por %p242, %p243
    %p245 = scmp.ne.s32.totalorder %s231, %s232
    %p246 = scmp.eq.s32.totalorder %s21, 3
    %p247 = por %p245, %p246
    %p249 = scmp.ne.s32.totalorder %s232, %s248
    %p250 = scmp.eq.s32.totalorder %s21, 0
    %p251 = por %p249, %p250
    %s252 = ssub.s32 %s22, %s34
    %p253 = scmp.eq.s32.totalorder %s252, 0
    %s255 = sadd.s32 %s254, 1
    %s256 = scalar_select %p253, %s254, %s255
    %p259 = pneg %p253
    %p260 = scmp.eq.s32.totalorder %s15, 3
    %p261 = por %p259, %p260
    %p262 = scmp.ne.s32.totalorder %s254, %s257
    %p263 = scmp.eq.s32.totalorder %s15, 0
    %p264 = por %p262, %p263
    %p265 = scmp.ne.s32.totalorder %s254, %s257
    %p266 = scmp.eq.s32.totalorder %s20, 3
    %p267 = por %p265, %p266
    %p268 = scmp.ne.s32.totalorder %s257, %s258
    %p269 = scmp.eq.s32.totalorder %s20, 0
    %p270 = por %p268, %p269
    %p271 = scmp.ne.s32.totalorder %s257, %s258
    %p272 = scmp.eq.s32.totalorder %s21, 3
    %p273 = por %p271, %p272
    %p275 = scmp.ne.s32.totalorder %s258, %s274
    %p276 = scmp.eq.s32.totalorder %s21, 0
    %p277 = por %p275, %p276
    %p278 = scmp.le.s32.totalorder 1, %s15
    %p279 = scmp.lt.s32.totalorder %s15, 5
    %p280 = pnand %p278, %p279
    %p281 = pneg %p280
    // Predicated region
    $region9: #{double_conv.4} parent=5 // pred_check
      _
    $region10: #{double_conv.4} parent=5 // pred_check_branch
      %283 = sbr.rel (%p280) target = $region12
    $region11: #{double_conv.4} parent=5 // pred_region
      %s284 = ssub.s32 %s15, 1
      // Predicated region
      $region13: #{double_conv.4} parent=11 // pred_check
        %p285 = pneg %p148
      $region14: #{double_conv.4} parent=11 // pred_check_branch
        %287 = sbr.rel (%p285) target = $region16
      $region15: #{double_conv.4} parent=11 // pred_region
        _
      $region16: #{double_conv.4} parent=11 // pred_fallthru
        _
      // Predicated region
      $region17: #{double_conv.4} parent=11 // pred_check
        %p288 = pneg %p169
      $region18: #{double_conv.4} parent=11 // pred_check_branch
        %290 = sbr.rel (%p288) target = $region20
      $region19: #{double_conv.4} parent=11 // pred_region
        _
      $region20: #{double_conv.4} parent=11 // pred_fallthru
        _
      // Predicated region
      $region21: #{double_conv.4} parent=11 // pred_check
        %p291 = pneg %p190
      $region22: #{double_conv.4} parent=11 // pred_check_branch
        %293 = sbr.rel (%p291) target = $region24
      $region23: #{double_conv.4} parent=11 // pred_region
        _
      $region24: #{double_conv.4} parent=11 // pred_fallthru
        _
    $region12: #{double_conv.4} parent=5 // pred_fallthru
      _
    %p294 = scmp.lt.s32.totalorder %s15, 4
    // Predicated region
    $region25: #{double_conv.4} parent=5 // pred_check
      %p295 = pneg %p294
    $region26: #{double_conv.4} parent=5 // pred_check_branch
      %297 = sbr.rel (%p295) target = $region28
    $region27: #{double_conv.4} parent=5 // pred_region
      // Predicated region
      $region29: #{double_conv.4} parent=27 // pred_check
        %p298 = pneg %p57
      $region30: #{double_conv.4} parent=27 // pred_check_branch
        %300 = sbr.rel (%p298) target = $region32
      $region31: #{double_conv.4} parent=27 // pred_region
        %s301 = smul.u32 %s23, 8
        %s302 = ssub.s32 %s301, 1
        %p303 = scmp.gt.s32.totalorder %s302, 0
        %s304 = scalar_select %p303, %s302, 0
        %p305 = scmp.lt.s32.totalorder %s22, 1
        %s306 = scalar_select %p305, %s22, 1
        %p307 = scmp.lt.s32.totalorder %s304, 15
        %s308 = scalar_select %p307, %s304, 15
        %s309 = smul.addr %s308, 3
        %s310 = smul.addr %s306, 48
        %s311 = sadd.s32 %s309, %s310
        %s312 = smul.addr %s311, 8
        %s313 = scalar_lea.vmem %s0, %s312
        %s314 = smul.u32 %s23, 8
        %s315 = ssub.s32 %s314, 1
        %p316 = scmp.gt.s32.totalorder %s315, 0
        %s317 = scalar_select %p316, %s315, 0
      $region32: #{double_conv.4} parent=27 // pred_fallthru
        _
      // Predicated region
      $region33: #{double_conv.4} parent=27 // pred_check
        %p318 = pneg %p85
      $region34: #{double_conv.4} parent=27 // pred_check_branch
        %320 = sbr.rel (%p318) target = $region36
      $region35: #{double_conv.4} parent=27 // pred_region
        %s321 = smul.u32 8, %s23
        %p322 = scmp.lt.s32.totalorder %s22, 1
        %s323 = scalar_select %p322, %s22, 1
        %p324 = scmp.lt.s32.totalorder %s321, 15
        %s325 = scalar_select %p324, %s321, 15
        %s326 = smul.addr %s325, 3
        %s327 = smul.addr %s323, 48
        %s328 = sadd.s32 %s326, %s327
        %s329 = smul.addr %s328, 8
        %s330 = scalar_lea.vmem %s1, %s329
        %s331 = smul.u32 8, %s23
      $region36: #{double_conv.4} parent=27 // pred_fallthru
        _
      // Predicated region
      $region37: #{double_conv.4} parent=27 // pred_check
        %p332 = pneg %p121
      $region38: #{double_conv.4} parent=27 // pred_check_branch
        %334 = sbr.rel (%p332) target = $region40
      $region39: #{double_conv.4} parent=27 // pred_region
        %s335 = smul.u32 %s23, 8
        %s336 = sadd.s32 %s335, 8
        %p337 = scmp.lt.s32.totalorder %s336, 15
        %s338 = scalar_select %p337, %s336, 15
        %p339 = scmp.lt.s32.totalorder %s22, 1
        %s340 = scalar_select %p339, %s22, 1
        %p341 = scmp.lt.s32.totalorder %s338, 15
        %s342 = scalar_select %p341, %s338, 15
        %s343 = smul.addr %s342, 3
        %s344 = smul.addr %s340, 48
        %s345 = sadd.s32 %s343, %s344
        %s346 = smul.addr %s345, 8
        %s347 = scalar_lea.vmem %s2, %s346
        %s348 = smul.u32 %s23, 8
        %s349 = sadd.s32 %s348, 8
        %p350 = scmp.lt.s32.totalorder %s349, 15
        %s351 = scalar_select %p350, %s349, 15
      $region40: #{double_conv.4} parent=27 // pred_fallthru
        _
    $region28: #{double_conv.4} parent=5 // pred_fallthru
      _
    %p352 = scmp.le.s32.totalorder 1, %s15
    %p353 = scmp.lt.s32.totalorder %s15, 5
    %p354 = pnand %p352, %p353
    %p355 = pneg %p354
    // Predicated region
    $region41: #{double_conv.4} parent=5 // pred_check
      _
    $region42: #{double_conv.4} parent=5 // pred_check_branch
      %357 = sbr.rel (%p354) target = $region44
    $region43: #{double_conv.4} parent=5 // pred_region
      %s358 = ssub.s32 %s15, 1
      %s359 = smul.u32 %s25, 8
      %s360 = ssub.s32 %s359, 1
      %p361 = scmp.gt.s32.totalorder %s360, 0
      %s362 = scalar_select %p361, %s360, 0
      %p363 = scmp.lt.s32.totalorder %s24, 1
      %s364 = scalar_select %p363, %s24, 1
      %p365 = scmp.lt.s32.totalorder %s362, 15
      %s366 = scalar_select %p365, %s362, 15
      %s367 = smul.addr %s366, 3
      %s368 = smul.addr %s364, 48
      %s369 = sadd.s32 %s367, %s368
      %s370 = smul.addr %s369, 8
      %s371 = scalar_lea.vmem %s0, %s370
      %p372 = pneg %p63
      %p373 = pneg %p60
      %s374 = smul.u32 8, %s25
      %p375 = scmp.lt.s32.totalorder %s24, 1
      %s376 = scalar_select %p375, %s24, 1
      %p377 = scmp.lt.s32.totalorder %s374, 15
      %s378 = scalar_select %p377, %s374, 15
      %s379 = smul.addr %s378, 3
      %s380 = smul.addr %s376, 48
      %s381 = sadd.s32 %s379, %s380
      %s382 = smul.addr %s381, 8
      %s383 = scalar_lea.vmem %s1, %s382
      %p384 = pneg %p91
      %p385 = pneg %p88
      %s386 = smul.u32 %s25, 8
      %s387 = sadd.s32 %s386, 8
      %p388 = scmp.lt.s32.totalorder %s387, 15
      %s389 = scalar_select %p388, %s387, 15
      %p390 = scmp.lt.s32.totalorder %s24, 1
      %s391 = scalar_select %p390, %s24, 1
      %p392 = scmp.lt.s32.totalorder %s389, 15
      %s393 = scalar_select %p392, %s389, 15
      %s394 = smul.addr %s393, 3
      %s395 = smul.addr %s391, 48
      %s396 = sadd.s32 %s394, %s395
      %s397 = smul.addr %s396, 8
      %s398 = scalar_lea.vmem %s2, %s397
      %p399 = pneg %p127
      %p400 = pneg %p124
      %p401 = pneg %p148
      %p402 = pneg %p145
      %p403 = pneg %p169
      %p404 = pneg %p166
      %p405 = pneg %p190
      %p406 = pneg %p187
      %p407 = pneg %p218
      %p408 = pneg %p215
      %s409 = smul.u32 8, %s25
      %p410 = scmp.lt.s32.totalorder %s24, 1
      %s411 = scalar_select %p410, %s24, 1
      %p412 = scmp.lt.s32.totalorder %s409, 15
      %s413 = scalar_select %p412, %s409, 15
      %s414 = smul.addr %s413, 2
      %s415 = smul.addr %s411, 32
      %s416 = sadd.s32 %s414, %s415
      %s417 = smul.addr %s416, 8
      %s418 = scalar_lea.vmem %s6, %s417
      %p419 = pneg %p244
      %p420 = pneg %p241
      %p421 = scmp.lt.s32.totalorder %s24, 1
      %s422 = scalar_select %p421, %s24, 1
      %s423 = scalar_lea.vmem %s7, %s422
      %p424 = pneg %p270
      %p425 = pneg %p267
      %p426 = scmp.lt.s32.totalorder %s24, 1
      %s427 = scalar_select %p426, %s24, 1
      %s428 = scalar_lea.vmem %s8, %s427
      %s429 = smul.u32 %s25, 8
      %s430 = ssub.s32 %s429, 1
      %p431 = scmp.gt.s32.totalorder %s430, 0
      %s432 = scalar_select %p431, %s430, 0
      %p433 = scmp.lt.s32.totalorder %s24, 1
      %s434 = scalar_select %p433, %s24, 1
      %p435 = scmp.lt.s32.totalorder %s432, 15
      %s436 = scalar_select %p435, %s432, 15
      %s437 = smul.addr %s436, 3
      %s438 = smul.addr %s434, 48
      %s439 = sadd.s32 %s437, %s438
      %s440 = smul.addr %s439, 8
      %s441 = scalar_lea.vmem %s0, %s440
      %s442 = smul.u32 %s25, 8
      %s443 = ssub.s32 %s442, 1
      %p444 = scmp.gt.s32.totalorder %s443, 0
      %s445 = scalar_select %p444, %s443, 0
      %s446 = smul.u32 8, %s25
      %p447 = scmp.lt.s32.totalorder %s24, 1
      %s448 = scalar_select %p447, %s24, 1
      %p449 = scmp.lt.s32.totalorder %s446, 15
      %s450 = scalar_select %p449, %s446, 15
      %s451 = smul.addr %s450, 3
      %s452 = smul.addr %s448, 48
      %s453 = sadd.s32 %s451, %s452
      %s454 = smul.addr %s453, 8
      %s455 = scalar_lea.vmem %s1, %s454
      %s456 = smul.u32 8, %s25
      %s457 = smul.u32 %s25, 8
      %s458 = sadd.s32 %s457, 8
      %p459 = scmp.lt.s32.totalorder %s458, 15
      %s460 = scalar_select %p459, %s458, 15
      %p461 = scmp.lt.s32.totalorder %s24, 1
      %s462 = scalar_select %p461, %s24, 1
      %p463 = scmp.lt.s32.totalorder %s460, 15
      %s464 = scalar_select %p463, %s460, 15
      %s465 = smul.addr %s464, 3
      %s466 = smul.addr %s462, 48
      %s467 = sadd.s32 %s465, %s466
      %s468 = smul.addr %s467, 8
      %s469 = scalar_lea.vmem %s2, %s468
      %s470 = smul.u32 %s25, 8
      %s471 = sadd.s32 %s470, 8
      %p472 = scmp.lt.s32.totalorder %s471, 15
      %s473 = scalar_select %p472, %s471, 15
      %s474 = smul.u32 8, %s25
      %p475 = scmp.lt.s32.totalorder %s24, 1
      %s476 = scalar_select %p475, %s24, 1
      %p477 = scmp.lt.s32.totalorder %s474, 15
      %s478 = scalar_select %p477, %s474, 15
      %s479 = smul.addr %s478, 2
      %s480 = smul.addr %s476, 32
      %s481 = sadd.s32 %s479, %s480
      %s482 = smul.addr %s481, 8
      %s483 = scalar_lea.vmem %s6, %s482
      %s484 = smul.u32 8, %s25
      %p485 = scmp.lt.s32.totalorder %s24, 1
      %s486 = scalar_select %p485, %s24, 1
      %s487 = scalar_lea.vmem %s7, %s486
      %p488 = scmp.lt.s32.totalorder %s24, 1
      %s489 = scalar_select %p488, %s24, 1
      %s490 = scalar_lea.vmem %s8, %s489
      %v492 = vlaneseq
      %v493 = vshrl.u32 %v492, 7
      %v494 = vadd.s32 %v493, 8
      %v495 = vadd.s32 %v493, 16
      %vm496 = vcmp.ge.s32.totalorder %v493, 4
      %vm497 = vcmp.ge.s32.totalorder %v494, 4
      %vm498 = vcmp.ge.s32.totalorder %v495, 4
      %vm499 = vcmp.lt.s32.totalorder %v493, 20
      %vm500 = vcmp.lt.s32.totalorder %v494, 20
      %vm501 = vcmp.lt.s32.totalorder %v495, 20
      %vm502 = vmand %vm496, %vm499
      %vm503 = vmand %vm497, %vm500
      %vm504 = vmand %vm498, %vm501
      %v505 = vld [vmem:[%s4] sm:$0x1]
      %v506 = vld [vmem:[%s5] sm:$0x1]
      %v507 = vld [vmem:[%s441] sm:$0xff]
      %v508 = vld [vmem:[%s441 + $0x8] sm:$0xff]
      %v509 = vld [vmem:[%s441 + $0x10] sm:$0xff]
      %v511 = vlaneseq
      %v512 = vshrl.u32 %v511, 7
      %v513 = vsub.s32 0, %v512
      %v514 = vrot.slane %v505, %v513
      %v516 = vmul.f32 %v507, %v514
      %v517 = vmul.f32 %v508, %v514
      %v518 = vmul.f32 %v509, %v514
      %v520 = vlaneseq
      %v521 = vshrl.u32 %v520, 7
      %v522 = vsub.s32 0, %v521
      %v523 = vrot.slane %v506, %v522
      %v525 = vadd.f32 %v516, %v523
      %v526 = vadd.f32 %v517, %v523
      %v527 = vadd.f32 %v518, %v523
      %v528 = vmax.f32 %v525, 0.0
      %v529 = vmax.f32 %v526, 0.0
      %v530 = vmax.f32 %v527, 0.0
      %v531 = vsel %vm502, 1, 0
      %v532 = vsel %vm503, 1, 0
      %v533 = vsel %vm504, 1, 0
      %vm534 = vcmp.eq.s32.totalorder %v531, 1
      %vm535 = vcmp.eq.s32.totalorder %v532, 1
      %vm536 = vcmp.eq.s32.totalorder %v533, 1
      %v537 = vsel %vm534, %v528, 0.0
      %v538 = vsel %vm535, %v529, 0.0
      %v539 = vsel %vm536, %v530, 0.0
      %p540 = scmp.gt.s32.totalorder %s25, 0
      %s541 = scalar_select %p540, 1, 0
      %s542 = scvt.s32.f32 %s541
      %v543 = vstv %s542
      %v544 = vmul.f32 %v537, %v543
      %v545 = vmul.f32 %v538, %v543
      %v546 = vmul.f32 %v539, %v543
      %v547 = vld [vmem:[%s469] sm:$0xff]
      %v548 = vld [vmem:[%s469 + $0x8] sm:$0xff]
      %v549 = vld [vmem:[%s469 + $0x10] sm:$0xff]
      %v550 = vmul.f32 %v547, %v514
      %v551 = vmul.f32 %v548, %v514
      %v552 = vmul.f32 %v549, %v514
      %v553 = vadd.f32 %v550, %v523
      %v554 = vadd.f32 %v551, %v523
      %v555 = vadd.f32 %v552, %v523
      %v556 = vmax.f32 %v553, 0.0
      %v557 = vmax.f32 %v554, 0.0
      %v558 = vmax.f32 %v555, 0.0
      %v559 = vsel %vm534, %v556, 0.0
      %v560 = vsel %vm535, %v557, 0.0
      %v561 = vsel %vm536, %v558, 0.0
      %p562 = scmp.lt.s32.totalorder %s25, 1
      %s563 = scalar_select %p562, 1, 0
      %s564 = scvt.s32.f32 %s563
      %v565 = vstv %s564
      %v566 = vmul.f32 %v559, %v565
      %v567 = vmul.f32 %v560, %v565
      %v568 = vmul.f32 %v561, %v565
      %vm569 = vcmask 64512
      %570 = vst.msk [vmem:[#allocation2] sm:$0xff] %vm569, %v544
      %571 = vst.msk [vmem:[#allocation2 + $0x8] sm:$0xff] %vm569, %v545
      %572 = vst.msk [vmem:[#allocation2 + $0x10] sm:$0xff] %vm569, %v546
      %v573 = vld [vmem:[%s455] sm:$0xff]
      %v574 = vld [vmem:[%s455 + $0x8] sm:$0xff]
      %v575 = vld [vmem:[%s455 + $0x10] sm:$0xff]
      %v576 = vld [vmem:[%s455 + $0x18] sm:$0xff]
      %v577 = vld [vmem:[%s455 + $0x20] sm:$0xff]
      %v578 = vld [vmem:[%s455 + $0x28] sm:$0xff]
      %v579 = vld [vmem:[%s455 + $0x30] sm:$0xff]
      %v580 = vld [vmem:[%s455 + $0x38] sm:$0xff]
      %v581 = vld [vmem:[%s455 + $0x40] sm:$0xff]
      %v582 = vld [vmem:[%s455 + $0x48] sm:$0xff]
      %v583 = vld [vmem:[%s455 + $0x50] sm:$0xff]
      %v584 = vld [vmem:[%s455 + $0x58] sm:$0xff]
      %v585 = vld [vmem:[%s455 + $0x60] sm:$0xff]
      %v586 = vld [vmem:[%s455 + $0x68] sm:$0xff]
      %v587 = vld [vmem:[%s455 + $0x70] sm:$0xff]
      %v588 = vld [vmem:[%s455 + $0x78] sm:$0xff]
      %v589 = vld [vmem:[%s455 + $0x80] sm:$0xff]
      %v590 = vld [vmem:[%s455 + $0x88] sm:$0xff]
      %v591 = vld [vmem:[%s455 + $0x90] sm:$0xff]
      %v592 = vld [vmem:[%s455 + $0x98] sm:$0xff]
      %v593 = vld [vmem:[%s455 + $0xa0] sm:$0xff]
      %v594 = vld [vmem:[%s455 + $0xa8] sm:$0xff]
      %v595 = vld [vmem:[%s455 + $0xb0] sm:$0xff]
      %v596 = vld [vmem:[%s455 + $0xb8] sm:$0xff]
      %v597 = vmul.f32 %v573, %v514
      %v598 = vmul.f32 %v574, %v514
      %v599 = vmul.f32 %v575, %v514
      %v600 = vmul.f32 %v576, %v514
      %v601 = vmul.f32 %v577, %v514
      %v602 = vmul.f32 %v578, %v514
      %v603 = vmul.f32 %v579, %v514
      %v604 = vmul.f32 %v580, %v514
      %v605 = vmul.f32 %v581, %v514
      %v606 = vmul.f32 %v582, %v514
      %v607 = vmul.f32 %v583, %v514
      %v608 = vmul.f32 %v584, %v514
      %v609 = vmul.f32 %v585, %v514
      %v610 = vmul.f32 %v586, %v514
      %v611 = vmul.f32 %v587, %v514
      %v612 = vmul.f32 %v588, %v514
      %v613 = vmul.f32 %v589, %v514
      %v614 = vmul.f32 %v590, %v514
      %v615 = vmul.f32 %v591, %v514
      %v616 = vmul.f32 %v592, %v514
      %v617 = vmul.f32 %v593, %v514
      %v618 = vmul.f32 %v594, %v514
      %v619 = vmul.f32 %v595, %v514
      %v620 = vmul.f32 %v596, %v514
      %v621 = vadd.f32 %v597, %v523
      %v622 = vadd.f32 %v598, %v523
      %v623 = vadd.f32 %v599, %v523
      %v624 = vadd.f32 %v600, %v523
      %v625 = vadd.f32 %v601, %v523
      %v626 = vadd.f32 %v602, %v523
      %v627 = vadd.f32 %v603, %v523
      %v628 = vadd.f32 %v604, %v523
      %v629 = vadd.f32 %v605, %v523
      %v630 = vadd.f32 %v606, %v523
      %v631 = vadd.f32 %v607, %v523
      %v632 = vadd.f32 %v608, %v523
      %v633 = vadd.f32 %v609, %v523
      %v634 = vadd.f32 %v610, %v523
      %v635 = vadd.f32 %v611, %v523
      %v636 = vadd.f32 %v612, %v523
      %v637 = vadd.f32 %v613, %v523
      %v638 = vadd.f32 %v614, %v523
      %v639 = vadd.f32 %v615, %v523
      %v640 = vadd.f32 %v616, %v523
      %v641 = vadd.f32 %v617, %v523
      %v642 = vadd.f32 %v618, %v523
      %v643 = vadd.f32 %v619, %v523
      %v644 = vadd.f32 %v620, %v523
      %v645 = vmax.f32 %v621, 0.0
      %v646 = vmax.f32 %v622, 0.0
      %v647 = vmax.f32 %v623, 0.0
      %v648 = vmax.f32 %v624, 0.0
      %v649 = vmax.f32 %v625, 0.0
      %v650 = vmax.f32 %v626, 0.0
      %v651 = vmax.f32 %v627, 0.0
      %v652 = vmax.f32 %v628, 0.0
      %v653 = vmax.f32 %v629, 0.0
      %v654 = vmax.f32 %v630, 0.0
      %v655 = vmax.f32 %v631, 0.0
      %v656 = vmax.f32 %v632, 0.0
      %v657 = vmax.f32 %v633, 0.0
      %v658 = vmax.f32 %v634, 0.0
      %v659 = vmax.f32 %v635, 0.0
      %v660 = vmax.f32 %v636, 0.0
      %v661 = vmax.f32 %v637, 0.0
      %v662 = vmax.f32 %v638, 0.0
      %v663 = vmax.f32 %v639, 0.0
      %v664 = vmax.f32 %v640, 0.0
      %v665 = vmax.f32 %v641, 0.0
      %v666 = vmax.f32 %v642, 0.0
      %v667 = vmax.f32 %v643, 0.0
      %v668 = vmax.f32 %v644, 0.0
      %v669 = vsel %vm534, %v645, 0.0
      %v670 = vsel %vm535, %v646, 0.0
      %v671 = vsel %vm536, %v647, 0.0
      %v672 = vsel %vm534, %v648, 0.0
      %v673 = vsel %vm535, %v649, 0.0
      %v674 = vsel %vm536, %v650, 0.0
      %v675 = vsel %vm534, %v651, 0.0
      %v676 = vsel %vm535, %v652, 0.0
      %v677 = vsel %vm536, %v653, 0.0
      %v678 = vsel %vm534, %v654, 0.0
      %v679 = vsel %vm535, %v655, 0.0
      %v680 = vsel %vm536, %v656, 0.0
      %v681 = vsel %vm534, %v657, 0.0
      %v682 = vsel %vm535, %v658, 0.0
      %v683 = vsel %vm536, %v659, 0.0
      %v684 = vsel %vm534, %v660, 0.0
      %v685 = vsel %vm535, %v661, 0.0
      %v686 = vsel %vm536, %v662, 0.0
      %v687 = vsel %vm534, %v663, 0.0
      %v688 = vsel %vm535, %v664, 0.0
      %v689 = vsel %vm536, %v665, 0.0
      %v690 = vsel %vm534, %v666, 0.0
      %v691 = vsel %vm535, %v667, 0.0
      %v692 = vsel %vm536, %v668, 0.0
      %s693 = scalar_lea.vmem [#allocation2], 24
      %694 = vst.msk [vmem:[%s693] sm:$0xff] %vm569, %v669
      %695 = vst.msk [vmem:[%s693 + $0x8] sm:$0xff] %vm569, %v670
      %696 = vst.msk [vmem:[%s693 + $0x10] sm:$0xff] %vm569, %v671
      %697 = vst.msk [vmem:[%s693 + $0x18] sm:$0xff] %vm569, %v672
      %698 = vst.msk [vmem:[%s693 + $0x20] sm:$0xff] %vm569, %v673
      %699 = vst.msk [vmem:[%s693 + $0x28] sm:$0xff] %vm569, %v674
      %700 = vst.msk [vmem:[%s693 + $0x30] sm:$0xff] %vm569, %v675
      %701 = vst.msk [vmem:[%s693 + $0x38] sm:$0xff] %vm569, %v676
      %702 = vst.msk [vmem:[%s693 + $0x40] sm:$0xff] %vm569, %v677
      %703 = vst.msk [vmem:[%s693 + $0x48] sm:$0xff] %vm569, %v678
      %704 = vst.msk [vmem:[%s693 + $0x50] sm:$0xff] %vm569, %v679
      %705 = vst.msk [vmem:[%s693 + $0x58] sm:$0xff] %vm569, %v680
      %706 = vst.msk [vmem:[%s693 + $0x60] sm:$0xff] %vm569, %v681
      %707 = vst.msk [vmem:[%s693 + $0x68] sm:$0xff] %vm569, %v682
      %708 = vst.msk [vmem:[%s693 + $0x70] sm:$0xff] %vm569, %v683
      %709 = vst.msk [vmem:[%s693 + $0x78] sm:$0xff] %vm569, %v684
      %710 = vst.msk [vmem:[%s693 + $0x80] sm:$0xff] %vm569, %v685
      %711 = vst.msk [vmem:[%s693 + $0x88] sm:$0xff] %vm569, %v686
      %712 = vst.msk [vmem:[%s693 + $0x90] sm:$0xff] %vm569, %v687
      %713 = vst.msk [vmem:[%s693 + $0x98] sm:$0xff] %vm569, %v688
      %714 = vst.msk [vmem:[%s693 + $0xa0] sm:$0xff] %vm569, %v689
      %715 = vst.msk [vmem:[%s693 + $0xa8] sm:$0xff] %vm569, %v690
      %716 = vst.msk [vmem:[%s693 + $0xb0] sm:$0xff] %vm569, %v691
      %717 = vst.msk [vmem:[%s693 + $0xb8] sm:$0xff] %vm569, %v692
      %s718 = scalar_lea.vmem [#allocation2], 216
      %719 = vst.msk [vmem:[%s718] sm:$0xff] %vm569, %v566
      %720 = vst.msk [vmem:[%s718 + $0x8] sm:$0xff] %vm569, %v567
      %721 = vst.msk [vmem:[%s718 + $0x10] sm:$0xff] %vm569, %v568
      %v722 = vld [vmem:[#allocation2] sm:$0xff]
      %v723 = vld [vmem:[#allocation2 + $0x8] sm:$0xff]
      %v724 = vld [vmem:[#allocation2 + $0x10] sm:$0xff]
      %v725 = vld [vmem:[#allocation2 + $0x18] sm:$0xff]
      %v726 = vld [vmem:[#allocation2 + $0x20] sm:$0xff]
      %v727 = vld [vmem:[#allocation2 + $0x28] sm:$0xff]
      %v728 = vld [vmem:[#allocation2 + $0x30] sm:$0xff]
      %v729 = vld [vmem:[#allocation2 + $0x38] sm:$0xff]
      %v730 = vld [vmem:[#allocation2 + $0x40] sm:$0xff]
      %v731 = vld [vmem:[#allocation2 + $0x48] sm:$0xff]
      %v732 = vld [vmem:[#allocation2 + $0x50] sm:$0xff]
      %v733 = vld [vmem:[#allocation2 + $0x58] sm:$0xff]
      %v734 = vld [vmem:[#allocation2 + $0x60] sm:$0xff]
      %v735 = vld [vmem:[#allocation2 + $0x68] sm:$0xff]
      %v736 = vld [vmem:[#allocation2 + $0x70] sm:$0xff]
      %v737 = vld [vmem:[#allocation2 + $0x78] sm:$0xff]
      %v738 = vld [vmem:[#allocation2 + $0x80] sm:$0xff]
      %v739 = vld [vmem:[#allocation2 + $0x88] sm:$0xff]
      %v740 = vld [vmem:[#allocation2 + $0x90] sm:$0xff]
      %v741 = vld [vmem:[#allocation2 + $0x98] sm:$0xff]
      %v742 = vld [vmem:[#allocation2 + $0xa0] sm:$0xff]
      %v743 = vld [vmem:[#allocation2 + $0xa8] sm:$0xff]
      %v744 = vld [vmem:[#allocation2 + $0xb0] sm:$0xff]
      %v745 = vld [vmem:[#allocation2 + $0xb8] sm:$0xff]
      %v746 = vld [vmem:[#allocation2 + $0xc0] sm:$0xff]
      %v747 = vld [vmem:[#allocation2 + $0xc8] sm:$0xff]
      %v748 = vld [vmem:[#allocation2 + $0xd0] sm:$0xff]
      %v749 = vld [vmem:[#allocation2 + $0xd8] sm:$0xff]
      %v750 = vld [vmem:[#allocation2 + $0xe0] sm:$0xff]
      %v751 = vld [vmem:[#allocation2 + $0xe8] sm:$0xff]
      %vm776 = vcmask 1044480
      %v777 = vrot.slane %v722, 3
      %v778 = vrot.slane %v723, 3
      %v779 = vsel %vm776, %v777, %v778
      %v780 = vrot.slane %v724, 3
      %v781 = vsel %vm776, %v778, %v780
      %v782 = vrot.slane %v725, 3
      %v783 = vrot.slane %v726, 3
      %v784 = vsel %vm776, %v782, %v783
      %v785 = vrot.slane %v727, 3
      %v786 = vsel %vm776, %v783, %v785
      %v787 = vrot.slane %v728, 3
      %v788 = vrot.slane %v729, 3
      %v789 = vsel %vm776, %v787, %v788
      %v790 = vrot.slane %v730, 3
      %v791 = vsel %vm776, %v788, %v790
      %v792 = vrot.slane %v731, 3
      %v793 = vrot.slane %v732, 3
      %v794 = vsel %vm776, %v792, %v793
      %v795 = vrot.slane %v733, 3
      %v796 = vsel %vm776, %v793, %v795
      %v797 = vrot.slane %v734, 3
      %v798 = vrot.slane %v735, 3
      %v799 = vsel %vm776, %v797, %v798
      %v800 = vrot.slane %v736, 3
      %v801 = vsel %vm776, %v798, %v800
      %v802 = vrot.slane %v737, 3
      %v803 = vrot.slane %v738, 3
      %v804 = vsel %vm776, %v802, %v803
      %v805 = vrot.slane %v739, 3
      %v806 = vsel %vm776, %v803, %v805
      %v807 = vrot.slane %v740, 3
      %v808 = vrot.slane %v741, 3
      %v809 = vsel %vm776, %v807, %v808
      %v810 = vrot.slane %v742, 3
      %v811 = vsel %vm776, %v808, %v810
      %v812 = vrot.slane %v743, 3
      %v813 = vrot.slane %v744, 3
      %v814 = vsel %vm776, %v812, %v813
      %v815 = vrot.slane %v745, 3
      %v816 = vsel %vm776, %v813, %v815
      %v833 = vpack.c.bf16 %v781, %v779
      %v834 = vpack.c.bf16 %v786, %v784
      %v835 = vpack.c.bf16 %v791, %v789
      %v836 = vpack.c.bf16 %v796, %v794
      %v837 = vpack.c.bf16 %v801, %v799
      %v838 = vpack.c.bf16 %v806, %v804
      %v839 = vpack.c.bf16 %v811, %v809
      %v840 = vpack.c.bf16 %v816, %v814
      %v841 = vld [vmem:[%s3] sm:$0xf]
      %vm842 = vcmask 1043456
      %v843 = vrot.slane %v722, 4
      %v844 = vrot.slane %v723, 4
      %v845 = vsel %vm842, %v843, %v844
      %v846 = vrot.slane %v724, 4
      %v847 = vsel %vm842, %v844, %v846
      %v848 = vrot.slane %v725, 4
      %v849 = vrot.slane %v726, 4
      %v850 = vsel %vm842, %v848, %v849
      %v851 = vrot.slane %v727, 4
      %v852 = vsel %vm842, %v849, %v851
      %v853 = vrot.slane %v728, 4
      %v854 = vrot.slane %v729, 4
      %v855 = vsel %vm842, %v853, %v854
      %v856 = vrot.slane %v730, 4
      %v857 = vsel %vm842, %v854, %v856
      %v858 = vrot.slane %v731, 4
      %v859 = vrot.slane %v732, 4
      %v860 = vsel %vm842, %v858, %v859
      %v861 = vrot.slane %v733, 4
      %v862 = vsel %vm842, %v859, %v861
      %v863 = vrot.slane %v734, 4
      %v864 = vrot.slane %v735, 4
      %v865 = vsel %vm842, %v863, %v864
      %v866 = vrot.slane %v736, 4
      %v867 = vsel %vm842, %v864, %v866
      %v868 = vrot.slane %v737, 4
      %v869 = vrot.slane %v738, 4
      %v870 = vsel %vm842, %v868, %v869
      %v871 = vrot.slane %v739, 4
      %v872 = vsel %vm842, %v869, %v871
      %v873 = vrot.slane %v740, 4
      %v874 = vrot.slane %v741, 4
      %v875 = vsel %vm842, %v873, %v874
      %v876 = vrot.slane %v742, 4
      %v877 = vsel %vm842, %v874, %v876
      %v878 = vrot.slane %v743, 4
      %v879 = vrot.slane %v744, 4
      %v880 = vsel %vm842, %v878, %v879
      %v881 = vrot.slane %v745, 4
      %v882 = vsel %vm842, %v879, %v881
      %v899 = vpack.c.bf16 %v847, %v845
      %v900 = vpack.c.bf16 %v852, %v850
      %v901 = vpack.c.bf16 %v857, %v855
      %v902 = vpack.c.bf16 %v862, %v860
      %v903 = vpack.c.bf16 %v867, %v865
      %v904 = vpack.c.bf16 %v872, %v870
      %v905 = vpack.c.bf16 %v877, %v875
      %v906 = vpack.c.bf16 %v882, %v880
      %s907 = scalar_lea.vmem %s3, 4
      %v908 = vld [vmem:[%s907] sm:$0xf]
      %v910 = vsel %vm569, %v899, 0
      %v913 = vsel %vm569, %v900, 0
      %v916 = vsel %vm569, %v901, 0
      %v919 = vsel %vm569, %v902, 0
      %v922 = vsel %vm569, %v903, 0
      %v925 = vsel %vm569, %v904, 0
      %v928 = vsel %vm569, %v905, 0
      %v931 = vsel %vm569, %v906, 0
      %v934 = vsel %vm842, %v908, 0
      %936 = vmatprep.subr.bf16.mxu0 0
      %937 = vmatpush1.bf16.msra.mxu0 %v934
      %938 = vmatprep.subr.bf16.mxu0 0
      %939 = vmatpush1.bf16.msra.mxu0 0
      %940 = vmatprep.subr.bf16.mxu0 0
      %941 = vmatpush1.bf16.msra.mxu0 0
      %942 = vmatprep.subr.bf16.mxu0 0
      %943 = vmatpush1.bf16.msra.mxu0 0
      %944 = vmatprep.subr.bf16.mxu0 0
      %945 = vmatpush1.bf16.msra.mxu0 0
      %946 = vmatprep.subr.bf16.mxu0 0
      %947 = vmatpush1.bf16.msra.mxu0 0
      %948 = vmatprep.subr.bf16.mxu0 0
      %949 = vmatpush1.bf16.msra.mxu0 0
      %950 = vmatprep.subr.bf16.mxu0 0
      %951 = vmatpush1.bf16.msra.mxu0 0
      %952 = vmatprep.subr.bf16.mxu0 0
      %953 = vmatpush1.bf16.msra.mxu0 0
      %954 = vmatprep.subr.bf16.mxu0 0
      %955 = vmatpush1.bf16.msra.mxu0 0
      %956 = vmatprep.subr.bf16.mxu0 0
      %957 = vmatpush1.bf16.msra.mxu0 0
      %958 = vmatprep.subr.bf16.mxu0 0
      %959 = vmatpush1.bf16.msra.mxu0 0
      %960 = vmatprep.subr.bf16.mxu0 0
      %961 = vmatpush1.bf16.msra.mxu0 0
      %962 = vmatprep.subr.bf16.mxu0 0
      %963 = vmatpush1.bf16.msra.mxu0 0
      %964 = vmatprep.subr.bf16.mxu0 0
      %965 = vmatpush1.bf16.msra.mxu0 0
      %966 = vmatprep.subr.bf16.mxu0 0
      %967 = vmatpush1.bf16.msra.mxu0 0
      %968 = vmatprep.mubr.bf16.mxu0 0
      %969 = vmatmul.mubr.bf16.gmra.mrb[0].mxu0 %v910
      %v970 = vpop.f32.mrb[0].mxu0
      %v971 = vadd.f32 0.0, %v970
      %v972 = vpop.f32.mrb[0].mxu0
      %v973 = vpop.f32.mrb[0].mxu0
      %v974 = vadd.f32 0.0, %v973
      %v975 = vpop.f32.mrb[0].mxu0
      %976 = vmatprep.mubr.bf16.mxu0 0
      %977 = vmatmul.mubr.bf16.gmra.mrb[0].mxu0 %v913
      %v978 = vpop.f32.mrb[0].mxu0
      %v979 = vadd.f32 0.0, %v978
      %v980 = vpop.f32.mrb[0].mxu0
      %v981 = vpop.f32.mrb[0].mxu0
      %v982 = vadd.f32 0.0, %v981
      %v983 = vpop.f32.mrb[0].mxu0
      %984 = vmatprep.mubr.bf16.mxu0 0
      %985 = vmatmul.mubr.bf16.gmra.mrb[0].mxu0 %v916
      %v986 = vpop.f32.mrb[0].mxu0
      %v987 = vadd.f32 0.0, %v986
      %v988 = vpop.f32.mrb[0].mxu0
      %v989 = vpop.f32.mrb[0].mxu0
      %v990 = vadd.f32 0.0, %v989
      %v991 = vpop.f32.mrb[0].mxu0
      %992 = vmatprep.mubr.bf16.mxu0 0
      %993 = vmatmul.mubr.bf16.gmra.mrb[0].mxu0 %v919
      %v994 = vpop.f32.mrb[0].mxu0
      %v995 = vadd.f32 0.0, %v994
      %v996 = vpop.f32.mrb[0].mxu0
      %v997 = vpop.f32.mrb[0].mxu0
      %v998 = vadd.f32 0.0, %v997
      %v999 = vpop.f32.mrb[0].mxu0
      %1000 = vmatprep.mubr.bf16.mxu0 0
      %1001 = vmatmul.mubr.bf16.gmra.mrb[0].mxu0 %v922
      %v1002 = vpop.f32.mrb[0].mxu0
      %v1003 = vadd.f32 0.0, %v1002
      %v1004 = vpop.f32.mrb[0].mxu0
      %v1005 = vpop.f32.mrb[0].mxu0
      %v1006 = vadd.f32 0.0, %v1005
      %v1007 = vpop.f32.mrb[0].mxu0
      %1008 = vmatprep.mubr.bf16.mxu0 0
      %1009 = vmatmul.mubr.bf16.gmra.mrb[0].mxu0 %v925
      %v1010 = vpop.f32.mrb[0].mxu0
      %v1011 = vadd.f32 0.0, %v1010
      %v1012 = vpop.f32.mrb[0].mxu0
      %v1013 = vpop.f32.mrb[0].mxu0
      %v1014 = vadd.f32 0.0, %v1013
      %v1015 = vpop.f32.mrb[0].mxu0
      %1016 = vmatprep.mubr.bf16.mxu0 0
      %1017 = vmatmul.mubr.bf16.gmra.mrb[0].mxu0 %v928
      %v1018 = vpop.f32.mrb[0].mxu0
      %v1019 = vadd.f32 0.0, %v1018
      %v1020 = vpop.f32.mrb[0].mxu0
      %v1021 = vpop.f32.mrb[0].mxu0
      %v1022 = vadd.f32 0.0, %v1021
      %v1023 = vpop.f32.mrb[0].mxu0
      %1024 = vmatprep.mubr.bf16.mxu0 0
      %1025 = vmatmul.mubr.bf16.gmra.mrb[0].mxu0 %v931
      %v1026 = vpop.f32.mrb[0].mxu0
      %v1027 = vadd.f32 0.0, %v1026
      %v1028 = vpop.f32.mrb[0].mxu0
      %v1029 = vpop.f32.mrb[0].mxu0
      %v1030 = vadd.f32 0.0, %v1029
      %v1031 = vpop.f32.mrb[0].mxu0
      %1032 = vdwg.mxu0
      %v1034 = vsel %vm569, %v833, 0
      %v1037 = vsel %vm569, %v834, 0
      %v1040 = vsel %vm569, %v835, 0
      %v1043 = vsel %vm569, %v836, 0
      %v1046 = vsel %vm569, %v837, 0
      %v1049 = vsel %vm569, %v838, 0
      %v1052 = vsel %vm569, %v839, 0
      %v1055 = vsel %vm569, %v840, 0
      %v1058 = vsel %vm842, %v841, 0
      %1060 = vmatprep.subr.bf16.mxu0 0
      %1061 = vmatpush1.bf16.msra.mxu0 %v1058
      %1062 = vmatprep.subr.bf16.mxu0 0
      %1063 = vmatpush1.bf16.msra.mxu0 0
      %1064 = vmatprep.subr.bf16.mxu0 0
      %1065 = vmatpush1.bf16.msra.mxu0 0
      %1066 = vmatprep.subr.bf16.mxu0 0
      %1067 = vmatpush1.bf16.msra.mxu0 0
      %1068 = vmatprep.subr.bf16.mxu0 0
      %1069 = vmatpush1.bf16.msra.mxu0 0
      %1070 = vmatprep.subr.bf16.mxu0 0
      %1071 = vmatpush1.bf16.msra.mxu0 0
      %1072 = vmatprep.subr.bf16.mxu0 0
      %1073 = vmatpush1.bf16.msra.mxu0 0
      %1074 = vmatprep.subr.bf16.mxu0 0
      %1075 = vmatpush1.bf16.msra.mxu0 0
      %1076 = vmatprep.subr.bf16.mxu0 0
      %1077 = vmatpush1.bf16.msra.mxu0 0
      %1078 = vmatprep.subr.bf16.mxu0 0
      %1079 = vmatpush1.bf16.msra.mxu0 0
      %1080 = vmatprep.subr.bf16.mxu0 0
      %1081 = vmatpush1.bf16.msra.mxu0 0
      %1082 = vmatprep.subr.bf16.mxu0 0
      %1083 = vmatpush1.bf16.msra.mxu0 0
      %1084 = vmatprep.subr.bf16.mxu0 0
      %1085 = vmatpush1.bf16.msra.mxu0 0
      %1086 = vmatprep.subr.bf16.mxu0 0
      %1087 = vmatpush1.bf16.msra.mxu0 0
      %1088 = vmatprep.subr.bf16.mxu0 0
      %1089 = vmatpush1.bf16.msra.mxu0 0
      %1090 = vmatprep.subr.bf16.mxu0 0
      %1091 = vmatpush1.bf16.msra.mxu0 0
      %1092 = vmatprep.mubr.bf16.mxu0 0
      %1093 = vmatmul.mubr.bf16.gmra.mrb[0].mxu0 %v1034
      %v1094 = vpop.f32.mrb[0].mxu0
      %v1095 = vadd.f32 %v971, %v1094
      %v1096 = vpop.f32.mrb[0].mxu0
      %v1097 = vpop.f32.mrb[0].mxu0
      %v1098 = vadd.f32 %v974, %v1097
      %v1099 = vpop.f32.mrb[0].mxu0
      %1100 = vmatprep.mubr.bf16.mxu0 0
      %1101 = vmatmul.mubr.bf16.gmra.mrb[0].mxu0 %v1037
      %v1102 = vpop.f32.mrb[0].mxu0
      %v1103 = vadd.f32 %v979, %v1102
      %v1104 = vpop.f32.mrb[0].mxu0
      %v1105 = vpop.f32.mrb[0].mxu0
      %v1106 = vadd.f32 %v982, %v1105
      %v1107 = vpop.f32.mrb[0].mxu0
      %1108 = vmatprep.mubr.bf16.mxu0 0
      %1109 = vmatmul.mubr.bf16.gmra.mrb[0].mxu0 %v1040
      %v1110 = vpop.f32.mrb[0].mxu0
      %v1111 = vadd.f32 %v987, %v1110
      %v1112 = vpop.f32.mrb[0].mxu0
      %v1113 = vpop.f32.mrb[0].mxu0
      %v1114 = vadd.f32 %v990, %v1113
      %v1115 = vpop.f32.mrb[0].mxu0
      %1116 = vmatprep.mubr.bf16.mxu0 0
      %1117 = vmatmul.mubr.bf16.gmra.mrb[0].mxu0 %v1043
      %v1118 = vpop.f32.mrb[0].mxu0
      %v1119 = vadd.f32 %v995, %v1118
      %v1120 = vpop.f32.mrb[0].mxu0
      %v1121 = vpop.f32.mrb[0].mxu0
      %v1122 = vadd.f32 %v998, %v1121
      %v1123 = vpop.f32.mrb[0].mxu0
      %1124 = vmatprep.mubr.bf16.mxu0 0
      %1125 = vmatmul.mubr.bf16.gmra.mrb[0].mxu0 %v1046
      %v1126 = vpop.f32.mrb[0].mxu0
      %v1127 = vadd.f32 %v1003, %v1126
      %v1128 = vpop.f32.mrb[0].mxu0
      %v1129 = vpop.f32.mrb[0].mxu0
      %v1130 = vadd.f32 %v1006, %v1129
      %v1131 = vpop.f32.mrb[0].mxu0
      %1132 = vmatprep.mubr.bf16.mxu0 0
      %1133 = vmatmul.mubr.bf16.gmra.mrb[0].mxu0 %v1049
      %v1134 = vpop.f32.mrb[0].mxu0
      %v1135 = vadd.f32 %v1011, %v1134
      %v1136 = vpop.f32.mrb[0].mxu0
      %v1137 = vpop.f32.mrb[0].mxu0
      %v1138 = vadd.f32 %v1014, %v1137
      %v1139 = vpop.f32.mrb[0].mxu0
      %1140 = vmatprep.mubr.bf16.mxu0 0
      %1141 = vmatmul.mubr.bf16.gmra.mrb[0].mxu0 %v1052
      %v1142 = vpop.f32.mrb[0].mxu0
      %v1143 = vadd.f32 %v1019, %v1142
      %v1144 = vpop.f32.mrb[0].mxu0
      %v1145 = vpop.f32.mrb[0].mxu0
      %v1146 = vadd.f32 %v1022, %v1145
      %v1147 = vpop.f32.mrb[0].mxu0
      %1148 = vmatprep.mubr.bf16.mxu0 0
      %1149 = vmatmul.mubr.bf16.gmra.mrb[0].mxu0 %v1055
      %v1150 = vpop.f32.mrb[0].mxu0
      %v1151 = vadd.f32 %v1027, %v1150
      %v1152 = vpop.f32.mrb[0].mxu0
      %v1153 = vpop.f32.mrb[0].mxu0
      %v1154 = vadd.f32 %v1030, %v1153
      %v1155 = vpop.f32.mrb[0].mxu0
      %1156 = vdwg.mxu0
      %vm1157 = vcmask 1042432
      %v1158 = vrot.slane %v722, 5
      %v1159 = vrot.slane %v723, 5
      %v1160 = vsel %vm1157, %v1158, %v1159
      %v1161 = vrot.slane %v724, 5
      %v1162 = vsel %vm1157, %v1159, %v1161
      %v1163 = vrot.slane %v725, 5
      %v1164 = vrot.slane %v726, 5
      %v1165 = vsel %vm1157, %v1163, %v1164
      %v1166 = vrot.slane %v727, 5
      %v1167 = vsel %vm1157, %v1164, %v1166
      %v1168 = vrot.slane %v728, 5
      %v1169 = vrot.slane %v729, 5
      %v1170 = vsel %vm1157, %v1168, %v1169
      %v1171 = vrot.slane %v730, 5
      %v1172 = vsel %vm1157, %v1169, %v1171
      %v1173 = vrot.slane %v731, 5
      %v1174 = vrot.slane %v732, 5
      %v1175 = vsel %vm1157, %v1173, %v1174
      %v1176 = vrot.slane %v733, 5
      %v1177 = vsel %vm1157, %v1174, %v1176
      %v1178 = vrot.slane %v734, 5
      %v1179 = vrot.slane %v735, 5
      %v1180 = vsel %vm1157, %v1178, %v1179
      %v1181 = vrot.slane %v736, 5
      %v1182 = vsel %vm1157, %v1179, %v1181
      %v1183 = vrot.slane %v737, 5
      %v1184 = vrot.slane %v738, 5
      %v1185 = vsel %vm1157, %v1183, %v1184
      %v1186 = vrot.slane %v739, 5
      %v1187 = vsel %vm1157, %v1184, %v1186
      %v1188 = vrot.slane %v740, 5
      %v1189 = vrot.slane %v741, 5
      %v1190 = vsel %vm1157, %v1188, %v1189
      %v1191 = vrot.slane %v742, 5
      %v1192 = vsel %vm1157, %v1189, %v1191
      %v1193 = vrot.slane %v743, 5
      %v1194 = vrot.slane %v744, 5
      %v1195 = vsel %vm1157, %v1193, %v1194
      %v1196 = vrot.slane %v745, 5
      %v1197 = vsel %vm1157, %v1194, %v1196
      %v1214 = vpack.c.bf16 %v1162, %v1160
      %v1215 = vpack.c.bf16 %v1167, %v1165
      %v1216 = vpack.c.bf16 %v1172, %v1170
      %v1217 = vpack.c.bf16 %v1177, %v1175
      %v1218 = vpack.c.bf16 %v1182, %v1180
      %v1219 = vpack.c.bf16 %v1187, %v1185
      %v1220 = vpack.c.bf16 %v1192, %v1190
      %v1221 = vpack.c.bf16 %v1197, %v1195
      %s1222 = scalar_lea.vmem %s3, 8
      %v1223 = vld [vmem:[%s1222] sm:$0xf]
      %v1225 = vsel %vm569, %v1214, 0
      %v1228 = vsel %vm569, %v1215, 0
      %v1231 = vsel %vm569, %v1216, 0
      %v1234 = vsel %vm569, %v1217, 0
      %v1237 = vsel %vm569, %v1218, 0
      %v1240 = vsel %vm569, %v1219, 0
      %v1243 = vsel %vm569, %v1220, 0
      %v1246 = vsel %vm569, %v1221, 0
      %v1249 = vsel %vm842, %v1223, 0
      %1251 = vmatprep.subr.bf16.mxu0 0
      %1252 = vmatpush1.bf16.msra.mxu0 %v1249
      %1253 = vmatprep.subr.bf16.mxu0 0
      %1254 = vmatpush1.bf16.msra.mxu0 0
      %1255 = vmatprep.subr.bf16.mxu0 0
      %1256 = vmatpush1.bf16.msra.mxu0 0
      %1257 = vmatprep.subr.bf16.mxu0 0
      %1258 = vmatpush1.bf16.msra.mxu0 0
      %1259 = vmatprep.subr.bf16.mxu0 0
      %1260 = vmatpush1.bf16.msra.mxu0 0
      %1261 = vmatprep.subr.bf16.mxu0 0
      %1262 = vmatpush1.bf16.msra.mxu0 0
      %1263 = vmatprep.subr.bf16.mxu0 0
      %1264 = vmatpush1.bf16.msra.mxu0 0
      %1265 = vmatprep.subr.bf16.mxu0 0
      %1266 = vmatpush1.bf16.msra.mxu0 0
      %1267 = vmatprep.subr.bf16.mxu0 0
      %1268 = vmatpush1.bf16.msra.mxu0 0
      %1269 = vmatprep.subr.bf16.mxu0 0
      %1270 = vmatpush1.bf16.msra.mxu0 0
      %1271 = vmatprep.subr.bf16.mxu0 0
      %1272 = vmatpush1.bf16.msra.mxu0 0
      %1273 = vmatprep.subr.bf16.mxu0 0
      %1274 = vmatpush1.bf16.msra.mxu0 0
      %1275 = vmatprep.subr.bf16.mxu0 0
      %1276 = vmatpush1.bf16.msra.mxu0 0
      %1277 = vmatprep.subr.bf16.mxu0 0
      %1278 = vmatpush1.bf16.msra.mxu0 0
      %1279 = vmatprep.subr.bf16.mxu0 0
      %1280 = vmatpush1.bf16.msra.mxu0 0
      %1281 = vmatprep.subr.bf16.mxu0 0
      %1282 = vmatpush1.bf16.msra.mxu0 0
      %1283 = vmatprep.mubr.bf16.mxu0 0
      %1284 = vmatmul.mubr.bf16.gmra.mrb[0].mxu0 %v1225
      %v1285 = vpop.f32.mrb[0].mxu0
      %v1286 = vadd.f32 0.0, %v1285
      %v1287 = vpop.f32.mrb[0].mxu0
      %v1288 = vpop.f32.mrb[0].mxu0
      %v1289 = vadd.f32 0.0, %v1288
      %v1290 = vpop.f32.mrb[0].mxu0
      %1291 = vmatprep.mubr.bf16.mxu0 0
      %1292 = vmatmul.mubr.bf16.gmra.mrb[0].mxu0 %v1228
      %v1293 = vpop.f32.mrb[0].mxu0
      %v1294 = vadd.f32 0.0, %v1293
      %v1295 = vpop.f32.mrb[0].mxu0
      %v1296 = vpop.f32.mrb[0].mxu0
      %v1297 = vadd.f32 0.0, %v1296
      %v1298 = vpop.f32.mrb[0].mxu0
      %1299 = vmatprep.mubr.bf16.mxu0 0
      %1300 = vmatmul.mubr.bf16.gmra.mrb[0].mxu0 %v1231
      %v1301 = vpop.f32.mrb[0].mxu0
      %v1302 = vadd.f32 0.0, %v1301
      %v1303 = vpop.f32.mrb[0].mxu0
      %v1304 = vpop.f32.mrb[0].mxu0
      %v1305 = vadd.f32 0.0, %v1304
      %v1306 = vpop.f32.mrb[0].mxu0
      %1307 = vmatprep.mubr.bf16.mxu0 0
      %1308 = vmatmul.mubr.bf16.gmra.mrb[0].mxu0 %v1234
      %v1309 = vpop.f32.mrb[0].mxu0
      %v1310 = vadd.f32 0.0, %v1309
      %v1311 = vpop.f32.mrb[0].mxu0
      %v1312 = vpop.f32.mrb[0].mxu0
      %v1313 = vadd.f32 0.0, %v1312
      %v1314 = vpop.f32.mrb[0].mxu0
      %1315 = vmatprep.mubr.bf16.mxu0 0
      %1316 = vmatmul.mubr.bf16.gmra.mrb[0].mxu0 %v1237
      %v1317 = vpop.f32.mrb[0].mxu0
      %v1318 = vadd.f32 0.0, %v1317
      %v1319 = vpop.f32.mrb[0].mxu0
      %v1320 = vpop.f32.mrb[0].mxu0
      %v1321 = vadd.f32 0.0, %v1320
      %v1322 = vpop.f32.mrb[0].mxu0
      %1323 = vmatprep.mubr.bf16.mxu0 0
      %1324 = vmatmul.mubr.bf16.gmra.mrb[0].mxu0 %v1240
      %v1325 = vpop.f32.mrb[0].mxu0
      %v1326 = vadd.f32 0.0, %v1325
      %v1327 = vpop.f32.mrb[0].mxu0
      %v1328 = vpop.f32.mrb[0].mxu0
      %v1329 = vadd.f32 0.0, %v1328
      %v1330 = vpop.f32.mrb[0].mxu0
      %1331 = vmatprep.mubr.bf16.mxu0 0
      %1332 = vmatmul.mubr.bf16.gmra.mrb[0].mxu0 %v1243
      %v1333 = vpop.f32.mrb[0].mxu0
      %v1334 = vadd.f32 0.0, %v1333
      %v1335 = vpop.f32.mrb[0].mxu0
      %v1336 = vpop.f32.mrb[0].mxu0
      %v1337 = vadd.f32 0.0, %v1336
      %v1338 = vpop.f32.mrb[0].mxu0
      %1339 = vmatprep.mubr.bf16.mxu0 0
      %1340 = vmatmul.mubr.bf16.gmra.mrb[0].mxu0 %v1246
      %v1341 = vpop.f32.mrb[0].mxu0
      %v1342 = vadd.f32 0.0, %v1341
      %v1343 = vpop.f32.mrb[0].mxu0
      %v1344 = vpop.f32.mrb[0].mxu0
      %v1345 = vadd.f32 0.0, %v1344
      %v1346 = vpop.f32.mrb[0].mxu0
      %1347 = vdwg.mxu0
      %v1348 = vadd.f32 %v1095, %v1286
      %v1349 = vadd.f32 %v1098, %v1289
      %v1350 = vadd.f32 %v1103, %v1294
      %v1351 = vadd.f32 %v1106, %v1297
      %v1352 = vadd.f32 %v1111, %v1302
      %v1353 = vadd.f32 %v1114, %v1305
      %v1354 = vadd.f32 %v1119, %v1310
      %v1355 = vadd.f32 %v1122, %v1313
      %v1356 = vadd.f32 %v1127, %v1318
      %v1357 = vadd.f32 %v1130, %v1321
      %v1358 = vadd.f32 %v1135, %v1326
      %v1359 = vadd.f32 %v1138, %v1329
      %v1360 = vadd.f32 %v1143, %v1334
      %v1361 = vadd.f32 %v1146, %v1337
      %v1362 = vadd.f32 %v1151, %v1342
      %v1363 = vadd.f32 %v1154, %v1345
      %v1367 = vrot.slane %v746, 3
      %v1368 = vrot.slane %v747, 3
      %v1369 = vsel %vm776, %v1367, %v1368
      %v1370 = vrot.slane %v748, 3
      %v1371 = vsel %vm776, %v1368, %v1370
      %v1374 = vpack.c.bf16 %v1371, %v1369
      %s1375 = scalar_lea.vmem %s3, 12
      %v1376 = vld [vmem:[%s1375] sm:$0xf]
      %v1378 = vsel %vm569, %v1374, 0
      %v1381 = vsel %vm842, %v1376, 0
      %1383 = vmatprep.subr.bf16.mxu0 0
      %1384 = vmatpush1.bf16.msra.mxu0 %v1381
      %1385 = vmatprep.subr.bf16.mxu0 0
      %1386 = vmatpush1.bf16.msra.mxu0 0
      %1387 = vmatprep.subr.bf16.mxu0 0
      %1388 = vmatpush1.bf16.msra.mxu0 0
      %1389 = vmatprep.subr.bf16.mxu0 0
      %1390 = vmatpush1.bf16.msra.mxu0 0
      %1391 = vmatprep.subr.bf16.mxu0 0
      %1392 = vmatpush1.bf16.msra.mxu0 0
      %1393 = vmatprep.subr.bf16.mxu0 0
      %1394 = vmatpush1.bf16.msra.mxu0 0
      %1395 = vmatprep.subr.bf16.mxu0 0
      %1396 = vmatpush1.bf16.msra.mxu0 0
      %1397 = vmatprep.subr.bf16.mxu0 0
      %1398 = vmatpush1.bf16.msra.mxu0 0
      %1399 = vmatprep.subr.bf16.mxu0 0
      %1400 = vmatpush1.bf16.msra.mxu0 0
      %1401 = vmatprep.subr.bf16.mxu0 0
      %1402 = vmatpush1.bf16.msra.mxu0 0
      %1403 = vmatprep.subr.bf16.mxu0 0
      %1404 = vmatpush1.bf16.msra.mxu0 0
      %1405 = vmatprep.subr.bf16.mxu0 0
      %1406 = vmatpush1.bf16.msra.mxu0 0
      %1407 = vmatprep.subr.bf16.mxu0 0
      %1408 = vmatpush1.bf16.msra.mxu0 0
      %1409 = vmatprep.subr.bf16.mxu0 0
      %1410 = vmatpush1.bf16.msra.mxu0 0
      %1411 = vmatprep.subr.bf16.mxu0 0
      %1412 = vmatpush1.bf16.msra.mxu0 0
      %1413 = vmatprep.subr.bf16.mxu0 0
      %1414 = vmatpush1.bf16.msra.mxu0 0
      %1415 = vmatprep.mubr.bf16.mxu0 0
      %1416 = vmatmul.mubr.bf16.gmra.mrb[0].mxu0 %v1037
      %v1417 = vpop.f32.mrb[0].mxu0
      %v1418 = vadd.f32 0.0, %v1417
      %v1419 = vpop.f32.mrb[0].mxu0
      %v1420 = vpop.f32.mrb[0].mxu0
      %v1421 = vadd.f32 0.0, %v1420
      %v1422 = vpop.f32.mrb[0].mxu0
      %1423 = vmatprep.mubr.bf16.mxu0 0
      %1424 = vmatmul.mubr.bf16.gmra.mrb[0].mxu0 %v1040
      %v1425 = vpop.f32.mrb[0].mxu0
      %v1426 = vadd.f32 0.0, %v1425
      %v1427 = vpop.f32.mrb[0].mxu0
      %v1428 = vpop.f32.mrb[0].mxu0
      %v1429 = vadd.f32 0.0, %v1428
      %v1430 = vpop.f32.mrb[0].mxu0
      %1431 = vmatprep.mubr.bf16.mxu0 0
      %1432 = vmatmul.mubr.bf16.gmra.mrb[0].mxu0 %v1043
      %v1433 = vpop.f32.mrb[0].mxu0
      %v1434 = vadd.f32 0.0, %v1433
      %v1435 = vpop.f32.mrb[0].mxu0
      %v1436 = vpop.f32.mrb[0].mxu0
      %v1437 = vadd.f32 0.0, %v1436
      %v1438 = vpop.f32.mrb[0].mxu0
      %1439 = vmatprep.mubr.bf16.mxu0 0
      %1440 = vmatmul.mubr.bf16.gmra.mrb[0].mxu0 %v1046
      %v1441 = vpop.f32.mrb[0].mxu0
      %v1442 = vadd.f32 0.0, %v1441
      %v1443 = vpop.f32.mrb[0].mxu0
      %v1444 = vpop.f32.mrb[0].mxu0
      %v1445 = vadd.f32 0.0, %v1444
      %v1446 = vpop.f32.mrb[0].mxu0
      %1447 = vmatprep.mubr.bf16.mxu0 0
      %1448 = vmatmul.mubr.bf16.gmra.mrb[0].mxu0 %v1049
      %v1449 = vpop.f32.mrb[0].mxu0
      %v1450 = vadd.f32 0.0, %v1449
      %v1451 = vpop.f32.mrb[0].mxu0
      %v1452 = vpop.f32.mrb[0].mxu0
      %v1453 = vadd.f32 0.0, %v1452
      %v1454 = vpop.f32.mrb[0].mxu0
      %1455 = vmatprep.mubr.bf16.mxu0 0
      %1456 = vmatmul.mubr.bf16.gmra.mrb[0].mxu0 %v1052
      %v1457 = vpop.f32.mrb[0].mxu0
      %v1458 = vadd.f32 0.0, %v1457
      %v1459 = vpop.f32.mrb[0].mxu0
      %v1460 = vpop.f32.mrb[0].mxu0
      %v1461 = vadd.f32 0.0, %v1460
      %v1462 = vpop.f32.mrb[0].mxu0
      %1463 = vmatprep.mubr.bf16.mxu0 0
      %1464 = vmatmul.mubr.bf16.gmra.mrb[0].mxu0 %v1055
      %v1465 = vpop.f32.mrb[0].mxu0
      %v1466 = vadd.f32 0.0, %v1465
      %v1467 = vpop.f32.mrb[0].mxu0
      %v1468 = vpop.f32.mrb[0].mxu0
      %v1469 = vadd.f32 0.0, %v1468
      %v1470 = vpop.f32.mrb[0].mxu0
      %1471 = vmatprep.mubr.bf16.mxu0 0
      %1472 = vmatmul.mubr.bf16.gmra.mrb[0].mxu0 %v1378
      %v1473 = vpop.f32.mrb[0].mxu0
      %v1474 = vadd.f32 0.0, %v1473
      %v1475 = vpop.f32.mrb[0].mxu0
      %v1476 = vpop.f32.mrb[0].mxu0
      %v1477 = vadd.f32 0.0, %v1476
      %v1478 = vpop.f32.mrb[0].mxu0
      %1479 = vdwg.mxu0
      %v1480 = vadd.f32 %v1348, %v1418
      %v1481 = vadd.f32 %v1349, %v1421
      %v1482 = vadd.f32 %v1350, %v1426
      %v1483 = vadd.f32 %v1351, %v1429
      %v1484 = vadd.f32 %v1352, %v1434
      %v1485 = vadd.f32 %v1353, %v1437
      %v1486 = vadd.f32 %v1354, %v1442
      %v1487 = vadd.f32 %v1355, %v1445
      %v1488 = vadd.f32 %v1356, %v1450
      %v1489 = vadd.f32 %v1357, %v1453
      %v1490 = vadd.f32 %v1358, %v1458
      %v1491 = vadd.f32 %v1359, %v1461
      %v1492 = vadd.f32 %v1360, %v1466
      %v1493 = vadd.f32 %v1361, %v1469
      %v1494 = vadd.f32 %v1362, %v1474
      %v1495 = vadd.f32 %v1363, %v1477
      %v1496 = vrot.slane %v746, 4
      %v1497 = vrot.slane %v747, 4
      %v1498 = vsel %vm842, %v1496, %v1497
      %v1499 = vrot.slane %v748, 4
      %v1500 = vsel %vm842, %v1497, %v1499
      %v1503 = vpack.c.bf16 %v1500, %v1498
      %s1504 = scalar_lea.vmem %s3, 16
      %v1505 = vld [vmem:[%s1504] sm:$0xf]
      %v1507 = vsel %vm569, %v1503, 0
      %v1510 = vsel %vm842, %v1505, 0
      %1512 = vmatprep.subr.bf16.mxu0 0
      %1513 = vmatpush1.bf16.msra.mxu0 %v1510
      %1514 = vmatprep.subr.bf16.mxu0 0
      %1515 = vmatpush1.bf16.msra.mxu0 0
      %1516 = vmatprep.subr.bf16.mxu0 0
      %1517 = vmatpush1.bf16.msra.mxu0 0
      %1518 = vmatprep.subr.bf16.mxu0 0
      %1519 = vmatpush1.bf16.msra.mxu0 0
      %1520 = vmatprep.subr.bf16.mxu0 0
      %1521 = vmatpush1.bf16.msra.mxu0 0
      %1522 = vmatprep.subr.bf16.mxu0 0
      %1523 = vmatpush1.bf16.msra.mxu0 0
      %1524 = vmatprep.subr.bf16.mxu0 0
      %1525 = vmatpush1.bf16.msra.mxu0 0
      %1526 = vmatprep.subr.bf16.mxu0 0
      %1527 = vmatpush1.bf16.msra.mxu0 0
      %1528 = vmatprep.subr.bf16.mxu0 0
      %1529 = vmatpush1.bf16.msra.mxu0 0
      %1530 = vmatprep.subr.bf16.mxu0 0
      %1531 = vmatpush1.bf16.msra.mxu0 0
      %1532 = vmatprep.subr.bf16.mxu0 0
      %1533 = vmatpush1.bf16.msra.mxu0 0
      %1534 = vmatprep.subr.bf16.mxu0 0
      %1535 = vmatpush1.bf16.msra.mxu0 0
      %1536 = vmatprep.subr.bf16.mxu0 0
      %1537 = vmatpush1.bf16.msra.mxu0 0
      %1538 = vmatprep.subr.bf16.mxu0 0
      %1539 = vmatpush1.bf16.msra.mxu0 0
      %1540 = vmatprep.subr.bf16.mxu0 0
      %1541 = vmatpush1.bf16.msra.mxu0 0
      %1542 = vmatprep.subr.bf16.mxu0 0
      %1543 = vmatpush1.bf16.msra.mxu0 0
      %1544 = vmatprep.mubr.bf16.mxu0 0
      %1545 = vmatmul.mubr.bf16.gmra.mrb[0].mxu0 %v913
      %v1546 = vpop.f32.mrb[0].mxu0
      %v1547 = vadd.f32 0.0, %v1546
      %v1548 = vpop.f32.mrb[0].mxu0
      %v1549 = vpop.f32.mrb[0].mxu0
      %v1550 = vadd.f32 0.0, %v1549
      %v1551 = vpop.f32.mrb[0].mxu0
      %1552 = vmatprep.mubr.bf16.mxu0 0
      %1553 = vmatmul.mubr.bf16.gmra.mrb[0].mxu0 %v916
      %v1554 = vpop.f32.mrb[0].mxu0
      %v1555 = vadd.f32 0.0, %v1554
      %v1556 = vpop.f32.mrb[0].mxu0
      %v1557 = vpop.f32.mrb[0].mxu0
      %v1558 = vadd.f32 0.0, %v1557
      %v1559 = vpop.f32.mrb[0].mxu0
      %1560 = vmatprep.mubr.bf16.mxu0 0
      %1561 = vmatmul.mubr.bf16.gmra.mrb[0].mxu0 %v919
      %v1562 = vpop.f32.mrb[0].mxu0
      %v1563 = vadd.f32 0.0, %v1562
      %v1564 = vpop.f32.mrb[0].mxu0
      %v1565 = vpop.f32.mrb[0].mxu0
      %v1566 = vadd.f32 0.0, %v1565
      %v1567 = vpop.f32.mrb[0].mxu0
      %1568 = vmatprep.mubr.bf16.mxu0 0
      %1569 = vmatmul.mubr.bf16.gmra.mrb[0].mxu0 %v922
      %v1570 = vpop.f32.mrb[0].mxu0
      %v1571 = vadd.f32 0.0, %v1570
      %v1572 = vpop.f32.mrb[0].mxu0
      %v1573 = vpop.f32.mrb[0].mxu0
      %v1574 = vadd.f32 0.0, %v1573
      %v1575 = vpop.f32.mrb[0].mxu0
      %1576 = vmatprep.mubr.bf16.mxu0 0
      %1577 = vmatmul.mubr.bf16.gmra.mrb[0].mxu0 %v925
      %v1578 = vpop.f32.mrb[0].mxu0
      %v1579 = vadd.f32 0.0, %v1578
      %v1580 = vpop.f32.mrb[0].mxu0
      %v1581 = vpop.f32.mrb[0].mxu0
      %v1582 = vadd.f32 0.0, %v1581
      %v1583 = vpop.f32.mrb[0].mxu0
      %1584 = vmatprep.mubr.bf16.mxu0 0
      %1585 = vmatmul.mubr.bf16.gmra.mrb[0].mxu0 %v928
      %v1586 = vpop.f32.mrb[0].mxu0
      %v1587 = vadd.f32 0.0, %v1586
      %v1588 = vpop.f32.mrb[0].mxu0
      %v1589 = vpop.f32.mrb[0].mxu0
      %v1590 = vadd.f32 0.0, %v1589
      %v1591 = vpop.f32.mrb[0].mxu0
      %1592 = vmatprep.mubr.bf16.mxu0 0
      %1593 = vmatmul.mubr.bf16.gmra.mrb[0].mxu0 %v931
      %v1594 = vpop.f32.mrb[0].mxu0
      %v1595 = vadd.f32 0.0, %v1594
      %v1596 = vpop.f32.mrb[0].mxu0
      %v1597 = vpop.f32.mrb[0].mxu0
      %v1598 = vadd.f32 0.0, %v1597
      %v1599 = vpop.f32.mrb[0].mxu0
      %1600 = vmatprep.mubr.bf16.mxu0 0
      %1601 = vmatmul.mubr.bf16.gmra.mrb[0].mxu0 %v1507
      %v1602 = vpop.f32.mrb[0].mxu0
      %v1603 = vadd.f32 0.0, %v1602
      %v1604 = vpop.f32.mrb[0].mxu0
      %v1605 = vpop.f32.mrb[0].mxu0
      %v1606 = vadd.f32 0.0, %v1605
      %v1607 = vpop.f32.mrb[0].mxu0
      %1608 = vdwg.mxu0
      %v1609 = vadd.f32 %v1480, %v1547
      %v1610 = vadd.f32 %v1481, %v1550
      %v1611 = vadd.f32 %v1482, %v1555
      %v1612 = vadd.f32 %v1483, %v1558
      %v1613 = vadd.f32 %v1484, %v1563
      %v1614 = vadd.f32 %v1485, %v1566
      %v1615 = vadd.f32 %v1486, %v1571
      %v1616 = vadd.f32 %v1487, %v1574
      %v1617 = vadd.f32 %v1488, %v1579
      %v1618 = vadd.f32 %v1489, %v1582
      %v1619 = vadd.f32 %v1490, %v1587
      %v1620 = vadd.f32 %v1491, %v1590
      %v1621 = vadd.f32 %v1492, %v1595
      %v1622 = vadd.f32 %v1493, %v1598
      %v1623 = vadd.f32 %v1494, %v1603
      %v1624 = vadd.f32 %v1495, %v1606
      %v1625 = vrot.slane %v746, 5
      %v1626 = vrot.slane %v747, 5
      %v1627 = vsel %vm1157, %v1625, %v1626
      %v1628 = vrot.slane %v748, 5
      %v1629 = vsel %vm1157, %v1626, %v1628
      %v1632 = vpack.c.bf16 %v1629, %v1627
      %s1633 = scalar_lea.vmem %s3, 20
      %v1634 = vld [vmem:[%s1633] sm:$0xf]
      %v1636 = vsel %vm569, %v1632, 0
      %v1639 = vsel %vm842, %v1634, 0
      %1641 = vmatprep.subr.bf16.mxu0 0
      %1642 = vmatpush1.bf16.msra.mxu0 %v1639
      %1643 = vmatprep.subr.bf16.mxu0 0
      %1644 = vmatpush1.bf16.msra.mxu0 0
      %1645 = vmatprep.subr.bf16.mxu0 0
      %1646 = vmatpush1.bf16.msra.mxu0 0
      %1647 = vmatprep.subr.bf16.mxu0 0
      %1648 = vmatpush1.bf16.msra.mxu0 0
      %1649 = vmatprep.subr.bf16.mxu0 0
      %1650 = vmatpush1.bf16.msra.mxu0 0
      %1651 = vmatprep.subr.bf16.mxu0 0
      %1652 = vmatpush1.bf16.msra.mxu0 0
      %1653 = vmatprep.subr.bf16.mxu0 0
      %1654 = vmatpush1.bf16.msra.mxu0 0
      %1655 = vmatprep.subr.bf16.mxu0 0
      %1656 = vmatpush1.bf16.msra.mxu0 0
      %1657 = vmatprep.subr.bf16.mxu0 0
      %1658 = vmatpush1.bf16.msra.mxu0 0
      %1659 = vmatprep.subr.bf16.mxu0 0
      %1660 = vmatpush1.bf16.msra.mxu0 0
      %1661 = vmatprep.subr.bf16.mxu0 0
      %1662 = vmatpush1.bf16.msra.mxu0 0
      %1663 = vmatprep.subr.bf16.mxu0 0
      %1664 = vmatpush1.bf16.msra.mxu0 0
      %1665 = vmatprep.subr.bf16.mxu0 0
      %1666 = vmatpush1.bf16.msra.mxu0 0
      %1667 = vmatprep.subr.bf16.mxu0 0
      %1668 = vmatpush1.bf16.msra.mxu0 0
      %1669 = vmatprep.subr.bf16.mxu0 0
      %1670 = vmatpush1.bf16.msra.mxu0 0
      %1671 = vmatprep.subr.bf16.mxu0 0
      %1672 = vmatpush1.bf16.msra.mxu0 0
      %1673 = vmatprep.mubr.bf16.mxu0 0
      %1674 = vmatmul.mubr.bf16.gmra.mrb[0].mxu0 %v1228
      %v1675 = vpop.f32.mrb[0].mxu0
      %v1676 = vadd.f32 0.0, %v1675
      %v1677 = vpop.f32.mrb[0].mxu0
      %v1678 = vpop.f32.mrb[0].mxu0
      %v1679 = vadd.f32 0.0, %v1678
      %v1680 = vpop.f32.mrb[0].mxu0
      %1681 = vmatprep.mubr.bf16.mxu0 0
      %1682 = vmatmul.mubr.bf16.gmra.mrb[0].mxu0 %v1231
      %v1683 = vpop.f32.mrb[0].mxu0
      %v1684 = vadd.f32 0.0, %v1683
      %v1685 = vpop.f32.mrb[0].mxu0
      %v1686 = vpop.f32.mrb[0].mxu0
      %v1687 = vadd.f32 0.0, %v1686
      %v1688 = vpop.f32.mrb[0].mxu0
      %1689 = vmatprep.mubr.bf16.mxu0 0
      %1690 = vmatmul.mubr.bf16.gmra.mrb[0].mxu0 %v1234
      %v1691 = vpop.f32.mrb[0].mxu0
      %v1692 = vadd.f32 0.0, %v1691
      %v1693 = vpop.f32.mrb[0].mxu0
      %v1694 = vpop.f32.mrb[0].mxu0
      %v1695 = vadd.f32 0.0, %v1694
      %v1696 = vpop.f32.mrb[0].mxu0
      %1697 = vmatprep.mubr.bf16.mxu0 0
      %1698 = vmatmul.mubr.bf16.gmra.mrb[0].mxu0 %v1237
      %v1699 = vpop.f32.mrb[0].mxu0
      %v1700 = vadd.f32 0.0, %v1699
      %v1701 = vpop.f32.mrb[0].mxu0
      %v1702 = vpop.f32.mrb[0].mxu0
      %v1703 = vadd.f32 0.0, %v1702
      %v1704 = vpop.f32.mrb[0].mxu0
      %1705 = vmatprep.mubr.bf16.mxu0 0
      %1706 = vmatmul.mubr.bf16.gmra.mrb[0].mxu0 %v1240
      %v1707 = vpop.f32.mrb[0].mxu0
      %v1708 = vadd.f32 0.0, %v1707
      %v1709 = vpop.f32.mrb[0].mxu0
      %v1710 = vpop.f32.mrb[0].mxu0
      %v1711 = vadd.f32 0.0, %v1710
      %v1712 = vpop.f32.mrb[0].mxu0
      %1713 = vmatprep.mubr.bf16.mxu0 0
      %1714 = vmatmul.mubr.bf16.gmra.mrb[0].mxu0 %v1243
      %v1715 = vpop.f32.mrb[0].mxu0
      %v1716 = vadd.f32 0.0, %v1715
      %v1717 = vpop.f32.mrb[0].mxu0
      %v1718 = vpop.f32.mrb[0].mxu0
      %v1719 = vadd.f32 0.0, %v1718
      %v1720 = vpop.f32.mrb[0].mxu0
      %1721 = vmatprep.mubr.bf16.mxu0 0
      %1722 = vmatmul.mubr.bf16.gmra.mrb[0].mxu0 %v1246
      %v1723 = vpop.f32.mrb[0].mxu0
      %v1724 = vadd.f32 0.0, %v1723
      %v1725 = vpop.f32.mrb[0].mxu0
      %v1726 = vpop.f32.mrb[0].mxu0
      %v1727 = vadd.f32 0.0, %v1726
      %v1728 = vpop.f32.mrb[0].mxu0
      %1729 = vmatprep.mubr.bf16.mxu0 0
      %1730 = vmatmul.mubr.bf16.gmra.mrb[0].mxu0 %v1636
      %v1731 = vpop.f32.mrb[0].mxu0
      %v1732 = vadd.f32 0.0, %v1731
      %v1733 = vpop.f32.mrb[0].mxu0
      %v1734 = vpop.f32.mrb[0].mxu0
      %v1735 = vadd.f32 0.0, %v1734
      %v1736 = vpop.f32.mrb[0].mxu0
      %1737 = vdwg.mxu0
      %v1738 = vadd.f32 %v1609, %v1676
      %v1739 = vadd.f32 %v1610, %v1679
      %v1740 = vadd.f32 %v1611, %v1684
      %v1741 = vadd.f32 %v1612, %v1687
      %v1742 = vadd.f32 %v1613, %v1692
      %v1743 = vadd.f32 %v1614, %v1695
      %v1744 = vadd.f32 %v1615, %v1700
      %v1745 = vadd.f32 %v1616, %v1703
      %v1746 = vadd.f32 %v1617, %v1708
      %v1747 = vadd.f32 %v1618, %v1711
      %v1748 = vadd.f32 %v1619, %v1716
      %v1749 = vadd.f32 %v1620, %v1719
      %v1750 = vadd.f32 %v1621, %v1724
      %v1751 = vadd.f32 %v1622, %v1727
      %v1752 = vadd.f32 %v1623, %v1732
      %v1753 = vadd.f32 %v1624, %v1735
      %v1757 = vrot.slane %v749, 3
      %v1758 = vrot.slane %v750, 3
      %v1759 = vsel %vm776, %v1757, %v1758
      %v1760 = vrot.slane %v751, 3
      %v1761 = vsel %vm776, %v1758, %v1760
      %v1764 = vpack.c.bf16 %v1761, %v1759
      %s1765 = scalar_lea.vmem %s3, 24
      %v1766 = vld [vmem:[%s1765] sm:$0xf]
      %v1768 = vsel %vm569, %v1764, 0
      %v1771 = vsel %vm842, %v1766, 0
      %1773 = vmatprep.subr.bf16.mxu0 0
      %1774 = vmatpush1.bf16.msra.mxu0 %v1771
      %1775 = vmatprep.subr.bf16.mxu0 0
      %1776 = vmatpush1.bf16.msra.mxu0 0
      %1777 = vmatprep.subr.bf16.mxu0 0
      %1778 = vmatpush1.bf16.msra.mxu0 0
      %1779 = vmatprep.subr.bf16.mxu0 0
      %1780 = vmatpush1.bf16.msra.mxu0 0
      %1781 = vmatprep.subr.bf16.mxu0 0
      %1782 = vmatpush1.bf16.msra.mxu0 0
      %1783 = vmatprep.subr.bf16.mxu0 0
      %1784 = vmatpush1.bf16.msra.mxu0 0
      %1785 = vmatprep.subr.bf16.mxu0 0
      %1786 = vmatpush1.bf16.msra.mxu0 0
      %1787 = vmatprep.subr.bf16.mxu0 0
      %1788 = vmatpush1.bf16.msra.mxu0 0
      %1789 = vmatprep.subr.bf16.mxu0 0
      %1790 = vmatpush1.bf16.msra.mxu0 0
      %1791 = vmatprep.subr.bf16.mxu0 0
      %1792 = vmatpush1.bf16.msra.mxu0 0
      %1793 = vmatprep.subr.bf16.mxu0 0
      %1794 = vmatpush1.bf16.msra.mxu0 0
      %1795 = vmatprep.subr.bf16.mxu0 0
      %1796 = vmatpush1.bf16.msra.mxu0 0
      %1797 = vmatprep.subr.bf16.mxu0 0
      %1798 = vmatpush1.bf16.msra.mxu0 0
      %1799 = vmatprep.subr.bf16.mxu0 0
      %1800 = vmatpush1.bf16.msra.mxu0 0
      %1801 = vmatprep.subr.bf16.mxu0 0
      %1802 = vmatpush1.bf16.msra.mxu0 0
      %1803 = vmatprep.subr.bf16.mxu0 0
      %1804 = vmatpush1.bf16.msra.mxu0 0
      %1805 = vmatprep.mubr.bf16.mxu0 0
      %1806 = vmatmul.mubr.bf16.gmra.mrb[0].mxu0 %v1040
      %v1807 = vpop.f32.mrb[0].mxu0
      %v1808 = vadd.f32 0.0, %v1807
      %v1809 = vpop.f32.mrb[0].mxu0
      %v1810 = vpop.f32.mrb[0].mxu0
      %v1811 = vadd.f32 0.0, %v1810
      %v1812 = vpop.f32.mrb[0].mxu0
      %1813 = vmatprep.mubr.bf16.mxu0 0
      %1814 = vmatmul.mubr.bf16.gmra.mrb[0].mxu0 %v1043
      %v1815 = vpop.f32.mrb[0].mxu0
      %v1816 = vadd.f32 0.0, %v1815
      %v1817 = vpop.f32.mrb[0].mxu0
      %v1818 = vpop.f32.mrb[0].mxu0
      %v1819 = vadd.f32 0.0, %v1818
      %v1820 = vpop.f32.mrb[0].mxu0
      %1821 = vmatprep.mubr.bf16.mxu0 0
      %1822 = vmatmul.mubr.bf16.gmra.mrb[0].mxu0 %v1046
      %v1823 = vpop.f32.mrb[0].mxu0
      %v1824 = vadd.f32 0.0, %v1823
      %v1825 = vpop.f32.mrb[0].mxu0
      %v1826 = vpop.f32.mrb[0].mxu0
      %v1827 = vadd.f32 0.0, %v1826
      %v1828 = vpop.f32.mrb[0].mxu0
      %1829 = vmatprep.mubr.bf16.mxu0 0
      %1830 = vmatmul.mubr.bf16.gmra.mrb[0].mxu0 %v1049
      %v1831 = vpop.f32.mrb[0].mxu0
      %v1832 = vadd.f32 0.0, %v1831
      %v1833 = vpop.f32.mrb[0].mxu0
      %v1834 = vpop.f32.mrb[0].mxu0
      %v1835 = vadd.f32 0.0, %v1834
      %v1836 = vpop.f32.mrb[0].mxu0
      %1837 = vmatprep.mubr.bf16.mxu0 0
      %1838 = vmatmul.mubr.bf16.gmra.mrb[0].mxu0 %v1052
      %v1839 = vpop.f32.mrb[0].mxu0
      %v1840 = vadd.f32 0.0, %v1839
      %v1841 = vpop.f32.mrb[0].mxu0
      %v1842 = vpop.f32.mrb[0].mxu0
      %v1843 = vadd.f32 0.0, %v1842
      %v1844 = vpop.f32.mrb[0].mxu0
      %1845 = vmatprep.mubr.bf16.mxu0 0
      %1846 = vmatmul.mubr.bf16.gmra.mrb[0].mxu0 %v1055
      %v1847 = vpop.f32.mrb[0].mxu0
      %v1848 = vadd.f32 0.0, %v1847
      %v1849 = vpop.f32.mrb[0].mxu0
      %v1850 = vpop.f32.mrb[0].mxu0
      %v1851 = vadd.f32 0.0, %v1850
      %v1852 = vpop.f32.mrb[0].mxu0
      %1853 = vmatprep.mubr.bf16.mxu0 0
      %1854 = vmatmul.mubr.bf16.gmra.mrb[0].mxu0 %v1378
      %v1855 = vpop.f32.mrb[0].mxu0
      %v1856 = vadd.f32 0.0, %v1855
      %v1857 = vpop.f32.mrb[0].mxu0
      %v1858 = vpop.f32.mrb[0].mxu0
      %v1859 = vadd.f32 0.0, %v1858
      %v1860 = vpop.f32.mrb[0].mxu0
      %1861 = vmatprep.mubr.bf16.mxu0 0
      %1862 = vmatmul.mubr.bf16.gmra.mrb[0].mxu0 %v1768
      %v1863 = vpop.f32.mrb[0].mxu0
      %v1864 = vadd.f32 0.0, %v1863
      %v1865 = vpop.f32.mrb[0].mxu0
      %v1866 = vpop.f32.mrb[0].mxu0
      %v1867 = vadd.f32 0.0, %v1866
      %v1868 = vpop.f32.mrb[0].mxu0
      %1869 = vdwg.mxu0
      %v1870 = vadd.f32 %v1738, %v1808
      %v1871 = vadd.f32 %v1739, %v1811
      %v1872 = vadd.f32 %v1740, %v1816
      %v1873 = vadd.f32 %v1741, %v1819
      %v1874 = vadd.f32 %v1742, %v1824
      %v1875 = vadd.f32 %v1743, %v1827
      %v1876 = vadd.f32 %v1744, %v1832
      %v1877 = vadd.f32 %v1745, %v1835
      %v1878 = vadd.f32 %v1746, %v1840
      %v1879 = vadd.f32 %v1747, %v1843
      %v1880 = vadd.f32 %v1748, %v1848
      %v1881 = vadd.f32 %v1749, %v1851
      %v1882 = vadd.f32 %v1750, %v1856
      %v1883 = vadd.f32 %v1751, %v1859
      %v1884 = vadd.f32 %v1752, %v1864
      %v1885 = vadd.f32 %v1753, %v1867
      %v1886 = vrot.slane %v749, 4
      %v1887 = vrot.slane %v750, 4
      %v1888 = vsel %vm842, %v1886, %v1887
      %v1889 = vrot.slane %v751, 4
      %v1890 = vsel %vm842, %v1887, %v1889
      %v1893 = vpack.c.bf16 %v1890, %v1888
      %s1894 = scalar_lea.vmem %s3, 28
      %v1895 = vld [vmem:[%s1894] sm:$0xf]
      %v1897 = vsel %vm569, %v1893, 0
      %v1900 = vsel %vm842, %v1895, 0
      %1902 = vmatprep.subr.bf16.mxu0 0
      %1903 = vmatpush1.bf16.msra.mxu0 %v1900
      %1904 = vmatprep.subr.bf16.mxu0 0
      %1905 = vmatpush1.bf16.msra.mxu0 0
      %1906 = vmatprep.subr.bf16.mxu0 0
      %1907 = vmatpush1.bf16.msra.mxu0 0
      %1908 = vmatprep.subr.bf16.mxu0 0
      %1909 = vmatpush1.bf16.msra.mxu0 0
      %1910 = vmatprep.subr.bf16.mxu0 0
      %1911 = vmatpush1.bf16.msra.mxu0 0
      %1912 = vmatprep.subr.bf16.mxu0 0
      %1913 = vmatpush1.bf16.msra.mxu0 0
      %1914 = vmatprep.subr.bf16.mxu0 0
      %1915 = vmatpush1.bf16.msra.mxu0 0
      %1916 = vmatprep.subr.bf16.mxu0 0
      %1917 = vmatpush1.bf16.msra.mxu0 0
      %1918 = vmatprep.subr.bf16.mxu0 0
      %1919 = vmatpush1.bf16.msra.mxu0 0
      %1920 = vmatprep.subr.bf16.mxu0 0
      %1921 = vmatpush1.bf16.msra.mxu0 0
      %1922 = vmatprep.subr.bf16.mxu0 0
      %1923 = vmatpush1.bf16.msra.mxu0 0
      %1924 = vmatprep.subr.bf16.mxu0 0
      %1925 = vmatpush1.bf16.msra.mxu0 0
      %1926 = vmatprep.subr.bf16.mxu0 0
      %1927 = vmatpush1.bf16.msra.mxu0 0
      %1928 = vmatprep.subr.bf16.mxu0 0
      %1929 = vmatpush1.bf16.msra.mxu0 0
      %1930 = vmatprep.subr.bf16.mxu0 0
      %1931 = vmatpush1.bf16.msra.mxu0 0
      %1932 = vmatprep.subr.bf16.mxu0 0
      %1933 = vmatpush1.bf16.msra.mxu0 0
      %1934 = vmatprep.mubr.bf16.mxu0 0
      %1935 = vmatmul.mubr.bf16.gmra.mrb[0].mxu0 %v916
      %v1936 = vpop.f32.mrb[0].mxu0
      %v1937 = vadd.f32 0.0, %v1936
      %v1938 = vpop.f32.mrb[0].mxu0
      %v1939 = vpop.f32.mrb[0].mxu0
      %v1940 = vadd.f32 0.0, %v1939
      %v1941 = vpop.f32.mrb[0].mxu0
      %1942 = vmatprep.mubr.bf16.mxu0 0
      %1943 = vmatmul.mubr.bf16.gmra.mrb[0].mxu0 %v919
      %v1944 = vpop.f32.mrb[0].mxu0
      %v1945 = vadd.f32 0.0, %v1944
      %v1946 = vpop.f32.mrb[0].mxu0
      %v1947 = vpop.f32.mrb[0].mxu0
      %v1948 = vadd.f32 0.0, %v1947
      %v1949 = vpop.f32.mrb[0].mxu0
      %1950 = vmatprep.mubr.bf16.mxu0 0
      %1951 = vmatmul.mubr.bf16.gmra.mrb[0].mxu0 %v922
      %v1952 = vpop.f32.mrb[0].mxu0
      %v1953 = vadd.f32 0.0, %v1952
      %v1954 = vpop.f32.mrb[0].mxu0
      %v1955 = vpop.f32.mrb[0].mxu0
      %v1956 = vadd.f32 0.0, %v1955
      %v1957 = vpop.f32.mrb[0].mxu0
      %1958 = vmatprep.mubr.bf16.mxu0 0
      %1959 = vmatmul.mubr.bf16.gmra.mrb[0].mxu0 %v925
      %v1960 = vpop.f32.mrb[0].mxu0
      %v1961 = vadd.f32 0.0, %v1960
      %v1962 = vpop.f32.mrb[0].mxu0
      %v1963 = vpop.f32.mrb[0].mxu0
      %v1964 = vadd.f32 0.0, %v1963
      %v1965 = vpop.f32.mrb[0].mxu0
      %1966 = vmatprep.mubr.bf16.mxu0 0
      %1967 = vmatmul.mubr.bf16.gmra.mrb[0].mxu0 %v928
      %v1968 = vpop.f32.mrb[0].mxu0
      %v1969 = vadd.f32 0.0, %v1968
      %v1970 = vpop.f32.mrb[0].mxu0
      %v1971 = vpop.f32.mrb[0].mxu0
      %v1972 = vadd.f32 0.0, %v1971
      %v1973 = vpop.f32.mrb[0].mxu0
      %1974 = vmatprep.mubr.bf16.mxu0 0
      %1975 = vmatmul.mubr.bf16.gmra.mrb[0].mxu0 %v931
      %v1976 = vpop.f32.mrb[0].mxu0
      %v1977 = vadd.f32 0.0, %v1976
      %v1978 = vpop.f32.mrb[0].mxu0
      %v1979 = vpop.f32.mrb[0].mxu0
      %v1980 = vadd.f32 0.0, %v1979
      %v1981 = vpop.f32.mrb[0].mxu0
      %1982 = vmatprep.mubr.bf16.mxu0 0
      %1983 = vmatmul.mubr.bf16.gmra.mrb[0].mxu0 %v1507
      %v1984 = vpop.f32.mrb[0].mxu0
      %v1985 = vadd.f32 0.0, %v1984
      %v1986 = vpop.f32.mrb[0].mxu0
      %v1987 = vpop.f32.mrb[0].mxu0
      %v1988 = vadd.f32 0.0, %v1987
      %v1989 = vpop.f32.mrb[0].mxu0
      %1990 = vmatprep.mubr.bf16.mxu0 0
      %1991 = vmatmul.mubr.bf16.gmra.mrb[0].mxu0 %v1897
      %v1992 = vpop.f32.mrb[0].mxu0
      %v1993 = vadd.f32 0.0, %v1992
      %v1994 = vpop.f32.mrb[0].mxu0
      %v1995 = vpop.f32.mrb[0].mxu0
      %v1996 = vadd.f32 0.0, %v1995
      %v1997 = vpop.f32.mrb[0].mxu0
      %1998 = vdwg.mxu0
      %v1999 = vadd.f32 %v1870, %v1937
      %v2000 = vadd.f32 %v1871, %v1940
      %v2001 = vadd.f32 %v1872, %v1945
      %v2002 = vadd.f32 %v1873, %v1948
      %v2003 = vadd.f32 %v1874, %v1953
      %v2004 = vadd.f32 %v1875, %v1956
      %v2005 = vadd.f32 %v1876, %v1961
      %v2006 = vadd.f32 %v1877, %v1964
      %v2007 = vadd.f32 %v1878, %v1969
      %v2008 = vadd.f32 %v1879, %v1972
      %v2009 = vadd.f32 %v1880, %v1977
      %v2010 = vadd.f32 %v1881, %v1980
      %v2011 = vadd.f32 %v1882, %v1985
      %v2012 = vadd.f32 %v1883, %v1988
      %v2013 = vadd.f32 %v1884, %v1993
      %v2014 = vadd.f32 %v1885, %v1996
      %v2015 = vrot.slane %v749, 5
      %v2016 = vrot.slane %v750, 5
      %v2017 = vsel %vm1157, %v2015, %v2016
      %v2018 = vrot.slane %v751, 5
      %v2019 = vsel %vm1157, %v2016, %v2018
      %v2022 = vpack.c.bf16 %v2019, %v2017
      %s2023 = scalar_lea.vmem %s3, 32
      %v2024 = vld [vmem:[%s2023] sm:$0xf]
      %v2026 = vsel %vm569, %v2022, 0
      %v2029 = vsel %vm842, %v2024, 0
      %2031 = vmatprep.subr.bf16.mxu0 0
      %2032 = vmatpush1.bf16.msra.mxu0 %v2029
      %2033 = vmatprep.subr.bf16.mxu0 0
      %2034 = vmatpush1.bf16.msra.mxu0 0
      %2035 = vmatprep.subr.bf16.mxu0 0
      %2036 = vmatpush1.bf16.msra.mxu0 0
      %2037 = vmatprep.subr.bf16.mxu0 0
      %2038 = vmatpush1.bf16.msra.mxu0 0
      %2039 = vmatprep.subr.bf16.mxu0 0
      %2040 = vmatpush1.bf16.msra.mxu0 0
      %2041 = vmatprep.subr.bf16.mxu0 0
      %2042 = vmatpush1.bf16.msra.mxu0 0
      %2043 = vmatprep.subr.bf16.mxu0 0
      %2044 = vmatpush1.bf16.msra.mxu0 0
      %2045 = vmatprep.subr.bf16.mxu0 0
      %2046 = vmatpush1.bf16.msra.mxu0 0
      %2047 = vmatprep.subr.bf16.mxu0 0
      %2048 = vmatpush1.bf16.msra.mxu0 0
      %2049 = vmatprep.subr.bf16.mxu0 0
      %2050 = vmatpush1.bf16.msra.mxu0 0
      %2051 = vmatprep.subr.bf16.mxu0 0
      %2052 = vmatpush1.bf16.msra.mxu0 0
      %2053 = vmatprep.subr.bf16.mxu0 0
      %2054 = vmatpush1.bf16.msra.mxu0 0
      %2055 = vmatprep.subr.bf16.mxu0 0
      %2056 = vmatpush1.bf16.msra.mxu0 0
      %2057 = vmatprep.subr.bf16.mxu0 0
      %2058 = vmatpush1.bf16.msra.mxu0 0
      %2059 = vmatprep.subr.bf16.mxu0 0
      %2060 = vmatpush1.bf16.msra.mxu0 0
      %2061 = vmatprep.subr.bf16.mxu0 0
      %2062 = vmatpush1.bf16.msra.mxu0 0
      %2063 = vmatprep.mubr.bf16.mxu0 0
      %2064 = vmatmul.mubr.bf16.gmra.mrb[0].mxu0 %v1231
      %v2065 = vpop.f32.mrb[0].mxu0
      %v2066 = vadd.f32 0.0, %v2065
      %v2067 = vpop.f32.mrb[0].mxu0
      %v2068 = vpop.f32.mrb[0].mxu0
      %v2069 = vadd.f32 0.0, %v2068
      %v2070 = vpop.f32.mrb[0].mxu0
      %2071 = vmatprep.mubr.bf16.mxu0 0
      %2072 = vmatmul.mubr.bf16.gmra.mrb[0].mxu0 %v1234
      %v2073 = vpop.f32.mrb[0].mxu0
      %v2074 = vadd.f32 0.0, %v2073
      %v2075 = vpop.f32.mrb[0].mxu0
      %v2076 = vpop.f32.mrb[0].mxu0
      %v2077 = vadd.f32 0.0, %v2076
      %v2078 = vpop.f32.mrb[0].mxu0
      %2079 = vmatprep.mubr.bf16.mxu0 0
      %2080 = vmatmul.mubr.bf16.gmra.mrb[0].mxu0 %v1237
      %v2081 = vpop.f32.mrb[0].mxu0
      %v2082 = vadd.f32 0.0, %v2081
      %v2083 = vpop.f32.mrb[0].mxu0
      %v2084 = vpop.f32.mrb[0].mxu0
      %v2085 = vadd.f32 0.0, %v2084
      %v2086 = vpop.f32.mrb[0].mxu0
      %2087 = vmatprep.mubr.bf16.mxu0 0
      %2088 = vmatmul.mubr.bf16.gmra.mrb[0].mxu0 %v1240
      %v2089 = vpop.f32.mrb[0].mxu0
      %v2090 = vadd.f32 0.0, %v2089
      %v2091 = vpop.f32.mrb[0].mxu0
      %v2092 = vpop.f32.mrb[0].mxu0
      %v2093 = vadd.f32 0.0, %v2092
      %v2094 = vpop.f32.mrb[0].mxu0
      %2095 = vmatprep.mubr.bf16.mxu0 0
      %2096 = vmatmul.mubr.bf16.gmra.mrb[0].mxu0 %v1243
      %v2097 = vpop.f32.mrb[0].mxu0
      %v2098 = vadd.f32 0.0, %v2097
      %v2099 = vpop.f32.mrb[0].mxu0
      %v2100 = vpop.f32.mrb[0].mxu0
      %v2101 = vadd.f32 0.0, %v2100
      %v2102 = vpop.f32.mrb[0].mxu0
      %2103 = vmatprep.mubr.bf16.mxu0 0
      %2104 = vmatmul.mubr.bf16.gmra.mrb[0].mxu0 %v1246
      %v2105 = vpop.f32.mrb[0].mxu0
      %v2106 = vadd.f32 0.0, %v2105
      %v2107 = vpop.f32.mrb[0].mxu0
      %v2108 = vpop.f32.mrb[0].mxu0
      %v2109 = vadd.f32 0.0, %v2108
      %v2110 = vpop.f32.mrb[0].mxu0
      %2111 = vmatprep.mubr.bf16.mxu0 0
      %2112 = vmatmul.mubr.bf16.gmra.mrb[0].mxu0 %v1636
      %v2113 = vpop.f32.mrb[0].mxu0
      %v2114 = vadd.f32 0.0, %v2113
      %v2115 = vpop.f32.mrb[0].mxu0
      %v2116 = vpop.f32.mrb[0].mxu0
      %v2117 = vadd.f32 0.0, %v2116
      %v2118 = vpop.f32.mrb[0].mxu0
      %2119 = vmatprep.mubr.bf16.mxu0 0
      %2120 = vmatmul.mubr.bf16.gmra.mrb[0].mxu0 %v2026
      %v2121 = vpop.f32.mrb[0].mxu0
      %v2122 = vadd.f32 0.0, %v2121
      %v2123 = vpop.f32.mrb[0].mxu0
      %v2124 = vpop.f32.mrb[0].mxu0
      %v2125 = vadd.f32 0.0, %v2124
      %v2126 = vpop.f32.mrb[0].mxu0
      %2127 = vdwg.mxu0
      %v2128 = vadd.f32 %v1999, %v2066
      %v2129 = vadd.f32 %v2000, %v2069
      %v2130 = vadd.f32 %v2001, %v2074
      %v2131 = vadd.f32 %v2002, %v2077
      %v2132 = vadd.f32 %v2003, %v2082
      %v2133 = vadd.f32 %v2004, %v2085
      %v2134 = vadd.f32 %v2005, %v2090
      %v2135 = vadd.f32 %v2006, %v2093
      %v2136 = vadd.f32 %v2007, %v2098
      %v2137 = vadd.f32 %v2008, %v2101
      %v2138 = vadd.f32 %v2009, %v2106
      %v2139 = vadd.f32 %v2010, %v2109
      %v2140 = vadd.f32 %v2011, %v2114
      %v2141 = vadd.f32 %v2012, %v2117
      %v2142 = vadd.f32 %v2013, %v2122
      %v2143 = vadd.f32 %v2014, %v2125
      %v2144 = vsel %vm569, %v2128, 0.0
      %v2145 = vsel %vm569, %v2129, 0.0
      %v2146 = vadd.f32 %v2144, %v2145
      %v2147 = vsel %vm569, %v2130, 0.0
      %v2148 = vadd.f32 %v2146, %v2147
      %v2149 = vsel %vm569, %v2131, 0.0
      %v2150 = vadd.f32 %v2148, %v2149
      %v2151 = vsel %vm569, %v2132, 0.0
      %v2152 = vadd.f32 %v2150, %v2151
      %v2153 = vsel %vm569, %v2133, 0.0
      %v2154 = vadd.f32 %v2152, %v2153
      %v2155 = vsel %vm569, %v2134, 0.0
      %v2156 = vadd.f32 %v2154, %v2155
      %v2157 = vsel %vm569, %v2135, 0.0
      %v2158 = vadd.f32 %v2156, %v2157
      %v2159 = vsel %vm569, %v2136, 0.0
      %v2160 = vadd.f32 %v2158, %v2159
      %v2161 = vsel %vm569, %v2137, 0.0
      %v2162 = vadd.f32 %v2160, %v2161
      %v2163 = vsel %vm569, %v2138, 0.0
      %v2164 = vadd.f32 %v2162, %v2163
      %v2165 = vsel %vm569, %v2139, 0.0
      %v2166 = vadd.f32 %v2164, %v2165
      %v2167 = vsel %vm569, %v2140, 0.0
      %v2168 = vadd.f32 %v2166, %v2167
      %v2169 = vsel %vm569, %v2141, 0.0
      %v2170 = vadd.f32 %v2168, %v2169
      %v2171 = vsel %vm569, %v2142, 0.0
      %v2172 = vadd.f32 %v2170, %v2171
      %v2173 = vsel %vm569, %v2143, 0.0
      %v2174 = vadd.f32 %v2172, %v2173
      %v2175 = vrot.slane %v2174, 4
      %v2176 = vadd.f32 %v2174, %v2175
      %v2177 = vrot.slane %v2176, 2
      %v2178 = vadd.f32 %v2176, %v2177
      %v2179 = vrot.slane %v2178, 1
      %v2180 = vadd.f32 %v2178, %v2179
      %v2181 = vmul.f32 %v2128, %v2128
      %v2182 = vmul.f32 %v2129, %v2129
      %v2183 = vmul.f32 %v2130, %v2130
      %v2184 = vmul.f32 %v2131, %v2131
      %v2185 = vmul.f32 %v2132, %v2132
      %v2186 = vmul.f32 %v2133, %v2133
      %v2187 = vmul.f32 %v2134, %v2134
      %v2188 = vmul.f32 %v2135, %v2135
      %v2189 = vmul.f32 %v2136, %v2136
      %v2190 = vmul.f32 %v2137, %v2137
      %v2191 = vmul.f32 %v2138, %v2138
      %v2192 = vmul.f32 %v2139, %v2139
      %v2193 = vmul.f32 %v2140, %v2140
      %v2194 = vmul.f32 %v2141, %v2141
      %v2195 = vmul.f32 %v2142, %v2142
      %v2196 = vmul.f32 %v2143, %v2143
      %v2197 = vsel %vm569, %v2181, 0.0
      %v2198 = vsel %vm569, %v2182, 0.0
      %v2199 = vadd.f32 %v2197, %v2198
      %v2200 = vsel %vm569, %v2183, 0.0
      %v2201 = vadd.f32 %v2199, %v2200
      %v2202 = vsel %vm569, %v2184, 0.0
      %v2203 = vadd.f32 %v2201, %v2202
      %v2204 = vsel %vm569, %v2185, 0.0
      %v2205 = vadd.f32 %v2203, %v2204
      %v2206 = vsel %vm569, %v2186, 0.0
      %v2207 = vadd.f32 %v2205, %v2206
      %v2208 = vsel %vm569, %v2187, 0.0
      %v2209 = vadd.f32 %v2207, %v2208
      %v2210 = vsel %vm569, %v2188, 0.0
      %v2211 = vadd.f32 %v2209, %v2210
      %v2212 = vsel %vm569, %v2189, 0.0
      %v2213 = vadd.f32 %v2211, %v2212
      %v2214 = vsel %vm569, %v2190, 0.0
      %v2215 = vadd.f32 %v2213, %v2214
      %v2216 = vsel %vm569, %v2191, 0.0
      %v2217 = vadd.f32 %v2215, %v2216
      %v2218 = vsel %vm569, %v2192, 0.0
      %v2219 = vadd.f32 %v2217, %v2218
      %v2220 = vsel %vm569, %v2193, 0.0
      %v2221 = vadd.f32 %v2219, %v2220
      %v2222 = vsel %vm569, %v2194, 0.0
      %v2223 = vadd.f32 %v2221, %v2222
      %v2224 = vsel %vm569, %v2195, 0.0
      %v2225 = vadd.f32 %v2223, %v2224
      %v2226 = vsel %vm569, %v2196, 0.0
      %v2227 = vadd.f32 %v2225, %v2226
      %v2228 = vrot.slane %v2227, 4
      %v2229 = vadd.f32 %v2227, %v2228
      %v2230 = vrot.slane %v2229, 2
      %v2231 = vadd.f32 %v2229, %v2230
      %v2232 = vrot.slane %v2231, 1
      %v2233 = vadd.f32 %v2231, %v2232
      %p2234 = scmp.eq.s32.totalorder %s25, 0
      // Predicated region
      $region45: #{double_conv.4} parent=43 // pred_check
        %p2235 = pneg %p2234
      $region46: #{double_conv.4} parent=43 // pred_check_branch
        %2237 = sbr.rel (%p2235) target = $region48
      $region47: #{double_conv.4} parent=43 // pred_region
        %vm2238 = vcmask 57344
        %2239 = vst.msk [vmem:[%s487] sm:$0x1] %vm2238, 0.0
        %2240 = vst.msk [vmem:[%s490] sm:$0x1] %vm2238, 0.0
      $region48: #{double_conv.4} parent=43 // pred_fallthru
        _
      %v2241 = vld [vmem:[%s487] sm:$0x1]
      %v2242 = vadd.f32 %v2241, %v2180
      %vm2243 = vcmask 57344
      %2244 = vst.msk [vmem:[%s487] sm:$0x1] %vm2243, %v2242
      %v2245 = vld [vmem:[%s490] sm:$0x1]
      %v2246 = vadd.f32 %v2245, %v2233
      %2247 = vst.msk [vmem:[%s490] sm:$0x1] %vm2243, %v2246
      %2248 = vst.msk [vmem:[%s483] sm:$0xff] %vm569, %v2128
      %2249 = vst.msk [vmem:[%s483 + $0x8] sm:$0xff] %vm569, %v2129
      %2250 = vst.msk [vmem:[%s483 + $0x10] sm:$0xff] %vm569, %v2130
      %2251 = vst.msk [vmem:[%s483 + $0x18] sm:$0xff] %vm569, %v2131
      %2252 = vst.msk [vmem:[%s483 + $0x20] sm:$0xff] %vm569, %v2132
      %2253 = vst.msk [vmem:[%s483 + $0x28] sm:$0xff] %vm569, %v2133
      %2254 = vst.msk [vmem:[%s483 + $0x30] sm:$0xff] %vm569, %v2134
      %2255 = vst.msk [vmem:[%s483 + $0x38] sm:$0xff] %vm569, %v2135
      %2256 = vst.msk [vmem:[%s483 + $0x40] sm:$0xff] %vm569, %v2136
      %2257 = vst.msk [vmem:[%s483 + $0x48] sm:$0xff] %vm569, %v2137
      %2258 = vst.msk [vmem:[%s483 + $0x50] sm:$0xff] %vm569, %v2138
      %2259 = vst.msk [vmem:[%s483 + $0x58] sm:$0xff] %vm569, %v2139
      %2260 = vst.msk [vmem:[%s483 + $0x60] sm:$0xff] %vm569, %v2140
      %2261 = vst.msk [vmem:[%s483 + $0x68] sm:$0xff] %vm569, %v2141
      %2262 = vst.msk [vmem:[%s483 + $0x70] sm:$0xff] %vm569, %v2142
      %2263 = vst.msk [vmem:[%s483 + $0x78] sm:$0xff] %vm569, %v2143
      %s2264 = smul.u32 8, %s25
      %p2265 = scmp.lt.s32.totalorder %s24, 1
      %s2266 = scalar_select %p2265, %s24, 1
      %p2267 = scmp.lt.s32.totalorder %s2264, 15
      %s2268 = scalar_select %p2267, %s2264, 15
      %s2269 = smul.addr %s2268, 2
      %s2270 = smul.addr %s2266, 32
      %s2271 = sadd.s32 %s2269, %s2270
      %s2272 = smul.addr %s2271, 8
      %s2273 = scalar_lea.vmem %s6, %s2272
      %p2274 = scmp.lt.s32.totalorder %s24, 1
      %s2275 = scalar_select %p2274, %s24, 1
      %s2276 = scalar_lea.vmem %s7, %s2275
      %p2277 = scmp.lt.s32.totalorder %s24, 1
      %s2278 = scalar_select %p2277, %s24, 1
      %s2279 = scalar_lea.vmem %s8, %s2278
      // Predicated region
      $region49: #{double_conv.4} parent=43 // pred_check
        %p2280 = pneg %p215
      $region50: #{double_conv.4} parent=43 // pred_check_branch
        %2282 = sbr.rel (%p2280) target = $region52
      $region51: #{double_conv.4} parent=43 // pred_region
        %s2283 = smul.u32 8, %s25
      $region52: #{double_conv.4} parent=43 // pred_fallthru
        _
      // Predicated region
      $region53: #{double_conv.4} parent=43 // pred_check
        %p2284 = pneg %p241
      $region54: #{double_conv.4} parent=43 // pred_check_branch
        %2286 = sbr.rel (%p2284) target = $region56
      $region55: #{double_conv.4} parent=43 // pred_region
        _
      $region56: #{double_conv.4} parent=43 // pred_fallthru
        _
      // Predicated region
      $region57: #{double_conv.4} parent=43 // pred_check
        %p2287 = pneg %p267
      $region58: #{double_conv.4} parent=43 // pred_check_branch
        %2289 = sbr.rel (%p2287) target = $region60
      $region59: #{double_conv.4} parent=43 // pred_region
        _
      $region60: #{double_conv.4} parent=43 // pred_fallthru
        _
    $region44: #{double_conv.4} parent=5 // pred_fallthru
      _
    %p2290 = scmp.le.s32.totalorder 2, %s15
    // Predicated region
    $region61: #{double_conv.4} parent=5 // pred_check
      %p2291 = pneg %p2290
    $region62: #{double_conv.4} parent=5 // pred_check_branch
      %2293 = sbr.rel (%p2291) target = $region64
    $region63: #{double_conv.4} parent=5 // pred_region
      %s2294 = ssub.s32 %s15, 2
      // Predicated region
      $region65: #{double_conv.4} parent=63 // pred_check
        %p2295 = pneg %p221
      $region66: #{double_conv.4} parent=63 // pred_check_branch
        %2297 = sbr.rel (%p2295) target = $region68
      $region67: #{double_conv.4} parent=63 // pred_region
        %s2298 = smul.u32 8, %s27
        %p2299 = scmp.lt.s32.totalorder %s26, 1
        %s2300 = scalar_select %p2299, %s26, 1
        %p2301 = scmp.lt.s32.totalorder %s2298, 15
        %s2302 = scalar_select %p2301, %s2298, 15
        %s2303 = smul.addr %s2302, 2
        %s2304 = smul.addr %s2300, 32
        %s2305 = sadd.s32 %s2303, %s2304
        %s2306 = smul.addr %s2305, 8
        %s2307 = scalar_lea.vmem %s6, %s2306
      $region68: #{double_conv.4} parent=63 // pred_fallthru
        _
      // Predicated region
      $region69: #{double_conv.4} parent=63 // pred_check
        %p2308 = pneg %p247
      $region70: #{double_conv.4} parent=63 // pred_check_branch
        %2310 = sbr.rel (%p2308) target = $region72
      $region71: #{double_conv.4} parent=63 // pred_region
        %p2311 = scmp.lt.s32.totalorder %s26, 1
        %s2312 = scalar_select %p2311, %s26, 1
        %s2313 = scalar_lea.vmem %s7, %s2312
      $region72: #{double_conv.4} parent=63 // pred_fallthru
        _
      // Predicated region
      $region73: #{double_conv.4} parent=63 // pred_check
        %p2314 = pneg %p273
      $region74: #{double_conv.4} parent=63 // pred_check_branch
        %2316 = sbr.rel (%p2314) target = $region76
      $region75: #{double_conv.4} parent=63 // pred_region
        %p2317 = scmp.lt.s32.totalorder %s26, 1
        %s2318 = scalar_select %p2317, %s26, 1
        %s2319 = scalar_lea.vmem %s8, %s2318
      $region76: #{double_conv.4} parent=63 // pred_fallthru
        _
    $region64: #{double_conv.4} parent=5 // pred_fallthru
      _
  $region6: #{double_conv.4} parent=0 // loop_footer
    %s19 = sadd.s32 1, %s15
  $region7: #{double_conv.4} parent=0 // loop_footer_branch
    %14 = sbr.rel target = $region3
  $region8: #{double_conv.4} parent=0 // loop_exit
    _

</llo_original>
